<compile_context>
chip_gen: v7x
topology: tpu7x:2x2x1
jax: 0.10.0
libtpu: 0.0.40
codegen_flags: <defaults>
</compile_context>

<pallas_src>
import numpy as np
import jax
import jax.numpy as jnp
from jax.experimental import pallas as pl
from jax.experimental.pallas import tpu as pltpu

# -----------------------------------------------------------------------------
# Skeleton constants (H36M 16 joints, 15 bones)
# -----------------------------------------------------------------------------
NUM_JOINTS = 16
NUM_BONES = 15
NOISE_CH = 48
HIDDEN = 256
NUM_STAGE = 2
BLR_TANHLIMIT = 0.2
LRELU_SLOPE = 0.01
BN_EPS = 1e-5

# parent of joint j (joint 0 = hip = root)
_PARENTS = [-1, 0, 1, 2, 0, 4, 5, 0, 7, 8, 8, 10, 11, 8, 13, 14]
# bone k (child joint k+1) -> which of the 9 symmetric ratios it uses
_BONE_RATIO_IDX = [0, 1, 2, 0, 1, 2, 3, 4, 5, 6, 7, 8, 6, 7, 8]


def _build_mats():
    C = np.zeros((NUM_JOINTS, NUM_BONES), np.float32)      # pose(J) -> bone(B)
    for k in range(NUM_BONES):
        child = k + 1
        parent = _PARENTS[child]
        C[child, k] = 1.0
        C[parent, k] = -1.0
    Cinv = np.zeros((NUM_BONES, NUM_JOINTS), np.float32)   # bone(B) -> pose(J)
    for j in range(1, NUM_JOINTS):
        cur = j
        while cur != 0:
            Cinv[cur - 1, j] = 1.0
            cur = _PARENTS[cur]
    M = np.zeros((9, NUM_BONES), np.float32)               # blr9 -> blr15
    for k, r in enumerate(_BONE_RATIO_IDX):
        M[r, k] = 1.0
    eye3 = np.eye(3, dtype=np.float32)
    K = np.kron(C, eye3)                                   # (48, 45) interleaved
    K2 = np.kron(Cinv, eye3)                               # (45, 48)
    G = np.kron(np.eye(NUM_BONES, dtype=np.float32),
                np.ones((3, 1), np.float32))               # (45, 15) coord-sum
    M45 = np.kron(M, np.ones((1, 3), np.float32))          # (9, 45)
    return dict(C=jnp.asarray(C), Cinv=jnp.asarray(Cinv), M=jnp.asarray(M),
                K=jnp.asarray(K), K2=jnp.asarray(K2), G=jnp.asarray(G),
                M45=jnp.asarray(M45))


# -----------------------------------------------------------------------------
# Fused kernel: (step 0) bone lengths + BL-regressor MLP, (every step b)
# bone-length augmentation of batch b's T frames.
# -----------------------------------------------------------------------------
def _bn_lrelu(y, g, b):
    mu = jnp.mean(y, axis=0, keepdims=True)
    d = y - mu
    var = jnp.mean(d * d, axis=0, keepdims=True)
    yn = d * jax.lax.rsqrt(var + BN_EPS) * g + b
    return jnp.where(yn > 0, yn, LRELU_SLOPE * yn)


def fused_kernel(feat_ref, augx_ref, k_ref, g_ref, m45_ref, k2_ref,
                 w1f_ref, w1bl_ref, bn_ref, ws_ref, w2m_ref, b2m_ref,
                 pose_ref, blr_ref, blr45_s):
    f32 = jnp.float32
    bf16 = jnp.bfloat16
    b = pl.program_id(0)
    K = k_ref[...]                                          # (48, 45) f32

    # ---- phase 0: BL-regressor MLP (runs once, results persist in scratch) ----
    @pl.when(b == 0)
    def _bl_regressor():
        feat = feat_ref[...]                                # (N, 96) = [x48 | noise48]
        x48 = feat[:, :NUM_JOINTS * 3]
        bones_mid = jnp.dot(x48, K, preferred_element_type=f32)       # (N, 45)
        bl = jnp.sqrt(jnp.dot(bones_mid * bones_mid, g_ref[...],
                              preferred_element_type=f32))            # (N, 15)

        # first layer: feat and bl fed to MXU as bf16, f32 accumulation
        y = (jnp.dot(feat.astype(bf16), w1f_ref[...], preferred_element_type=f32)
             + jnp.dot(bl.astype(bf16), w1bl_ref[...], preferred_element_type=f32)
             + bn_ref[pl.ds(0, 1), :])
        y = _bn_lrelu(y, bn_ref[pl.ds(1, 1), :], bn_ref[pl.ds(2, 1), :])
        for l in range(2 * NUM_STAGE):
            r0 = 3 * (l + 1)
            y = (jnp.dot(y.astype(bf16), ws_ref[l], preferred_element_type=f32)
                 + bn_ref[pl.ds(r0, 1), :])
            y = _bn_lrelu(y, bn_ref[pl.ds(r0 + 1, 1), :], bn_ref[pl.ds(r0 + 2, 1), :])
        y = (jnp.dot(y.astype(bf16), w2m_ref[...], preferred_element_type=f32)
             + b2m_ref[...])                                # mask folded into w2/b2
        blr9 = jnp.tanh(y) * BLR_TANHLIMIT                  # (N, 9)
        blr_ref[...] = blr9
        blr45_s[...] = jnp.dot(blr9, m45_ref[...], preferred_element_type=f32)  # (N, 45)

    # ---- every step: augment batch b (modified bone = bone * (1 + blr15)) ----
    bones = jnp.dot(augx_ref[0], K, preferred_element_type=f32)        # (T, 45)
    scale = 1.0 + blr45_s[pl.ds(b, 1), :]                              # (1, 45) -> bcast over T
    pose_ref[b] = jnp.dot(bones * scale, k2_ref[...],
                          preferred_element_type=f32)                  # (T, 48)


# -----------------------------------------------------------------------------
# pallas_call wrapper
# -----------------------------------------------------------------------------
def _resident(shape):
    nd = len(shape)
    return pl.BlockSpec(shape, lambda b, _nd=nd: (0,) * _nd)


def init_params(key):
    mats = _build_mats()
    in_feat = NUM_JOINTS * 3 + NUM_BONES + NOISE_CH          # 48 + 15 + 48 = 111
    ks = jax.random.split(key, 6)

    def uinit(k, shape, fan_in):
        b = 1.0 / np.sqrt(fan_in)
        return jax.random.uniform(k, shape, jnp.float32, -b, b)

    W1 = uinit(ks[0], (in_feat, HIDDEN), in_feat)
    params = dict(
        **mats,
        # torch concat order is (x, bone_lengths, noise); x+noise columns merged:
        w1f=jnp.concatenate([W1[:48], W1[63:]], axis=0),     # (96, 256)
        w1bl=W1[48:63],                                      # (15, 256)
        b1=uinit(ks[1], (1, HIDDEN), in_feat),
        g0=jnp.ones((1, HIDDEN), jnp.float32),
        bt0=jnp.zeros((1, HIDDEN), jnp.float32),
        ws=uinit(ks[2], (2 * NUM_STAGE, HIDDEN, HIDDEN), HIDDEN),
        bs=uinit(ks[3], (2 * NUM_STAGE, 1, HIDDEN), HIDDEN),
        gs=jnp.ones((2 * NUM_STAGE, 1, HIDDEN), jnp.float32),
        bts=jnp.zeros((2 * NUM_STAGE, 1, HIDDEN), jnp.float32),
        w2=uinit(ks[4], (HIDDEN, 9), HIDDEN),
        b2=uinit(ks[5], (1, 9), HIDDEN),
        mask=jnp.asarray([[1, 1, 1, 1, 0, 1, 1, 1, 1]], jnp.float32),
    )
    return params


def bl_generator_forward(inputs_3d, augx, noise, params):
    p = params
    bf16 = jnp.bfloat16
    inp = inputs_3d[:, 0]                          # (N, T, 16, 3)
    x = inp - inp[:, :, :1, :]                     # root-relative
    N, T, J, _ = x.shape
    mid = (T - 1) // 2
    x_flat = x[:, mid].reshape(N, J * 3)           # (N, 48) torch .view ordering
    feat = jnp.concatenate([x_flat, noise], axis=-1)        # (N, 96)
    augx3 = augx.reshape(N, T, J * 3)              # (N, T, 48) contiguous view

    # MXU weights in bf16 (f32 accumulation inside the kernel); mask folded.
    w1f = p['w1f'].astype(bf16)
    w1bl = p['w1bl'].astype(bf16)
    ws = p['ws'].astype(bf16)
    w2m = (p['w2'] * p['mask']).astype(bf16)
    b2m = p['b2'] * p['mask']

    # Stacked per-layer (bias, gamma, beta) rows -> single (15, 256) operand.
    bn_rows = [p['b1'][0], p['g0'][0], p['bt0'][0]]
    for l in range(2 * NUM_STAGE):
        bn_rows += [p['bs'][l, 0], p['gs'][l, 0], p['bts'][l, 0]]
    bn_vecs = jnp.stack(bn_rows, axis=0)                     # (15, 256) f32

    inputs = [feat, augx3, p['K'], p['G'], p['M45'], p['K2'],
              w1f, w1bl, bn_vecs, ws, w2m, b2m]

    in_specs = ([_resident(feat.shape),
                 pl.BlockSpec((1, T, J * 3), lambda b: (b, 0, 0))]
                + [_resident(a.shape) for a in inputs[2:]])
    out_specs = (pl.BlockSpec((N, T, J * 3), lambda b: (0, 0, 0)),   # resident, 1 writeback
                 pl.BlockSpec((N, 9), lambda b: (0, 0)))

    def nbytes(a):
        return int(np.prod(a.shape)) * a.dtype.itemsize
    raw = (sum(nbytes(a) for a in inputs)
           + (N * T * J * 3 + N * 9 + N * NUM_BONES * 3) * 4)
    # double-buffer + one (8,128)-tile padding allowance per operand + slack
    vmem_bytes = int(2 * raw + (len(inputs) + 3) * 2 * 4096 + (4 << 20))

    flops = 2 * (N * 48 * 45 + N * 45 * 15                       # middle-frame bones
                 + N * 96 * HIDDEN + N * 15 * HIDDEN              # first layer
                 + 2 * NUM_STAGE * N * HIDDEN * HIDDEN            # hidden layers
                 + N * HIDDEN * 9 + N * 9 * 45                    # last layer + blr45
                 + N * T * 48 * 45 + N * T * 45 * 48)             # augmentation
    cost = pl.CostEstimate(flops=flops,
                           transcendentals=N * 15 + N * 9 + (2 * NUM_STAGE + 1) * HIDDEN,
                           bytes_accessed=raw)

    pose, blr9 = pl.pallas_call(
        fused_kernel,
        out_shape=(jax.ShapeDtypeStruct((N, T, J * 3), jnp.float32),
                   jax.ShapeDtypeStruct((N, 9), jnp.float32)),
        grid=(N,),
        in_specs=in_specs,
        out_specs=out_specs,
        scratch_shapes=[pltpu.VMEM((N, NUM_BONES * 3), jnp.float32)],
        compiler_params=pltpu.CompilerParams(
            dimension_semantics=("arbitrary",),   # MLP on step 0 + persistent scratch
            vmem_limit_bytes=vmem_bytes),
        cost_estimate=cost,
    )(*inputs)

    augx_bl = pose.reshape(N, T, J, 3)
    blr = jnp.broadcast_to(blr9[:, None, :], (N, T, 9))
    return augx_bl, blr


# -----------------------------------------------------------------------------
# Pure-JAX reference (torch-faithful structure: concat features, unit bones,
# lengths, 1+blr rescale).  The MLP matmuls mirror the kernel's bf16-in /
# f32-accumulate MXU precision so the comparison tolerance stays tight.
# -----------------------------------------------------------------------------
def reference_forward(inputs_3d, augx, noise, params):
    p = params
    bf16 = jnp.bfloat16

    def dot16(a, w):
        return jnp.dot(a.astype(bf16), w.astype(bf16),
                       preferred_element_type=jnp.float32)

    inp = inputs_3d[:, 0]
    x = inp - inp[:, :, :1, :]
    N, T, J, _ = x.shape
    mid = (T - 1) // 2
    xm = x[:, mid]
    xflat = xm.reshape(N, -1)
    bones = jnp.einsum('njd,jk->nkd', xm, p['C'])
    bl = jnp.linalg.norm(bones, axis=-1)
    W1 = jnp.concatenate([p['w1f'][:48], p['w1bl'], p['w1f'][48:]], axis=0)
    featf = jnp.concatenate([xflat, bl, noise], axis=-1)
    y = dot16(featf, W1) + p['b1']

    def bn_lrelu(y, g, b):
        mu = y.mean(0, keepdims=True)
        var = ((y - mu) ** 2).mean(0, keepdims=True)
        yn = (y - mu) * jax.lax.rsqrt(var + BN_EPS) * g + b
        return jnp.where(yn > 0, yn, LRELU_SLOPE * yn)

    y = bn_lrelu(y, p['g0'], p['bt0'])
    for i in range(2 * NUM_STAGE):
        y = dot16(y, p['ws'][i]) + p['bs'][i]
        y = bn_lrelu(y, p['gs'][i], p['bts'][i])
    y = dot16(y, p['w2']) + p['b2']
    y = jnp.tanh(y * p['mask']) * BLR_TANHLIMIT
    blr = jnp.broadcast_to(y[:, None, :], (N, T, 9))

    bones_a = jnp.einsum('ntjd,jk->ntkd', augx, p['C'])
    bl_a = jnp.linalg.norm(bones_a, axis=-1, keepdims=True)
    unit = bones_a / bl_a
    blr15 = jnp.einsum('ntr,rk->ntk', blr, p['M'])[..., None]
    mod = unit * (bl_a * (1.0 + blr15))
    pose = jnp.einsum('ntkd,kj->ntjd', mod, p['Cinv'])
    return pose, blr


# -----------------------------------------------------------------------------
if __name__ == "__main__":
    key = jax.random.PRNGKey(0)
    k_in, k_aug, k_noise, k_par = jax.random.split(key, 4)

    N, C0, T, J = 4, 2, 9, 16          # small shapes consistent with n x T x 16 x 3
    inputs_3d = jax.random.normal(k_in, (N, C0, T, J, 3), jnp.float32) * 0.5
    augx = jax.random.normal(k_aug, (N, T, J, 3), jnp.float32) * 0.5
    noise = jax.random.normal(k_noise, (N, NOISE_CH), jnp.float32)
    params = init_params(k_par)

    fwd = jax.jit(bl_generator_forward)
    augx_bl, blr = fwd(inputs_3d, augx, noise, params)
    jax.block_until_ready((augx_bl, blr))

    ref_pose, ref_blr = reference_forward(inputs_3d, augx, noise, params)
    assert augx_bl.shape == (N, T, J, 3) and blr.shape == (N, T, 9)
    assert np.allclose(np.asarray(blr), np.asarray(ref_blr), atol=5e-3, rtol=5e-3)
    assert np.allclose(np.asarray(augx_bl), np.asarray(ref_pose), atol=5e-3, rtol=5e-3)

    print("KERNEL_OK")
</pallas_src>

<mosaic_0001>
module attributes {stable_mosaic.version = 11 : i64} {
  func.func @fused_kernel(%arg0: i32, %arg1: memref<4x96xf32, #tpu.memory_space<vmem>>, %arg2: memref<1x9x48xf32, #tpu.memory_space<vmem>>, %arg3: memref<48x45xf32, #tpu.memory_space<vmem>>, %arg4: memref<45x15xf32, #tpu.memory_space<vmem>>, %arg5: memref<9x45xf32, #tpu.memory_space<vmem>>, %arg6: memref<45x48xf32, #tpu.memory_space<vmem>>, %arg7: memref<96x256xbf16, #tpu.memory_space<vmem>>, %arg8: memref<15x256xbf16, #tpu.memory_space<vmem>>, %arg9: memref<15x256xf32, #tpu.memory_space<vmem>>, %arg10: memref<4x256x256xbf16, #tpu.memory_space<vmem>>, %arg11: memref<256x9xbf16, #tpu.memory_space<vmem>>, %arg12: memref<1x9xf32, #tpu.memory_space<vmem>>, %arg13: memref<4x9x48xf32, #tpu.memory_space<vmem>>, %arg14: memref<4x9xf32, #tpu.memory_space<vmem>>, %arg15: memref<4x45xf32, #tpu.memory_space<vmem>>) attributes {dimension_semantics = [#tpu.dimension_semantics<arbitrary>], iteration_bounds = array<i64: 4>, scalar_prefetch = 0 : i64, scratch_operands = 1 : i64, tpu.core_type = #tpu.core_type<tc>, window_params = [{pipeline_mode = #tpu.pipeline_mode<synchronous>, transform_indices = @transform_0, window_bounds = array<i64: 4, 96>}, {transform_indices = @transform_1, window_bounds = array<i64: 1, 9, 48>}, {pipeline_mode = #tpu.pipeline_mode<synchronous>, transform_indices = @transform_2, window_bounds = array<i64: 48, 45>}, {pipeline_mode = #tpu.pipeline_mode<synchronous>, transform_indices = @transform_3, window_bounds = array<i64: 45, 15>}, {pipeline_mode = #tpu.pipeline_mode<synchronous>, transform_indices = @transform_4, window_bounds = array<i64: 9, 45>}, {pipeline_mode = #tpu.pipeline_mode<synchronous>, transform_indices = @transform_5, window_bounds = array<i64: 45, 48>}, {pipeline_mode = #tpu.pipeline_mode<synchronous>, transform_indices = @transform_6, window_bounds = array<i64: 96, 256>}, {pipeline_mode = #tpu.pipeline_mode<synchronous>, transform_indices = @transform_7, window_bounds = array<i64: 15, 256>}, {pipeline_mode = #tpu.pipeline_mode<synchronous>, transform_indices = @transform_8, window_bounds = array<i64: 15, 256>}, {pipeline_mode = #tpu.pipeline_mode<synchronous>, transform_indices = @transform_9, window_bounds = array<i64: 4, 256, 256>}, {pipeline_mode = #tpu.pipeline_mode<synchronous>, transform_indices = @transform_10, window_bounds = array<i64: 256, 9>}, {pipeline_mode = #tpu.pipeline_mode<synchronous>, transform_indices = @transform_11, window_bounds = array<i64: 1, 9>}, {pipeline_mode = #tpu.pipeline_mode<synchronous>, transform_indices = @transform_12, window_bounds = array<i64: 4, 9, 48>}, {pipeline_mode = #tpu.pipeline_mode<synchronous>, transform_indices = @transform_13, window_bounds = array<i64: 4, 9>}]} {
    %c0 = arith.constant 0 : index
    %c0_0 = arith.constant 0 : index
    %0 = vector.load %arg3[%c0, %c0_0] : memref<48x45xf32, #tpu.memory_space<vmem>>, vector<48x45xf32>
    %c0_i32 = arith.constant 0 : i32
    %1 = arith.cmpi eq, %arg0, %c0_i32 : i32
    %2 = arith.extui %1 : i1 to i32
    %c0_i32_1 = arith.constant 0 : i32
    %3 = arith.cmpi ne, %2, %c0_i32_1 : i32
    scf.if %3 {
      %c0_12 = arith.constant 0 : index
      %c0_13 = arith.constant 0 : index
      %19 = vector.load %arg1[%c0_12, %c0_13] : memref<4x96xf32, #tpu.memory_space<vmem>>, vector<4x96xf32>
      %20 = vector.extract_strided_slice %19 {offsets = [0, 0], sizes = [4, 48], strides = [1, 1]} : vector<4x96xf32> to vector<4x48xf32>
      %cst_14 = arith.constant dense<0.000000e+00> : vector<4x45xf32>
      %21 = tpu.matmul %20, %0, %cst_14 {dimension_numbers = #tpu.dot_dimension_numbers<[1], [0], [0], [1], [0, 0, 1, 1], [], []>} : vector<4x48xf32>, vector<48x45xf32>, vector<4x45xf32> -> vector<4x45xf32>
      %22 = arith.mulf %21, %21 : vector<4x45xf32>
      %c0_15 = arith.constant 0 : index
      %c0_16 = arith.constant 0 : index
      %23 = vector.load %arg4[%c0_15, %c0_16] : memref<45x15xf32, #tpu.memory_space<vmem>>, vector<45x15xf32>
      %cst_17 = arith.constant dense<0.000000e+00> : vector<4x15xf32>
      %24 = tpu.matmul %22, %23, %cst_17 {dimension_numbers = #tpu.dot_dimension_numbers<[1], [0], [0], [1], [0, 0, 1, 1], [], []>} : vector<4x45xf32>, vector<45x15xf32>, vector<4x15xf32> -> vector<4x15xf32>
      %25 = math.sqrt %24 : vector<4x15xf32>
      %26 = arith.truncf %19 : vector<4x96xf32> to vector<4x96xbf16>
      %c0_18 = arith.constant 0 : index
      %c0_19 = arith.constant 0 : index
      %27 = vector.load %arg7[%c0_18, %c0_19] : memref<96x256xbf16, #tpu.memory_space<vmem>>, vector<96x256xbf16>
      %cst_20 = arith.constant dense<0.000000e+00> : vector<4x256xf32>
      %28 = tpu.matmul %26, %27, %cst_20 {dimension_numbers = #tpu.dot_dimension_numbers<[1], [0], [0], [1], [0, 0, 1, 1], [], []>} : vector<4x96xbf16>, vector<96x256xbf16>, vector<4x256xf32> -> vector<4x256xf32>
      %29 = arith.truncf %25 : vector<4x15xf32> to vector<4x15xbf16>
      %c0_21 = arith.constant 0 : index
      %c0_22 = arith.constant 0 : index
      %30 = vector.load %arg8[%c0_21, %c0_22] : memref<15x256xbf16, #tpu.memory_space<vmem>>, vector<15x256xbf16>
      %cst_23 = arith.constant dense<0.000000e+00> : vector<4x256xf32>
      %31 = tpu.matmul %29, %30, %cst_23 {dimension_numbers = #tpu.dot_dimension_numbers<[1], [0], [0], [1], [0, 0, 1, 1], [], []>} : vector<4x15xbf16>, vector<15x256xbf16>, vector<4x256xf32> -> vector<4x256xf32>
      %32 = arith.addf %28, %31 : vector<4x256xf32>
      %c0_24 = arith.constant 0 : index
      %c0_25 = arith.constant 0 : index
      %33 = vector.load %arg9[%c0_24, %c0_25] : memref<15x256xf32, #tpu.memory_space<vmem>>, vector<1x256xf32>
      %34 = vector.broadcast %33 : vector<1x256xf32> to vector<4x256xf32>
      %35 = arith.addf %32, %34 : vector<4x256xf32>
      %c1 = arith.constant 1 : index
      %c0_26 = arith.constant 0 : index
      %36 = vector.load %arg9[%c1, %c0_26] : memref<15x256xf32, #tpu.memory_space<vmem>>, vector<1x256xf32>
      %c2 = arith.constant 2 : index
      %c0_27 = arith.constant 0 : index
      %37 = vector.load %arg9[%c2, %c0_27] : memref<15x256xf32, #tpu.memory_space<vmem>>, vector<1x256xf32>
      %cst_28 = arith.constant dense<0.000000e+00> : vector<256xf32>
      %38 = vector.multi_reduction <add>, %35, %cst_28 [0] : vector<4x256xf32> to vector<256xf32>
      %39 = vector.shape_cast %38 : vector<256xf32> to vector<1x256xf32>
      %cst_29 = arith.constant 4.000000e+00 : f32
      %40 = vector.broadcast %cst_29 : f32 to vector<1x256xf32>
      %41 = arith.divf %39, %40 : vector<1x256xf32>
      %42 = vector.broadcast %41 : vector<1x256xf32> to vector<4x256xf32>
      %43 = arith.subf %35, %42 : vector<4x256xf32>
      %44 = arith.mulf %43, %43 : vector<4x256xf32>
      %cst_30 = arith.constant dense<0.000000e+00> : vector<256xf32>
      %45 = vector.multi_reduction <add>, %44, %cst_30 [0] : vector<4x256xf32> to vector<256xf32>
      %46 = vector.shape_cast %45 : vector<256xf32> to vector<1x256xf32>
      %cst_31 = arith.constant 4.000000e+00 : f32
      %47 = vector.broadcast %cst_31 : f32 to vector<1x256xf32>
      %48 = arith.divf %46, %47 : vector<1x256xf32>
      %cst_32 = arith.constant 9.99999974E-6 : f32
      %49 = vector.broadcast %cst_32 : f32 to vector<1x256xf32>
      %50 = arith.addf %48, %49 : vector<1x256xf32>
      %51 = math.rsqrt %50 : vector<1x256xf32>
      %52 = vector.broadcast %51 : vector<1x256xf32> to vector<4x256xf32>
      %53 = arith.mulf %43, %52 : vector<4x256xf32>
      %54 = vector.broadcast %36 : vector<1x256xf32> to vector<4x256xf32>
      %55 = arith.mulf %53, %54 : vector<4x256xf32>
      %56 = vector.broadcast %37 : vector<1x256xf32> to vector<4x256xf32>
      %57 = arith.addf %55, %56 : vector<4x256xf32>
      %cst_33 = arith.constant 0.000000e+00 : f32
      %58 = vector.broadcast %cst_33 : f32 to vector<4x256xf32>
      %59 = arith.cmpf ogt, %57, %58 : vector<4x256xf32>
      %cst_34 = arith.constant 0.00999999977 : f32
      %60 = vector.broadcast %cst_34 : f32 to vector<4x256xf32>
      %61 = arith.mulf %60, %57 : vector<4x256xf32>
      %62 = arith.select %59, %57, %61 : vector<4x256xi1>, vector<4x256xf32>
      %63 = arith.truncf %62 : vector<4x256xf32> to vector<4x256xbf16>
      %c0_35 = arith.constant 0 : index
      %c0_36 = arith.constant 0 : index
      %c0_37 = arith.constant 0 : index
      %64 = vector.load %arg10[%c0_35, %c0_36, %c0_37] : memref<4x256x256xbf16, #tpu.memory_space<vmem>>, vector<1x256x256xbf16>
      %65 = vector.shape_cast %64 : vector<1x256x256xbf16> to vector<256x256xbf16>
      %cst_38 = arith.constant dense<0.000000e+00> : vector<4x256xf32>
      %66 = tpu.matmul %63, %65, %cst_38 {dimension_numbers = #tpu.dot_dimension_numbers<[1], [0], [0], [1], [0, 0, 1, 1], [], []>} : vector<4x256xbf16>, vector<256x256xbf16>, vector<4x256xf32> -> vector<4x256xf32>
      %c3 = arith.constant 3 : index
      %c0_39 = arith.constant 0 : index
      %67 = vector.load %arg9[%c3, %c0_39] : memref<15x256xf32, #tpu.memory_space<vmem>>, vector<1x256xf32>
      %68 = vector.broadcast %67 : vector<1x256xf32> to vector<4x256xf32>
      %69 = arith.addf %66, %68 : vector<4x256xf32>
      %c4 = arith.constant 4 : index
      %c0_40 = arith.constant 0 : index
      %70 = vector.load %arg9[%c4, %c0_40] : memref<15x256xf32, #tpu.memory_space<vmem>>, vector<1x256xf32>
      %c5 = arith.constant 5 : index
      %c0_41 = arith.constant 0 : index
      %71 = vector.load %arg9[%c5, %c0_41] : memref<15x256xf32, #tpu.memory_space<vmem>>, vector<1x256xf32>
      %cst_42 = arith.constant dense<0.000000e+00> : vector<256xf32>
      %72 = vector.multi_reduction <add>, %69, %cst_42 [0] : vector<4x256xf32> to vector<256xf32>
      %73 = vector.shape_cast %72 : vector<256xf32> to vector<1x256xf32>
      %cst_43 = arith.constant 4.000000e+00 : f32
      %74 = vector.broadcast %cst_43 : f32 to vector<1x256xf32>
      %75 = arith.divf %73, %74 : vector<1x256xf32>
      %76 = vector.broadcast %75 : vector<1x256xf32> to vector<4x256xf32>
      %77 = arith.subf %69, %76 : vector<4x256xf32>
      %78 = arith.mulf %77, %77 : vector<4x256xf32>
      %cst_44 = arith.constant dense<0.000000e+00> : vector<256xf32>
      %79 = vector.multi_reduction <add>, %78, %cst_44 [0] : vector<4x256xf32> to vector<256xf32>
      %80 = vector.shape_cast %79 : vector<256xf32> to vector<1x256xf32>
      %cst_45 = arith.constant 4.000000e+00 : f32
      %81 = vector.broadcast %cst_45 : f32 to vector<1x256xf32>
      %82 = arith.divf %80, %81 : vector<1x256xf32>
      %cst_46 = arith.constant 9.99999974E-6 : f32
      %83 = vector.broadcast %cst_46 : f32 to vector<1x256xf32>
      %84 = arith.addf %82, %83 : vector<1x256xf32>
      %85 = math.rsqrt %84 : vector<1x256xf32>
      %86 = vector.broadcast %85 : vector<1x256xf32> to vector<4x256xf32>
      %87 = arith.mulf %77, %86 : vector<4x256xf32>
      %88 = vector.broadcast %70 : vector<1x256xf32> to vector<4x256xf32>
      %89 = arith.mulf %87, %88 : vector<4x256xf32>
      %90 = vector.broadcast %71 : vector<1x256xf32> to vector<4x256xf32>
      %91 = arith.addf %89, %90 : vector<4x256xf32>
      %cst_47 = arith.constant 0.000000e+00 : f32
      %92 = vector.broadcast %cst_47 : f32 to vector<4x256xf32>
      %93 = arith.cmpf ogt, %91, %92 : vector<4x256xf32>
      %cst_48 = arith.constant 0.00999999977 : f32
      %94 = vector.broadcast %cst_48 : f32 to vector<4x256xf32>
      %95 = arith.mulf %94, %91 : vector<4x256xf32>
      %96 = arith.select %93, %91, %95 : vector<4x256xi1>, vector<4x256xf32>
      %97 = arith.truncf %96 : vector<4x256xf32> to vector<4x256xbf16>
      %c1_49 = arith.constant 1 : index
      %c0_50 = arith.constant 0 : index
      %c0_51 = arith.constant 0 : index
      %98 = vector.load %arg10[%c1_49, %c0_50, %c0_51] : memref<4x256x256xbf16, #tpu.memory_space<vmem>>, vector<1x256x256xbf16>
      %99 = vector.shape_cast %98 : vector<1x256x256xbf16> to vector<256x256xbf16>
      %cst_52 = arith.constant dense<0.000000e+00> : vector<4x256xf32>
      %100 = tpu.matmul %97, %99, %cst_52 {dimension_numbers = #tpu.dot_dimension_numbers<[1], [0], [0], [1], [0, 0, 1, 1], [], []>} : vector<4x256xbf16>, vector<256x256xbf16>, vector<4x256xf32> -> vector<4x256xf32>
      %c6 = arith.constant 6 : index
      %c0_53 = arith.constant 0 : index
      %101 = vector.load %arg9[%c6, %c0_53] : memref<15x256xf32, #tpu.memory_space<vmem>>, vector<1x256xf32>
      %102 = vector.broadcast %101 : vector<1x256xf32> to vector<4x256xf32>
      %103 = arith.addf %100, %102 : vector<4x256xf32>
      %c7 = arith.constant 7 : index
      %c0_54 = arith.constant 0 : index
      %104 = vector.load %arg9[%c7, %c0_54] : memref<15x256xf32, #tpu.memory_space<vmem>>, vector<1x256xf32>
      %c8 = arith.constant 8 : index
      %c0_55 = arith.constant 0 : index
      %105 = vector.load %arg9[%c8, %c0_55] : memref<15x256xf32, #tpu.memory_space<vmem>>, vector<1x256xf32>
      %cst_56 = arith.constant dense<0.000000e+00> : vector<256xf32>
      %106 = vector.multi_reduction <add>, %103, %cst_56 [0] : vector<4x256xf32> to vector<256xf32>
      %107 = vector.shape_cast %106 : vector<256xf32> to vector<1x256xf32>
      %cst_57 = arith.constant 4.000000e+00 : f32
      %108 = vector.broadcast %cst_57 : f32 to vector<1x256xf32>
      %109 = arith.divf %107, %108 : vector<1x256xf32>
      %110 = vector.broadcast %109 : vector<1x256xf32> to vector<4x256xf32>
      %111 = arith.subf %103, %110 : vector<4x256xf32>
      %112 = arith.mulf %111, %111 : vector<4x256xf32>
      %cst_58 = arith.constant dense<0.000000e+00> : vector<256xf32>
      %113 = vector.multi_reduction <add>, %112, %cst_58 [0] : vector<4x256xf32> to vector<256xf32>
      %114 = vector.shape_cast %113 : vector<256xf32> to vector<1x256xf32>
      %cst_59 = arith.constant 4.000000e+00 : f32
      %115 = vector.broadcast %cst_59 : f32 to vector<1x256xf32>
      %116 = arith.divf %114, %115 : vector<1x256xf32>
      %cst_60 = arith.constant 9.99999974E-6 : f32
      %117 = vector.broadcast %cst_60 : f32 to vector<1x256xf32>
      %118 = arith.addf %116, %117 : vector<1x256xf32>
      %119 = math.rsqrt %118 : vector<1x256xf32>
      %120 = vector.broadcast %119 : vector<1x256xf32> to vector<4x256xf32>
      %121 = arith.mulf %111, %120 : vector<4x256xf32>
      %122 = vector.broadcast %104 : vector<1x256xf32> to vector<4x256xf32>
      %123 = arith.mulf %121, %122 : vector<4x256xf32>
      %124 = vector.broadcast %105 : vector<1x256xf32> to vector<4x256xf32>
      %125 = arith.addf %123, %124 : vector<4x256xf32>
      %cst_61 = arith.constant 0.000000e+00 : f32
      %126 = vector.broadcast %cst_61 : f32 to vector<4x256xf32>
      %127 = arith.cmpf ogt, %125, %126 : vector<4x256xf32>
      %cst_62 = arith.constant 0.00999999977 : f32
      %128 = vector.broadcast %cst_62 : f32 to vector<4x256xf32>
      %129 = arith.mulf %128, %125 : vector<4x256xf32>
      %130 = arith.select %127, %125, %129 : vector<4x256xi1>, vector<4x256xf32>
      %131 = arith.truncf %130 : vector<4x256xf32> to vector<4x256xbf16>
      %c2_63 = arith.constant 2 : index
      %c0_64 = arith.constant 0 : index
      %c0_65 = arith.constant 0 : index
      %132 = vector.load %arg10[%c2_63, %c0_64, %c0_65] : memref<4x256x256xbf16, #tpu.memory_space<vmem>>, vector<1x256x256xbf16>
      %133 = vector.shape_cast %132 : vector<1x256x256xbf16> to vector<256x256xbf16>
      %cst_66 = arith.constant dense<0.000000e+00> : vector<4x256xf32>
      %134 = tpu.matmul %131, %133, %cst_66 {dimension_numbers = #tpu.dot_dimension_numbers<[1], [0], [0], [1], [0, 0, 1, 1], [], []>} : vector<4x256xbf16>, vector<256x256xbf16>, vector<4x256xf32> -> vector<4x256xf32>
      %c9 = arith.constant 9 : index
      %c0_67 = arith.constant 0 : index
      %135 = vector.load %arg9[%c9, %c0_67] : memref<15x256xf32, #tpu.memory_space<vmem>>, vector<1x256xf32>
      %136 = vector.broadcast %135 : vector<1x256xf32> to vector<4x256xf32>
      %137 = arith.addf %134, %136 : vector<4x256xf32>
      %c10 = arith.constant 10 : index
      %c0_68 = arith.constant 0 : index
      %138 = vector.load %arg9[%c10, %c0_68] : memref<15x256xf32, #tpu.memory_space<vmem>>, vector<1x256xf32>
      %c11 = arith.constant 11 : index
      %c0_69 = arith.constant 0 : index
      %139 = vector.load %arg9[%c11, %c0_69] : memref<15x256xf32, #tpu.memory_space<vmem>>, vector<1x256xf32>
      %cst_70 = arith.constant dense<0.000000e+00> : vector<256xf32>
      %140 = vector.multi_reduction <add>, %137, %cst_70 [0] : vector<4x256xf32> to vector<256xf32>
      %141 = vector.shape_cast %140 : vector<256xf32> to vector<1x256xf32>
      %cst_71 = arith.constant 4.000000e+00 : f32
      %142 = vector.broadcast %cst_71 : f32 to vector<1x256xf32>
      %143 = arith.divf %141, %142 : vector<1x256xf32>
      %144 = vector.broadcast %143 : vector<1x256xf32> to vector<4x256xf32>
      %145 = arith.subf %137, %144 : vector<4x256xf32>
      %146 = arith.mulf %145, %145 : vector<4x256xf32>
      %cst_72 = arith.constant dense<0.000000e+00> : vector<256xf32>
      %147 = vector.multi_reduction <add>, %146, %cst_72 [0] : vector<4x256xf32> to vector<256xf32>
      %148 = vector.shape_cast %147 : vector<256xf32> to vector<1x256xf32>
      %cst_73 = arith.constant 4.000000e+00 : f32
      %149 = vector.broadcast %cst_73 : f32 to vector<1x256xf32>
      %150 = arith.divf %148, %149 : vector<1x256xf32>
      %cst_74 = arith.constant 9.99999974E-6 : f32
      %151 = vector.broadcast %cst_74 : f32 to vector<1x256xf32>
      %152 = arith.addf %150, %151 : vector<1x256xf32>
      %153 = math.rsqrt %152 : vector<1x256xf32>
      %154 = vector.broadcast %153 : vector<1x256xf32> to vector<4x256xf32>
      %155 = arith.mulf %145, %154 : vector<4x256xf32>
      %156 = vector.broadcast %138 : vector<1x256xf32> to vector<4x256xf32>
      %157 = arith.mulf %155, %156 : vector<4x256xf32>
      %158 = vector.broadcast %139 : vector<1x256xf32> to vector<4x256xf32>
      %159 = arith.addf %157, %158 : vector<4x256xf32>
      %cst_75 = arith.constant 0.000000e+00 : f32
      %160 = vector.broadcast %cst_75 : f32 to vector<4x256xf32>
      %161 = arith.cmpf ogt, %159, %160 : vector<4x256xf32>
      %cst_76 = arith.constant 0.00999999977 : f32
      %162 = vector.broadcast %cst_76 : f32 to vector<4x256xf32>
      %163 = arith.mulf %162, %159 : vector<4x256xf32>
      %164 = arith.select %161, %159, %163 : vector<4x256xi1>, vector<4x256xf32>
      %165 = arith.truncf %164 : vector<4x256xf32> to vector<4x256xbf16>
      %c3_77 = arith.constant 3 : index
      %c0_78 = arith.constant 0 : index
      %c0_79 = arith.constant 0 : index
      %166 = vector.load %arg10[%c3_77, %c0_78, %c0_79] : memref<4x256x256xbf16, #tpu.memory_space<vmem>>, vector<1x256x256xbf16>
      %167 = vector.shape_cast %166 : vector<1x256x256xbf16> to vector<256x256xbf16>
      %cst_80 = arith.constant dense<0.000000e+00> : vector<4x256xf32>
      %168 = tpu.matmul %165, %167, %cst_80 {dimension_numbers = #tpu.dot_dimension_numbers<[1], [0], [0], [1], [0, 0, 1, 1], [], []>} : vector<4x256xbf16>, vector<256x256xbf16>, vector<4x256xf32> -> vector<4x256xf32>
      %c12 = arith.constant 12 : index
      %c0_81 = arith.constant 0 : index
      %169 = vector.load %arg9[%c12, %c0_81] : memref<15x256xf32, #tpu.memory_space<vmem>>, vector<1x256xf32>
      %170 = vector.broadcast %169 : vector<1x256xf32> to vector<4x256xf32>
      %171 = arith.addf %168, %170 : vector<4x256xf32>
      %c13 = arith.constant 13 : index
      %c0_82 = arith.constant 0 : index
      %172 = vector.load %arg9[%c13, %c0_82] : memref<15x256xf32, #tpu.memory_space<vmem>>, vector<1x256xf32>
      %c14 = arith.constant 14 : index
      %c0_83 = arith.constant 0 : index
      %173 = vector.load %arg9[%c14, %c0_83] : memref<15x256xf32, #tpu.memory_space<vmem>>, vector<1x256xf32>
      %cst_84 = arith.constant dense<0.000000e+00> : vector<256xf32>
      %174 = vector.multi_reduction <add>, %171, %cst_84 [0] : vector<4x256xf32> to vector<256xf32>
      %175 = vector.shape_cast %174 : vector<256xf32> to vector<1x256xf32>
      %cst_85 = arith.constant 4.000000e+00 : f32
      %176 = vector.broadcast %cst_85 : f32 to vector<1x256xf32>
      %177 = arith.divf %175, %176 : vector<1x256xf32>
      %178 = vector.broadcast %177 : vector<1x256xf32> to vector<4x256xf32>
      %179 = arith.subf %171, %178 : vector<4x256xf32>
      %180 = arith.mulf %179, %179 : vector<4x256xf32>
      %cst_86 = arith.constant dense<0.000000e+00> : vector<256xf32>
      %181 = vector.multi_reduction <add>, %180, %cst_86 [0] : vector<4x256xf32> to vector<256xf32>
      %182 = vector.shape_cast %181 : vector<256xf32> to vector<1x256xf32>
      %cst_87 = arith.constant 4.000000e+00 : f32
      %183 = vector.broadcast %cst_87 : f32 to vector<1x256xf32>
      %184 = arith.divf %182, %183 : vector<1x256xf32>
      %cst_88 = arith.constant 9.99999974E-6 : f32
      %185 = vector.broadcast %cst_88 : f32 to vector<1x256xf32>
      %186 = arith.addf %184, %185 : vector<1x256xf32>
      %187 = math.rsqrt %186 : vector<1x256xf32>
      %188 = vector.broadcast %187 : vector<1x256xf32> to vector<4x256xf32>
      %189 = arith.mulf %179, %188 : vector<4x256xf32>
      %190 = vector.broadcast %172 : vector<1x256xf32> to vector<4x256xf32>
      %191 = arith.mulf %189, %190 : vector<4x256xf32>
      %192 = vector.broadcast %173 : vector<1x256xf32> to vector<4x256xf32>
      %193 = arith.addf %191, %192 : vector<4x256xf32>
      %cst_89 = arith.constant 0.000000e+00 : f32
      %194 = vector.broadcast %cst_89 : f32 to vector<4x256xf32>
      %195 = arith.cmpf ogt, %193, %194 : vector<4x256xf32>
      %cst_90 = arith.constant 0.00999999977 : f32
      %196 = vector.broadcast %cst_90 : f32 to vector<4x256xf32>
      %197 = arith.mulf %196, %193 : vector<4x256xf32>
      %198 = arith.select %195, %193, %197 : vector<4x256xi1>, vector<4x256xf32>
      %199 = arith.truncf %198 : vector<4x256xf32> to vector<4x256xbf16>
      %c0_91 = arith.constant 0 : index
      %c0_92 = arith.constant 0 : index
      %200 = vector.load %arg11[%c0_91, %c0_92] : memref<256x9xbf16, #tpu.memory_space<vmem>>, vector<256x9xbf16>
      %cst_93 = arith.constant dense<0.000000e+00> : vector<4x9xf32>
      %201 = tpu.matmul %199, %200, %cst_93 {dimension_numbers = #tpu.dot_dimension_numbers<[1], [0], [0], [1], [0, 0, 1, 1], [], []>} : vector<4x256xbf16>, vector<256x9xbf16>, vector<4x9xf32> -> vector<4x9xf32>
      %c0_94 = arith.constant 0 : index
      %c0_95 = arith.constant 0 : index
      %202 = vector.load %arg12[%c0_94, %c0_95] : memref<1x9xf32, #tpu.memory_space<vmem>>, vector<1x9xf32>
      %203 = vector.broadcast %202 : vector<1x9xf32> to vector<4x9xf32>
      %204 = arith.addf %201, %203 : vector<4x9xf32>
      %205 = math.tanh %204 : vector<4x9xf32>
      %cst_96 = arith.constant 2.000000e-01 : f32
      %206 = vector.broadcast %cst_96 : f32 to vector<4x9xf32>
      %207 = arith.mulf %205, %206 : vector<4x9xf32>
      %c0_97 = arith.constant 0 : index
      %c0_98 = arith.constant 0 : index
      %208 = vector.load %arg14[%c0_97, %c0_98] : memref<4x9xf32, #tpu.memory_space<vmem>>, vector<4x9xf32>
      tpu.vector_store %arg14[%c0_97, %c0_98], %207 {strides = array<i32>} : memref<4x9xf32, #tpu.memory_space<vmem>>, vector<4x9xf32>,
      %c0_99 = arith.constant 0 : index
      %c0_100 = arith.constant 0 : index
      %209 = vector.load %arg5[%c0_99, %c0_100] : memref<9x45xf32, #tpu.memory_space<vmem>>, vector<9x45xf32>
      %cst_101 = arith.constant dense<0.000000e+00> : vector<4x45xf32>
      %210 = tpu.matmul %207, %209, %cst_101 {dimension_numbers = #tpu.dot_dimension_numbers<[1], [0], [0], [1], [0, 0, 1, 1], [], []>} : vector<4x9xf32>, vector<9x45xf32>, vector<4x45xf32> -> vector<4x45xf32>
      %c0_102 = arith.constant 0 : index
      %c0_103 = arith.constant 0 : index
      %211 = vector.load %arg15[%c0_102, %c0_103] : memref<4x45xf32, #tpu.memory_space<vmem>>, vector<4x45xf32>
      tpu.vector_store %arg15[%c0_102, %c0_103], %210 {strides = array<i32>} : memref<4x45xf32, #tpu.memory_space<vmem>>, vector<4x45xf32>,
    } else {
    }
    %c0_2 = arith.constant 0 : index
    %c0_3 = arith.constant 0 : index
    %c0_4 = arith.constant 0 : index
    %4 = vector.load %arg2[%c0_2, %c0_3, %c0_4] : memref<1x9x48xf32, #tpu.memory_space<vmem>>, vector<1x9x48xf32>
    %5 = vector.shape_cast %4 : vector<1x9x48xf32> to vector<9x48xf32>
    %cst = arith.constant dense<0.000000e+00> : vector<9x45xf32>
    %6 = tpu.matmul %5, %0, %cst {dimension_numbers = #tpu.dot_dimension_numbers<[1], [0], [0], [1], [0, 0, 1, 1], [], []>} : vector<9x48xf32>, vector<48x45xf32>, vector<9x45xf32> -> vector<9x45xf32>
    %7 = arith.index_cast %arg0 : i32 to index
    %c0_5 = arith.constant 0 : index
    %8 = vector.load %arg15[%7, %c0_5] : memref<4x45xf32, #tpu.memory_space<vmem>>, vector<1x45xf32>
    %cst_6 = arith.constant 1.000000e+00 : f32
    %9 = vector.broadcast %cst_6 : f32 to vector<1x45xf32>
    %10 = arith.addf %9, %8 : vector<1x45xf32>
    %11 = vector.broadcast %10 : vector<1x45xf32> to vector<9x45xf32>
    %12 = arith.mulf %6, %11 : vector<9x45xf32>
    %c0_7 = arith.constant 0 : index
    %c0_8 = arith.constant 0 : index
    %13 = vector.load %arg6[%c0_7, %c0_8] : memref<45x48xf32, #tpu.memory_space<vmem>>, vector<45x48xf32>
    %cst_9 = arith.constant dense<0.000000e+00> : vector<9x48xf32>
    %14 = tpu.matmul %12, %13, %cst_9 {dimension_numbers = #tpu.dot_dimension_numbers<[1], [0], [0], [1], [0, 0, 1, 1], [], []>} : vector<9x45xf32>, vector<45x48xf32>, vector<9x48xf32> -> vector<9x48xf32>
    %15 = arith.index_cast %arg0 : i32 to index
    %c0_10 = arith.constant 0 : index
    %c0_11 = arith.constant 0 : index
    %16 = vector.load %arg13[%15, %c0_10, %c0_11] : memref<4x9x48xf32, #tpu.memory_space<vmem>>, vector<1x9x48xf32>
    %17 = vector.shape_cast %16 : vector<1x9x48xf32> to vector<9x48xf32>
    %18 = vector.shape_cast %14 : vector<9x48xf32> to vector<1x9x48xf32>
    tpu.vector_store %arg13[%15, %c0_10, %c0_11], %18 {strides = array<i32>} : memref<4x9x48xf32, #tpu.memory_space<vmem>>, vector<1x9x48xf32>,
    return
  }
  func.func @transform_0(%arg0: i32) -> (i32, i32) {
    %c0_i32 = arith.constant 0 : i32
    %c0_i32_0 = arith.constant 0 : i32
    %c0_i32_1 = arith.constant 0 : i32
    return %c0_i32, %c0_i32_0 : i32, i32
  }
  func.func @transform_1(%arg0: i32) -> (i32, i32, i32) {
    %c0_i32 = arith.constant 0 : i32
    %c0_i32_0 = arith.constant 0 : i32
    %c0_i32_1 = arith.constant 0 : i32
    return %arg0, %c0_i32, %c0_i32_0 : i32, i32, i32
  }
  func.func @transform_2(%arg0: i32) -> (i32, i32) {
    %c0_i32 = arith.constant 0 : i32
    %c0_i32_0 = arith.constant 0 : i32
    %c0_i32_1 = arith.constant 0 : i32
    return %c0_i32, %c0_i32_0 : i32, i32
  }
  func.func @transform_3(%arg0: i32) -> (i32, i32) {
    %c0_i32 = arith.constant 0 : i32
    %c0_i32_0 = arith.constant 0 : i32
    %c0_i32_1 = arith.constant 0 : i32
    return %c0_i32, %c0_i32_0 : i32, i32
  }
  func.func @transform_4(%arg0: i32) -> (i32, i32) {
    %c0_i32 = arith.constant 0 : i32
    %c0_i32_0 = arith.constant 0 : i32
    %c0_i32_1 = arith.constant 0 : i32
    return %c0_i32, %c0_i32_0 : i32, i32
  }
  func.func @transform_5(%arg0: i32) -> (i32, i32) {
    %c0_i32 = arith.constant 0 : i32
    %c0_i32_0 = arith.constant 0 : i32
    %c0_i32_1 = arith.constant 0 : i32
    return %c0_i32, %c0_i32_0 : i32, i32
  }
  func.func @transform_6(%arg0: i32) -> (i32, i32) {
    %c0_i32 = arith.constant 0 : i32
    %c0_i32_0 = arith.constant 0 : i32
    %c0_i32_1 = arith.constant 0 : i32
    return %c0_i32, %c0_i32_0 : i32, i32
  }
  func.func @transform_7(%arg0: i32) -> (i32, i32) {
    %c0_i32 = arith.constant 0 : i32
    %c0_i32_0 = arith.constant 0 : i32
    %c0_i32_1 = arith.constant 0 : i32
    return %c0_i32, %c0_i32_0 : i32, i32
  }
  func.func @transform_8(%arg0: i32) -> (i32, i32) {
    %c0_i32 = arith.constant 0 : i32
    %c0_i32_0 = arith.constant 0 : i32
    %c0_i32_1 = arith.constant 0 : i32
    return %c0_i32, %c0_i32_0 : i32, i32
  }
  func.func @transform_9(%arg0: i32) -> (i32, i32, i32) {
    %c0_i32 = arith.constant 0 : i32
    %c0_i32_0 = arith.constant 0 : i32
    %c0_i32_1 = arith.constant 0 : i32
    %c0_i32_2 = arith.constant 0 : i32
    return %c0_i32, %c0_i32_0, %c0_i32_1 : i32, i32, i32
  }
  func.func @transform_10(%arg0: i32) -> (i32, i32) {
    %c0_i32 = arith.constant 0 : i32
    %c0_i32_0 = arith.constant 0 : i32
    %c0_i32_1 = arith.constant 0 : i32
    return %c0_i32, %c0_i32_0 : i32, i32
  }
  func.func @transform_11(%arg0: i32) -> (i32, i32) {
    %c0_i32 = arith.constant 0 : i32
    %c0_i32_0 = arith.constant 0 : i32
    %c0_i32_1 = arith.constant 0 : i32
    return %c0_i32, %c0_i32_0 : i32, i32
  }
  func.func @transform_12(%arg0: i32) -> (i32, i32, i32) {
    %c0_i32 = arith.constant 0 : i32
    %c0_i32_0 = arith.constant 0 : i32
    %c0_i32_1 = arith.constant 0 : i32
    %c0_i32_2 = arith.constant 0 : i32
    return %c0_i32, %c0_i32_0, %c0_i32_1 : i32, i32, i32
  }
  func.func @transform_13(%arg0: i32) -> (i32, i32) {
    %c0_i32 = arith.constant 0 : i32
    %c0_i32_0 = arith.constant 0 : i32
    %c0_i32_1 = arith.constant 0 : i32
    return %c0_i32, %c0_i32_0 : i32, i32
  }
}

</mosaic_0001>

<llo_original>
// kernel: mul.9
$region0: #{mul.9}
  #allocation2 [shape = 's32[1]{0}', space=sflag, size = 0x4, scoped, tag = 'scoped memory for mul.9']
  %s0 = inlined_call_operand.hbm [shape: f32[1,9], index: 0, kind: input, shape index: {}]
  %s1 = inlined_call_operand.vmem [shape: f32[1,9], index: 1, kind: input, shape index: {}]
  %s2 = inlined_call_operand.vmem [shape: f32[1,9], index: 2, kind: output, shape index: {}]
  $region1: #{mul.9} parent=0
    #allocation0 [shape = 'u8[512]{0}', space=vmem, size = 0x400, scoped, tag = 'operand span for operand 0']
    #allocation1 [shape = 's32[1]{0}', space=sflag, size = 0x4, scoped, tag = 'scoped memory for mul.9']
    %3 = vsyncpa [#allocation1], 0
    %s5 = ssub.s32 16, 16
    %6 = vsyncadd [#allocation1], %s5
    %s8 = sshll.u32 [#allocation0], 4
    %s9 = int_to_ptr.vmem [resolvable:$true] %s8
    %11 = dma.hbm_to_vmem [thread:$0]  %s0, 16, %s9, [#allocation1]
    %12 = dma.done [#allocation1], 16
    %v13 = vld [vmem:[#allocation0] sm:$0x1]
    %v14 = vld [vmem:[%s1] sm:$0x1]
    %15 = xla_tuple %v13, %v14
    %16 = xla_tuple %15
    %v17 = vmul.f32 %v13, %v14
    %18 = xla_tuple %v17
    %19 = vst [vmem:[%s2] sm:$0x1] %v17
    %20 = vsyncpa [#allocation1], 1

// kernel: squeeze.15
$region0: #{squeeze.15}
  %s0 = inlined_call_operand.vmem [shape: f32[4,1,16,3], index: 0, kind: input, shape index: {}]
  %s1 = inlined_call_operand.vmem [shape: f32[4,48], index: 1, kind: output, shape index: {}]
  $region1: #{squeeze.15} parent=0
    #allocation0 [shape = 'u8[4096]{0}', space=vmem, size = 0x1000, scoped, tag = 'scoped mem for output reshape']
    %s2 = smov 3
    %v3 = vld [vmem:[%s0] ss:$16 sm:%s2]
    %s4 = smov 12
    %v5 = vld [vmem:[%s0] ss:$16 sm:%s4]
    %vm6 = vcmask 1043458
    %v7 = vsel %vm6, %v5, %v3
    %vm8 = vcmask 23552
    %9 = vst.msk [vmem:[#allocation0] sm:$0xf] %vm8, %v7
    %s10 = scalar_lea.vmem %s0, 15
    %s11 = smov 3
    %v12 = vld [vmem:[%s10] ss:$16 sm:%s11]
    %s13 = scalar_lea.vmem %s0, 15
    %s14 = smov 12
    %v15 = vld [vmem:[%s13] ss:$16 sm:%s14]
    %vm16 = vcmask 1043458
    %v17 = vsel %vm16, %v15, %v12
    %18 = vrot.lane.b32.xlu0 %v17, 45
    %v19 = vpop.permute.xlu0 %18
    %vm20 = vcmask 392552
    %21 = vst.msk [vmem:[#allocation0] sm:$0xf] %vm20, %v19
    %s22 = scalar_lea.vmem %s0, 14
    %s23 = smov 3
    %v24 = vld [vmem:[%s22] ss:$16 sm:%s23]
    %s25 = scalar_lea.vmem %s0, 14
    %s26 = smov 12
    %v27 = vld [vmem:[%s25] ss:$16 sm:%s26]
    %vm28 = vcmask 1043458
    %v29 = vsel %vm28, %v27, %v24
    %30 = vrot.lane.b32.xlu0 %v29, 42
    %v31 = vpop.permute.xlu0 %30
    %vm32 = vcmask 367952
    %33 = vst.msk [vmem:[#allocation0] sm:$0xf] %vm32, %v31
    %s34 = scalar_lea.vmem %s0, 13
    %s35 = smov 3
    %v36 = vld [vmem:[%s34] ss:$16 sm:%s35]
    %s37 = scalar_lea.vmem %s0, 13
    %s38 = smov 12
    %v39 = vld [vmem:[%s37] ss:$16 sm:%s38]
    %vm40 = vcmask 1043458
    %v41 = vsel %vm40, %v39, %v36
    %42 = vrot.lane.b32.xlu0 %v41, 39
    %v43 = vpop.permute.xlu0 %42
    %vm44 = vcmask 343352
    %45 = vst.msk [vmem:[#allocation0] sm:$0xf] %vm44, %v43
    %s46 = scalar_lea.vmem %s0, 12
    %s47 = smov 3
    %v48 = vld [vmem:[%s46] ss:$16 sm:%s47]
    %s49 = scalar_lea.vmem %s0, 12
    %s50 = smov 12
    %v51 = vld [vmem:[%s49] ss:$16 sm:%s50]
    %vm52 = vcmask 1043458
    %v53 = vsel %vm52, %v51, %v48
    %54 = vrot.lane.b32.xlu0 %v53, 36
    %v55 = vpop.permute.xlu0 %54
    %vm56 = vcmask 318752
    %57 = vst.msk [vmem:[#allocation0] sm:$0xf] %vm56, %v55
    %s58 = scalar_lea.vmem %s0, 11
    %s59 = smov 3
    %v60 = vld [vmem:[%s58] ss:$16 sm:%s59]
    %s61 = scalar_lea.vmem %s0, 11
    %s62 = smov 12
    %v63 = vld [vmem:[%s61] ss:$16 sm:%s62]
    %vm64 = vcmask 1043458
    %v65 = vsel %vm64, %v63, %v60
    %66 = vrot.lane.b32.xlu0 %v65, 33
    %v67 = vpop.permute.xlu0 %66
    %vm68 = vcmask 294152
    %69 = vst.msk [vmem:[#allocation0] sm:$0xf] %vm68, %v67
    %s70 = scalar_lea.vmem %s0, 10
    %s71 = smov 3
    %v72 = vld [vmem:[%s70] ss:$16 sm:%s71]
    %s73 = scalar_lea.vmem %s0, 10
    %s74 = smov 12
    %v75 = vld [vmem:[%s73] ss:$16 sm:%s74]
    %vm76 = vcmask 1043458
    %v77 = vsel %vm76, %v75, %v72
    %78 = vrot.lane.b32.xlu0 %v77, 30
    %v79 = vpop.permute.xlu0 %78
    %vm80 = vcmask 269552
    %81 = vst.msk [vmem:[#allocation0] sm:$0xf] %vm80, %v79
    %s82 = scalar_lea.vmem %s0, 9
    %s83 = smov 3
    %v84 = vld [vmem:[%s82] ss:$16 sm:%s83]
    %s85 = scalar_lea.vmem %s0, 9
    %s86 = smov 12
    %v87 = vld [vmem:[%s85] ss:$16 sm:%s86]
    %vm88 = vcmask 1043458
    %v89 = vsel %vm88, %v87, %v84
    %90 = vrot.lane.b32.xlu0 %v89, 27
    %v91 = vpop.permute.xlu0 %90
    %vm92 = vcmask 244952
    %93 = vst.msk [vmem:[#allocation0] sm:$0xf] %vm92, %v91
    %s94 = scalar_lea.vmem %s0, 8
    %s95 = smov 3
    %v96 = vld [vmem:[%s94] ss:$16 sm:%s95]
    %s97 = scalar_lea.vmem %s0, 8
    %s98 = smov 12
    %v99 = vld [vmem:[%s97] ss:$16 sm:%s98]
    %vm100 = vcmask 1043458
    %v101 = vsel %vm100, %v99, %v96
    %102 = vrot.lane.b32.xlu0 %v101, 24
    %v103 = vpop.permute.xlu0 %102
    %vm104 = vcmask 220352
    %105 = vst.msk [vmem:[#allocation0] sm:$0xf] %vm104, %v103
    %s106 = scalar_lea.vmem %s0, 7
    %s107 = smov 3
    %v108 = vld [vmem:[%s106] ss:$16 sm:%s107]
    %s109 = scalar_lea.vmem %s0, 7
    %s110 = smov 12
    %v111 = vld [vmem:[%s109] ss:$16 sm:%s110]
    %vm112 = vcmask 1043458
    %v113 = vsel %vm112, %v111, %v108
    %114 = vrot.lane.b32.xlu0 %v113, 21
    %v115 = vpop.permute.xlu0 %114
    %vm116 = vcmask 195752
    %117 = vst.msk [vmem:[#allocation0] sm:$0xf] %vm116, %v115
    %s118 = scalar_lea.vmem %s0, 6
    %s119 = smov 3
    %v120 = vld [vmem:[%s118] ss:$16 sm:%s119]
    %s121 = scalar_lea.vmem %s0, 6
    %s122 = smov 12
    %v123 = vld [vmem:[%s121] ss:$16 sm:%s122]
    %vm124 = vcmask 1043458
    %v125 = vsel %vm124, %v123, %v120
    %126 = vrot.lane.b32.xlu0 %v125, 18
    %v127 = vpop.permute.xlu0 %126
    %vm128 = vcmask 171152
    %129 = vst.msk [vmem:[#allocation0] sm:$0xf] %vm128, %v127
    %s130 = scalar_lea.vmem %s0, 5
    %s131 = smov 3
    %v132 = vld [vmem:[%s130] ss:$16 sm:%s131]
    %s133 = scalar_lea.vmem %s0, 5
    %s134 = smov 12
    %v135 = vld [vmem:[%s133] ss:$16 sm:%s134]
    %vm136 = vcmask 1043458
    %v137 = vsel %vm136, %v135, %v132
    %138 = vrot.lane.b32.xlu0 %v137, 15
    %v139 = vpop.permute.xlu0 %138
    %vm140 = vcmask 146552
    %141 = vst.msk [vmem:[#allocation0] sm:$0xf] %vm140, %v139
    %s142 = scalar_lea.vmem %s0, 4
    %s143 = smov 3
    %v144 = vld [vmem:[%s142] ss:$16 sm:%s143]
    %s145 = scalar_lea.vmem %s0, 4
    %s146 = smov 12
    %v147 = vld [vmem:[%s145] ss:$16 sm:%s146]
    %vm148 = vcmask 1043458
    %v149 = vsel %vm148, %v147, %v144
    %150 = vrot.lane.b32.xlu0 %v149, 12
    %v151 = vpop.permute.xlu0 %150
    %vm152 = vcmask 121952
    %153 = vst.msk [vmem:[#allocation0] sm:$0xf] %vm152, %v151
    %s154 = scalar_lea.vmem %s0, 3
    %s155 = smov 3
    %v156 = vld [vmem:[%s154] ss:$16 sm:%s155]
    %s157 = scalar_lea.vmem %s0, 3
    %s158 = smov 12
    %v159 = vld [vmem:[%s157] ss:$16 sm:%s158]
    %vm160 = vcmask 1043458
    %v161 = vsel %vm160, %v159, %v156
    %162 = vrot.lane.b32.xlu0 %v161, 9
    %v163 = vpop.permute.xlu0 %162
    %vm164 = vcmask 97352
    %165 = vst.msk [vmem:[#allocation0] sm:$0xf] %vm164, %v163
    %s166 = scalar_lea.vmem %s0, 2
    %s167 = smov 3
    %v168 = vld [vmem:[%s166] ss:$16 sm:%s167]
    %s169 = scalar_lea.vmem %s0, 2
    %s170 = smov 12
    %v171 = vld [vmem:[%s169] ss:$16 sm:%s170]
    %vm172 = vcmask 1043458
    %v173 = vsel %vm172, %v171, %v168
    %174 = vrot.lane.b32.xlu0 %v173, 6
    %v175 = vpop.permute.xlu0 %174
    %vm176 = vcmask 72752
    %177 = vst.msk [vmem:[#allocation0] sm:$0xf] %vm176, %v175
    %s178 = scalar_lea.vmem %s0, 1
    %s179 = smov 3
    %v180 = vld [vmem:[%s178] ss:$16 sm:%s179]
    %s181 = scalar_lea.vmem %s0, 1
    %s182 = smov 12
    %v183 = vld [vmem:[%s181] ss:$16 sm:%s182]
    %vm184 = vcmask 1043458
    %v185 = vsel %vm184, %v183, %v180
    %186 = vrot.lane.b32.xlu0 %v185, 3
    %v187 = vpop.permute.xlu0 %186
    %vm188 = vcmask 48152
    %189 = vst.msk [vmem:[#allocation0] sm:$0xf] %vm188, %v187
    %s191 = sshllo.u32 0, 4
    %v193 = vld [vmem:[#allocation0] sm:%s191]
    %s194 = sshllo.u32 0, 4
    %195 = vst [vmem:[%s1] sm:%s194] %v193

// kernel: bl_generator_forward.1
$region0: #{bl_generator_forward.1}
  #allocation0 [shape = 'u32[]', space=smem, size = 0x4, offset = 0x4, fixed_abs, tag = 'smem constant byte address 0x4 - core index']
  #allocation1 [shape = 'u32[144,128]{1,0:T(1,128)}', space=vmem, size = 0x12000, scoped, tag = 'internal scratch']
  #allocation2 [shape = 'f32[4,45]{1,0:T(4,128)}', space=vmem, size = 0x800, scoped, tag = 'scratch operand']
  %s0 = inlined_call_operand.vmem [shape: f32[4,96], index: 0, kind: input, shape index: {}]
  %s1 = inlined_call_operand.vmem [shape: f32[4,9,48], index: 1, kind: input, shape index: {}]
  %s2 = inlined_call_operand.vmem [shape: f32[48,45], index: 2, kind: input, shape index: {}]
  %s3 = inlined_call_operand.vmem [shape: f32[45,15], index: 3, kind: input, shape index: {}]
  %s4 = inlined_call_operand.vmem [shape: f32[9,45], index: 4, kind: input, shape index: {}]
  %s5 = inlined_call_operand.vmem [shape: f32[45,48], index: 5, kind: input, shape index: {}]
  %s6 = inlined_call_operand.vmem [shape: bf16[96,256], index: 6, kind: input, shape index: {}]
  %s7 = inlined_call_operand.vmem [shape: bf16[15,256], index: 7, kind: input, shape index: {}]
  %s8 = inlined_call_operand.vmem [shape: f32[15,256], index: 8, kind: input, shape index: {}]
  %s9 = inlined_call_operand.vmem [shape: bf16[4,256,256], index: 9, kind: input, shape index: {}]
  %s10 = inlined_call_operand.vmem [shape: bf16[256,9], index: 10, kind: input, shape index: {}]
  %s11 = inlined_call_operand.vmem [shape: f32[1,9], index: 11, kind: input, shape index: {}]
  %s12 = inlined_call_operand.vmem [shape: f32[4,9,48], index: 12, kind: output, shape index: {0}]
  %s13 = inlined_call_operand.vmem [shape: f32[4,9], index: 13, kind: output, shape index: {1}]
  %14 = xla_tuple %s12, %s13
  %s15 = sld [smem:[#allocation0]]
  $region93: #{bl_generator_forward.1} parent=0
    _
  %s17 = ssub.s32 1, %s15
  %s18 = scalar_select 0, %s17, %s15
  loop: start=0, step=1, limit=6
  $region2: #{bl_generator_forward.1} parent=0 // loop_pre_header
    _
  $region3: #{bl_generator_forward.1} parent=0 // loop_header
    %s20 = sphi 0, %s24
    %p21 = scmp.ge.s32.totalorder %s20, 6
    %s28 = sphi 0, %s28
    %s30 = sphi 0, %s28
    %s31 = sphi 0, %s30
    %s45 = sphi 0, %s31
    %s51 = sphi 0, %s53
    %s54 = sphi 0, %s51
    %s55 = sphi 0, %s54
    %s71 = sphi 0, %s55
    %s75 = sphi 0, %s75
    %s77 = sphi 0, %s75
    %s78 = sphi 0, %s77
    %s92 = sphi 0, %s78
    %s96 = sphi 0, %s96
    %s98 = sphi 0, %s96
    %s99 = sphi 0, %s98
    %s113 = sphi 0, %s99
    %s117 = sphi 0, %s117
    %s119 = sphi 0, %s117
    %s120 = sphi 0, %s119
    %s134 = sphi 0, %s120
    %s138 = sphi 0, %s138
    %s140 = sphi 0, %s138
    %s141 = sphi 0, %s140
    %s155 = sphi 0, %s141
    %s159 = sphi 0, %s159
    %s161 = sphi 0, %s159
    %s162 = sphi 0, %s161
    %s176 = sphi 0, %s162
    %s180 = sphi 0, %s180
    %s182 = sphi 0, %s180
    %s183 = sphi 0, %s182
    %s197 = sphi 0, %s183
    %s201 = sphi 0, %s201
    %s203 = sphi 0, %s201
    %s204 = sphi 0, %s203
    %s218 = sphi 0, %s204
    %s222 = sphi 0, %s222
    %s224 = sphi 0, %s222
    %s225 = sphi 0, %s224
    %s239 = sphi 0, %s225
    %s243 = sphi 0, %s243
    %s245 = sphi 0, %s243
    %s246 = sphi 0, %s245
    %s260 = sphi 0, %s246
    %s264 = sphi 0, %s264
    %s266 = sphi 0, %s264
    %s267 = sphi 0, %s266
    %s281 = sphi 0, %s267
    %s285 = sphi 0, %s285
    %s287 = sphi 0, %s285
    %s288 = sphi 0, %s287
    %s302 = sphi 0, %s288
    %s306 = sphi 0, %s306
    %s308 = sphi 0, %s306
    %s309 = sphi 0, %s308
    %s323 = sphi 0, %s309
  $region4: #{bl_generator_forward.1} parent=0 // loop_header_branch
    %23 = sbr.rel (%p21) target = $region8
  $region5: #{bl_generator_forward.1} parent=0 // loop_body
    %s25 = ssub.s32 %s20, 1
    %s26 = ssub.s32 %s20, 2
    %s27 = sadd.s32 %s20, 1
    %s29 = sadd.s32 %s28, 1
    %p32 = scmp.eq.s32.totalorder %s20, 3
    %p33 = scmp.ne.s32.totalorder %s28, %s30
    %p34 = scmp.eq.s32.totalorder %s20, 0
    %p35 = por %p33, %p34
    %p36 = scmp.ne.s32.totalorder %s28, %s30
    %p37 = scmp.eq.s32.totalorder %s25, 3
    %p38 = por %p36, %p37
    %p39 = scmp.ne.s32.totalorder %s30, %s31
    %p40 = scmp.eq.s32.totalorder %s25, 0
    %p41 = por %p39, %p40
    %p42 = scmp.ne.s32.totalorder %s30, %s31
    %p43 = scmp.eq.s32.totalorder %s26, 3
    %p44 = por %p42, %p43
    %p46 = scmp.ne.s32.totalorder %s31, %s45
    %p47 = scmp.eq.s32.totalorder %s26, 0
    %p48 = por %p46, %p47
    %s49 = ssub.s32 %s20, %s27
    %p50 = scmp.eq.s32.totalorder %s49, 0
    %s52 = sadd.s32 %s51, 1
    %s53 = scalar_select %p50, %s51, %s52
    %p56 = pneg %p50
    %p57 = scmp.eq.s32.totalorder %s20, 3
    %p58 = por %p56, %p57
    %p59 = scmp.ne.s32.totalorder %s51, %s54
    %p60 = scmp.eq.s32.totalorder %s20, 0
    %p61 = por %p59, %p60
    %p62 = scmp.ne.s32.totalorder %s51, %s54
    %p63 = scmp.eq.s32.totalorder %s25, 3
    %p64 = por %p62, %p63
    %p65 = scmp.ne.s32.totalorder %s54, %s55
    %p66 = scmp.eq.s32.totalorder %s25, 0
    %p67 = por %p65, %p66
    %p68 = scmp.ne.s32.totalorder %s54, %s55
    %p69 = scmp.eq.s32.totalorder %s26, 3
    %p70 = por %p68, %p69
    %p72 = scmp.ne.s32.totalorder %s55, %s71
    %p73 = scmp.eq.s32.totalorder %s26, 0
    %p74 = por %p72, %p73
    %s76 = sadd.s32 %s75, 1
    %p79 = scmp.eq.s32.totalorder %s20, 3
    %p80 = scmp.ne.s32.totalorder %s75, %s77
    %p81 = scmp.eq.s32.totalorder %s20, 0
    %p82 = por %p80, %p81
    %p83 = scmp.ne.s32.totalorder %s75, %s77
    %p84 = scmp.eq.s32.totalorder %s25, 3
    %p85 = por %p83, %p84
    %p86 = scmp.ne.s32.totalorder %s77, %s78
    %p87 = scmp.eq.s32.totalorder %s25, 0
    %p88 = por %p86, %p87
    %p89 = scmp.ne.s32.totalorder %s77, %s78
    %p90 = scmp.eq.s32.totalorder %s26, 3
    %p91 = por %p89, %p90
    %p93 = scmp.ne.s32.totalorder %s78, %s92
    %p94 = scmp.eq.s32.totalorder %s26, 0
    %p95 = por %p93, %p94
    %s97 = sadd.s32 %s96, 1
    %p100 = scmp.eq.s32.totalorder %s20, 3
    %p101 = scmp.ne.s32.totalorder %s96, %s98
    %p102 = scmp.eq.s32.totalorder %s20, 0
    %p103 = por %p101, %p102
    %p104 = scmp.ne.s32.totalorder %s96, %s98
    %p105 = scmp.eq.s32.totalorder %s25, 3
    %p106 = por %p104, %p105
    %p107 = scmp.ne.s32.totalorder %s98, %s99
    %p108 = scmp.eq.s32.totalorder %s25, 0
    %p109 = por %p107, %p108
    %p110 = scmp.ne.s32.totalorder %s98, %s99
    %p111 = scmp.eq.s32.totalorder %s26, 3
    %p112 = por %p110, %p111
    %p114 = scmp.ne.s32.totalorder %s99, %s113
    %p115 = scmp.eq.s32.totalorder %s26, 0
    %p116 = por %p114, %p115
    %s118 = sadd.s32 %s117, 1
    %p121 = scmp.eq.s32.totalorder %s20, 3
    %p122 = scmp.ne.s32.totalorder %s117, %s119
    %p123 = scmp.eq.s32.totalorder %s20, 0
    %p124 = por %p122, %p123
    %p125 = scmp.ne.s32.totalorder %s117, %s119
    %p126 = scmp.eq.s32.totalorder %s25, 3
    %p127 = por %p125, %p126
    %p128 = scmp.ne.s32.totalorder %s119, %s120
    %p129 = scmp.eq.s32.totalorder %s25, 0
    %p130 = por %p128, %p129
    %p131 = scmp.ne.s32.totalorder %s119, %s120
    %p132 = scmp.eq.s32.totalorder %s26, 3
    %p133 = por %p131, %p132
    %p135 = scmp.ne.s32.totalorder %s120, %s134
    %p136 = scmp.eq.s32.totalorder %s26, 0
    %p137 = por %p135, %p136
    %s139 = sadd.s32 %s138, 1
    %p142 = scmp.eq.s32.totalorder %s20, 3
    %p143 = scmp.ne.s32.totalorder %s138, %s140
    %p144 = scmp.eq.s32.totalorder %s20, 0
    %p145 = por %p143, %p144
    %p146 = scmp.ne.s32.totalorder %s138, %s140
    %p147 = scmp.eq.s32.totalorder %s25, 3
    %p148 = por %p146, %p147
    %p149 = scmp.ne.s32.totalorder %s140, %s141
    %p150 = scmp.eq.s32.totalorder %s25, 0
    %p151 = por %p149, %p150
    %p152 = scmp.ne.s32.totalorder %s140, %s141
    %p153 = scmp.eq.s32.totalorder %s26, 3
    %p154 = por %p152, %p153
    %p156 = scmp.ne.s32.totalorder %s141, %s155
    %p157 = scmp.eq.s32.totalorder %s26, 0
    %p158 = por %p156, %p157
    %s160 = sadd.s32 %s159, 1
    %p163 = scmp.eq.s32.totalorder %s20, 3
    %p164 = scmp.ne.s32.totalorder %s159, %s161
    %p165 = scmp.eq.s32.totalorder %s20, 0
    %p166 = por %p164, %p165
    %p167 = scmp.ne.s32.totalorder %s159, %s161
    %p168 = scmp.eq.s32.totalorder %s25, 3
    %p169 = por %p167, %p168
    %p170 = scmp.ne.s32.totalorder %s161, %s162
    %p171 = scmp.eq.s32.totalorder %s25, 0
    %p172 = por %p170, %p171
    %p173 = scmp.ne.s32.totalorder %s161, %s162
    %p174 = scmp.eq.s32.totalorder %s26, 3
    %p175 = por %p173, %p174
    %p177 = scmp.ne.s32.totalorder %s162, %s176
    %p178 = scmp.eq.s32.totalorder %s26, 0
    %p179 = por %p177, %p178
    %s181 = sadd.s32 %s180, 1
    %p184 = scmp.eq.s32.totalorder %s20, 3
    %p185 = scmp.ne.s32.totalorder %s180, %s182
    %p186 = scmp.eq.s32.totalorder %s20, 0
    %p187 = por %p185, %p186
    %p188 = scmp.ne.s32.totalorder %s180, %s182
    %p189 = scmp.eq.s32.totalorder %s25, 3
    %p190 = por %p188, %p189
    %p191 = scmp.ne.s32.totalorder %s182, %s183
    %p192 = scmp.eq.s32.totalorder %s25, 0
    %p193 = por %p191, %p192
    %p194 = scmp.ne.s32.totalorder %s182, %s183
    %p195 = scmp.eq.s32.totalorder %s26, 3
    %p196 = por %p194, %p195
    %p198 = scmp.ne.s32.totalorder %s183, %s197
    %p199 = scmp.eq.s32.totalorder %s26, 0
    %p200 = por %p198, %p199
    %s202 = sadd.s32 %s201, 1
    %p205 = scmp.eq.s32.totalorder %s20, 3
    %p206 = scmp.ne.s32.totalorder %s201, %s203
    %p207 = scmp.eq.s32.totalorder %s20, 0
    %p208 = por %p206, %p207
    %p209 = scmp.ne.s32.totalorder %s201, %s203
    %p210 = scmp.eq.s32.totalorder %s25, 3
    %p211 = por %p209, %p210
    %p212 = scmp.ne.s32.totalorder %s203, %s204
    %p213 = scmp.eq.s32.totalorder %s25, 0
    %p214 = por %p212, %p213
    %p215 = scmp.ne.s32.totalorder %s203, %s204
    %p216 = scmp.eq.s32.totalorder %s26, 3
    %p217 = por %p215, %p216
    %p219 = scmp.ne.s32.totalorder %s204, %s218
    %p220 = scmp.eq.s32.totalorder %s26, 0
    %p221 = por %p219, %p220
    %s223 = sadd.s32 %s222, 1
    %p226 = scmp.eq.s32.totalorder %s20, 3
    %p227 = scmp.ne.s32.totalorder %s222, %s224
    %p228 = scmp.eq.s32.totalorder %s20, 0
    %p229 = por %p227, %p228
    %p230 = scmp.ne.s32.totalorder %s222, %s224
    %p231 = scmp.eq.s32.totalorder %s25, 3
    %p232 = por %p230, %p231
    %p233 = scmp.ne.s32.totalorder %s224, %s225
    %p234 = scmp.eq.s32.totalorder %s25, 0
    %p235 = por %p233, %p234
    %p236 = scmp.ne.s32.totalorder %s224, %s225
    %p237 = scmp.eq.s32.totalorder %s26, 3
    %p238 = por %p236, %p237
    %p240 = scmp.ne.s32.totalorder %s225, %s239
    %p241 = scmp.eq.s32.totalorder %s26, 0
    %p242 = por %p240, %p241
    %s244 = sadd.s32 %s243, 1
    %p247 = scmp.eq.s32.totalorder %s20, 3
    %p248 = scmp.ne.s32.totalorder %s243, %s245
    %p249 = scmp.eq.s32.totalorder %s20, 0
    %p250 = por %p248, %p249
    %p251 = scmp.ne.s32.totalorder %s243, %s245
    %p252 = scmp.eq.s32.totalorder %s25, 3
    %p253 = por %p251, %p252
    %p254 = scmp.ne.s32.totalorder %s245, %s246
    %p255 = scmp.eq.s32.totalorder %s25, 0
    %p256 = por %p254, %p255
    %p257 = scmp.ne.s32.totalorder %s245, %s246
    %p258 = scmp.eq.s32.totalorder %s26, 3
    %p259 = por %p257, %p258
    %p261 = scmp.ne.s32.totalorder %s246, %s260
    %p262 = scmp.eq.s32.totalorder %s26, 0
    %p263 = por %p261, %p262
    %s265 = sadd.s32 %s264, 1
    %p268 = scmp.eq.s32.totalorder %s20, 3
    %p269 = scmp.ne.s32.totalorder %s264, %s266
    %p270 = scmp.eq.s32.totalorder %s20, 0
    %p271 = por %p269, %p270
    %p272 = scmp.ne.s32.totalorder %s264, %s266
    %p273 = scmp.eq.s32.totalorder %s25, 3
    %p274 = por %p272, %p273
    %p275 = scmp.ne.s32.totalorder %s266, %s267
    %p276 = scmp.eq.s32.totalorder %s25, 0
    %p277 = por %p275, %p276
    %p278 = scmp.ne.s32.totalorder %s266, %s267
    %p279 = scmp.eq.s32.totalorder %s26, 3
    %p280 = por %p278, %p279
    %p282 = scmp.ne.s32.totalorder %s267, %s281
    %p283 = scmp.eq.s32.totalorder %s26, 0
    %p284 = por %p282, %p283
    %s286 = sadd.s32 %s285, 1
    %p289 = scmp.eq.s32.totalorder %s20, 3
    %p290 = scmp.ne.s32.totalorder %s285, %s287
    %p291 = scmp.eq.s32.totalorder %s20, 0
    %p292 = por %p290, %p291
    %p293 = scmp.ne.s32.totalorder %s285, %s287
    %p294 = scmp.eq.s32.totalorder %s25, 3
    %p295 = por %p293, %p294
    %p296 = scmp.ne.s32.totalorder %s287, %s288
    %p297 = scmp.eq.s32.totalorder %s25, 0
    %p298 = por %p296, %p297
    %p299 = scmp.ne.s32.totalorder %s287, %s288
    %p300 = scmp.eq.s32.totalorder %s26, 3
    %p301 = por %p299, %p300
    %p303 = scmp.ne.s32.totalorder %s288, %s302
    %p304 = scmp.eq.s32.totalorder %s26, 0
    %p305 = por %p303, %p304
    %s307 = sadd.s32 %s306, 1
    %p310 = scmp.eq.s32.totalorder %s20, 3
    %p311 = scmp.ne.s32.totalorder %s306, %s308
    %p312 = scmp.eq.s32.totalorder %s20, 0
    %p313 = por %p311, %p312
    %p314 = scmp.ne.s32.totalorder %s306, %s308
    %p315 = scmp.eq.s32.totalorder %s25, 3
    %p316 = por %p314, %p315
    %p317 = scmp.ne.s32.totalorder %s308, %s309
    %p318 = scmp.eq.s32.totalorder %s25, 0
    %p319 = por %p317, %p318
    %p320 = scmp.ne.s32.totalorder %s308, %s309
    %p321 = scmp.eq.s32.totalorder %s26, 3
    %p322 = por %p320, %p321
    %p324 = scmp.ne.s32.totalorder %s309, %s323
    %p325 = scmp.eq.s32.totalorder %s26, 0
    %p326 = por %p324, %p325
    %p327 = scmp.le.s32.totalorder 1, %s20
    %p328 = scmp.lt.s32.totalorder %s20, 5
    %p329 = pnand %p327, %p328
    %p330 = pneg %p329
    // Predicated region
    $region9: #{bl_generator_forward.1} parent=5 // pred_check
      _
    $region10: #{bl_generator_forward.1} parent=5 // pred_check_branch
      %332 = sbr.rel (%p329) target = $region12
    $region11: #{bl_generator_forward.1} parent=5 // pred_region
      %s333 = ssub.s32 %s20, 1
      // Predicated region
      $region13: #{bl_generator_forward.1} parent=11 // pred_check
        %p334 = pneg %p41
      $region14: #{bl_generator_forward.1} parent=11 // pred_check_branch
        %336 = sbr.rel (%p334) target = $region16
      $region15: #{bl_generator_forward.1} parent=11 // pred_region
        _
      $region16: #{bl_generator_forward.1} parent=11 // pred_fallthru
        _
      // Predicated region
      $region17: #{bl_generator_forward.1} parent=11 // pred_check
        %p337 = pneg %p88
      $region18: #{bl_generator_forward.1} parent=11 // pred_check_branch
        %339 = sbr.rel (%p337) target = $region20
      $region19: #{bl_generator_forward.1} parent=11 // pred_region
        _
      $region20: #{bl_generator_forward.1} parent=11 // pred_fallthru
        _
      // Predicated region
      $region21: #{bl_generator_forward.1} parent=11 // pred_check
        %p340 = pneg %p109
      $region22: #{bl_generator_forward.1} parent=11 // pred_check_branch
        %342 = sbr.rel (%p340) target = $region24
      $region23: #{bl_generator_forward.1} parent=11 // pred_region
        _
      $region24: #{bl_generator_forward.1} parent=11 // pred_fallthru
        _
      // Predicated region
      $region25: #{bl_generator_forward.1} parent=11 // pred_check
        %p343 = pneg %p130
      $region26: #{bl_generator_forward.1} parent=11 // pred_check_branch
        %345 = sbr.rel (%p343) target = $region28
      $region27: #{bl_generator_forward.1} parent=11 // pred_region
        _
      $region28: #{bl_generator_forward.1} parent=11 // pred_fallthru
        _
      // Predicated region
      $region29: #{bl_generator_forward.1} parent=11 // pred_check
        %p346 = pneg %p151
      $region30: #{bl_generator_forward.1} parent=11 // pred_check_branch
        %348 = sbr.rel (%p346) target = $region32
      $region31: #{bl_generator_forward.1} parent=11 // pred_region
        _
      $region32: #{bl_generator_forward.1} parent=11 // pred_fallthru
        _
      // Predicated region
      $region33: #{bl_generator_forward.1} parent=11 // pred_check
        %p349 = pneg %p172
      $region34: #{bl_generator_forward.1} parent=11 // pred_check_branch
        %351 = sbr.rel (%p349) target = $region36
      $region35: #{bl_generator_forward.1} parent=11 // pred_region
        _
      $region36: #{bl_generator_forward.1} parent=11 // pred_fallthru
        _
      // Predicated region
      $region37: #{bl_generator_forward.1} parent=11 // pred_check
        %p352 = pneg %p193
      $region38: #{bl_generator_forward.1} parent=11 // pred_check_branch
        %354 = sbr.rel (%p352) target = $region40
      $region39: #{bl_generator_forward.1} parent=11 // pred_region
        _
      $region40: #{bl_generator_forward.1} parent=11 // pred_fallthru
        _
      // Predicated region
      $region41: #{bl_generator_forward.1} parent=11 // pred_check
        %p355 = pneg %p214
      $region42: #{bl_generator_forward.1} parent=11 // pred_check_branch
        %357 = sbr.rel (%p355) target = $region44
      $region43: #{bl_generator_forward.1} parent=11 // pred_region
        _
      $region44: #{bl_generator_forward.1} parent=11 // pred_fallthru
        _
      // Predicated region
      $region45: #{bl_generator_forward.1} parent=11 // pred_check
        %p358 = pneg %p235
      $region46: #{bl_generator_forward.1} parent=11 // pred_check_branch
        %360 = sbr.rel (%p358) target = $region48
      $region47: #{bl_generator_forward.1} parent=11 // pred_region
        _
      $region48: #{bl_generator_forward.1} parent=11 // pred_fallthru
        _
      // Predicated region
      $region49: #{bl_generator_forward.1} parent=11 // pred_check
        %p361 = pneg %p256
      $region50: #{bl_generator_forward.1} parent=11 // pred_check_branch
        %363 = sbr.rel (%p361) target = $region52
      $region51: #{bl_generator_forward.1} parent=11 // pred_region
        _
      $region52: #{bl_generator_forward.1} parent=11 // pred_fallthru
        _
      // Predicated region
      $region53: #{bl_generator_forward.1} parent=11 // pred_check
        %p364 = pneg %p277
      $region54: #{bl_generator_forward.1} parent=11 // pred_check_branch
        %366 = sbr.rel (%p364) target = $region56
      $region55: #{bl_generator_forward.1} parent=11 // pred_region
        _
      $region56: #{bl_generator_forward.1} parent=11 // pred_fallthru
        _
    $region12: #{bl_generator_forward.1} parent=5 // pred_fallthru
      _
    %p367 = scmp.lt.s32.totalorder %s20, 4
    // Predicated region
    $region57: #{bl_generator_forward.1} parent=5 // pred_check
      %p368 = pneg %p367
    $region58: #{bl_generator_forward.1} parent=5 // pred_check_branch
      %370 = sbr.rel (%p368) target = $region60
    $region59: #{bl_generator_forward.1} parent=5 // pred_region
      // Predicated region
      $region61: #{bl_generator_forward.1} parent=59 // pred_check
        %p371 = pneg %p61
      $region62: #{bl_generator_forward.1} parent=59 // pred_check_branch
        %373 = sbr.rel (%p371) target = $region64
      $region63: #{bl_generator_forward.1} parent=59 // pred_region
        %p374 = scmp.lt.s32.totalorder %s20, 3
        %s375 = scalar_select %p374, %s20, 3
        %s376 = smul.addr %s375, 2
        %s377 = smul.addr %s376, 8
        %s378 = scalar_lea.vmem %s1, %s377
      $region64: #{bl_generator_forward.1} parent=59 // pred_fallthru
        _
    $region60: #{bl_generator_forward.1} parent=5 // pred_fallthru
      _
    %p379 = scmp.le.s32.totalorder 1, %s20
    %p380 = scmp.lt.s32.totalorder %s20, 5
    %p381 = pnand %p379, %p380
    %p382 = pneg %p381
    // Predicated region
    $region65: #{bl_generator_forward.1} parent=5 // pred_check
      _
    $region66: #{bl_generator_forward.1} parent=5 // pred_check_branch
      %384 = sbr.rel (%p381) target = $region68
    $region67: #{bl_generator_forward.1} parent=5 // pred_region
      %s385 = ssub.s32 %s20, 1
      %p386 = pneg %p41
      %p387 = pneg %p38
      %p388 = scmp.lt.s32.totalorder %s25, 3
      %s389 = scalar_select %p388, %s25, 3
      %s390 = smul.addr %s389, 2
      %s391 = smul.addr %s390, 8
      %s392 = scalar_lea.vmem %s1, %s391
      %p393 = pneg %p67
      %p394 = pneg %p64
      %p395 = pneg %p88
      %p396 = pneg %p85
      %p397 = pneg %p109
      %p398 = pneg %p106
      %p399 = pneg %p130
      %p400 = pneg %p127
      %p401 = pneg %p151
      %p402 = pneg %p148
      %p403 = pneg %p172
      %p404 = pneg %p169
      %p405 = pneg %p193
      %p406 = pneg %p190
      %p407 = pneg %p214
      %p408 = pneg %p211
      %p409 = pneg %p235
      %p410 = pneg %p232
      %p411 = pneg %p256
      %p412 = pneg %p253
      %p413 = pneg %p277
      %p414 = pneg %p274
      %p415 = pneg %p298
      %p416 = pneg %p295
      %p417 = pneg %p319
      %p418 = pneg %p316
      %p419 = scmp.lt.s32.totalorder %s25, 3
      %s420 = scalar_select %p419, %s25, 3
      %s421 = smul.addr %s420, 2
      %s422 = smul.addr %s421, 8
      %s423 = scalar_lea.vmem %s1, %s422
      %v425 = vld [vmem:[%s2] sm:$0xff]
      %v426 = vld [vmem:[%s2 + $0x8] sm:$0xff]
      %v427 = vld [vmem:[%s2 + $0x10] sm:$0xff]
      %v428 = vld [vmem:[%s2 + $0x18] sm:$0xff]
      %v429 = vld [vmem:[%s2 + $0x20] sm:$0xff]
      %v430 = vld [vmem:[%s2 + $0x28] sm:$0xff]
      %p431 = scmp.eq.s32.totalorder %s25, 0
      // Predicated region
      $region69: #{bl_generator_forward.1} parent=67 // pred_check
        %p432 = pneg %p431
      $region70: #{bl_generator_forward.1} parent=67 // pred_check_branch
        %434 = sbr.rel (%p432) target = $region72
      $region71: #{bl_generator_forward.1} parent=67 // pred_region
        %v435 = vld [vmem:[%s0] sm:$0xf]
        %vm436 = vcmask 392192
        %v438 = vsel %vm436, %v435, 0
        %440 = vmatprep.subr.mxu0 0.0
        %441 = vmatpush1.msra.mxu0 %v425
        %442 = vmatprep.subr.mxu0 0.0
        %443 = vmatpush1.msra.mxu0 %v426
        %444 = vmatprep.subr.mxu0 0.0
        %445 = vmatpush1.msra.mxu0 %v427
        %446 = vmatprep.subr.mxu0 0.0
        %447 = vmatpush1.msra.mxu0 %v428
        %448 = vmatprep.subr.mxu0 0.0
        %449 = vmatpush1.msra.mxu0 %v429
        %450 = vmatprep.subr.mxu0 0.0
        %451 = vmatpush1.msra.mxu0 %v430
        %452 = vmatprep.subr.mxu0 0.0
        %453 = vmatpush1.msra.mxu0 0.0
        %454 = vmatprep.subr.mxu0 0.0
        %455 = vmatpush1.msra.mxu0 0.0
        %456 = vmatprep.subr.mxu0 0.0
        %457 = vmatpush1.msra.mxu0 0.0
        %458 = vmatprep.subr.mxu0 0.0
        %459 = vmatpush1.msra.mxu0 0.0
        %460 = vmatprep.subr.mxu0 0.0
        %461 = vmatpush1.msra.mxu0 0.0
        %462 = vmatprep.subr.mxu0 0.0
        %463 = vmatpush1.msra.mxu0 0.0
        %464 = vmatprep.subr.mxu0 0.0
        %465 = vmatpush1.msra.mxu0 0.0
        %466 = vmatprep.subr.mxu0 0.0
        %467 = vmatpush1.msra.mxu0 0.0
        %468 = vmatprep.subr.mxu0 0.0
        %469 = vmatpush1.msra.mxu0 0.0
        %470 = vmatprep.subr.mxu0 0.0
        %471 = vmatpush1.msra.mxu0 0.0
        %472 = vmatprep.subr.mxu0 0.0
        %473 = vmatpush1.msra.mxu0 0.0
        %474 = vmatprep.subr.mxu0 0.0
        %475 = vmatpush1.msra.mxu0 0.0
        %476 = vmatprep.subr.mxu0 0.0
        %477 = vmatpush1.msra.mxu0 0.0
        %478 = vmatprep.subr.mxu0 0.0
        %479 = vmatpush1.msra.mxu0 0.0
        %480 = vmatprep.subr.mxu0 0.0
        %481 = vmatpush1.msra.mxu0 0.0
        %482 = vmatprep.subr.mxu0 0.0
        %483 = vmatpush1.msra.mxu0 0.0
        %484 = vmatprep.subr.mxu0 0.0
        %485 = vmatpush1.msra.mxu0 0.0
        %486 = vmatprep.subr.mxu0 0.0
        %487 = vmatpush1.msra.mxu0 0.0
        %488 = vmatprep.subr.mxu0 0.0
        %489 = vmatpush1.msra.mxu0 0.0
        %490 = vmatprep.subr.mxu0 0.0
        %491 = vmatpush1.msra.mxu0 0.0
        %492 = vmatprep.subr.mxu0 0.0
        %493 = vmatpush1.msra.mxu0 0.0
        %494 = vmatprep.subr.mxu0 0.0
        %495 = vmatpush1.msra.mxu0 0.0
        %496 = vmatprep.subr.mxu0 0.0
        %497 = vmatpush1.msra.mxu0 0.0
        %498 = vmatprep.subr.mxu0 0.0
        %499 = vmatpush1.msra.mxu0 0.0
        %500 = vmatprep.subr.mxu0 0.0
        %501 = vmatpush1.msra.mxu0 0.0
        %502 = vmatprep.subr.mxu0 0.0
        %503 = vmatpush1.msra.mxu0 0.0
        %504 = vmatprep.mubr.f32.mxu0 0.0
        %505 = vmatmul.mubr.f32.gmra.mrb[0].mxu0 %v438
        %v506 = vpop.f32.mrb[0].mxu0
        %v507 = vadd.f32 0.0, %v506
        %v508 = vpop.f32.mrb[0].mxu0
        %509 = vdwg.mxu0
        %v510 = vmul.f32 %v507, %v507
        %v511 = vld [vmem:[%s3] sm:$0xff]
        %v512 = vld [vmem:[%s3 + $0x8] sm:$0xff]
        %v513 = vld [vmem:[%s3 + $0x10] sm:$0xff]
        %v514 = vld [vmem:[%s3 + $0x18] sm:$0xff]
        %v515 = vld [vmem:[%s3 + $0x20] sm:$0xff]
        %v516 = vld [vmem:[%s3 + $0x28] sm:$0x1f]
        %vm517 = vcmask 367616
        %v519 = vsel %vm517, %v510, 0
        %vm521 = vcmask 1044480
        %v523 = vsel %vm521, %v516, 0
        %525 = vmatprep.subr.mxu0 0.0
        %526 = vmatpush1.msra.mxu0 %v511
        %527 = vmatprep.subr.mxu0 0.0
        %528 = vmatpush1.msra.mxu0 %v512
        %529 = vmatprep.subr.mxu0 0.0
        %530 = vmatpush1.msra.mxu0 %v513
        %531 = vmatprep.subr.mxu0 0.0
        %532 = vmatpush1.msra.mxu0 %v514
        %533 = vmatprep.subr.mxu0 0.0
        %534 = vmatpush1.msra.mxu0 %v515
        %535 = vmatprep.subr.mxu0 0.0
        %536 = vmatpush1.msra.mxu0 %v523
        %537 = vmatprep.subr.mxu0 0.0
        %538 = vmatpush1.msra.mxu0 0.0
        %539 = vmatprep.subr.mxu0 0.0
        %540 = vmatpush1.msra.mxu0 0.0
        %541 = vmatprep.subr.mxu0 0.0
        %542 = vmatpush1.msra.mxu0 0.0
        %543 = vmatprep.subr.mxu0 0.0
        %544 = vmatpush1.msra.mxu0 0.0
        %545 = vmatprep.subr.mxu0 0.0
        %546 = vmatpush1.msra.mxu0 0.0
        %547 = vmatprep.subr.mxu0 0.0
        %548 = vmatpush1.msra.mxu0 0.0
        %549 = vmatprep.subr.mxu0 0.0
        %550 = vmatpush1.msra.mxu0 0.0
        %551 = vmatprep.subr.mxu0 0.0
        %552 = vmatpush1.msra.mxu0 0.0
        %553 = vmatprep.subr.mxu0 0.0
        %554 = vmatpush1.msra.mxu0 0.0
        %555 = vmatprep.subr.mxu0 0.0
        %556 = vmatpush1.msra.mxu0 0.0
        %557 = vmatprep.subr.mxu0 0.0
        %558 = vmatpush1.msra.mxu0 0.0
        %559 = vmatprep.subr.mxu0 0.0
        %560 = vmatpush1.msra.mxu0 0.0
        %561 = vmatprep.subr.mxu0 0.0
        %562 = vmatpush1.msra.mxu0 0.0
        %563 = vmatprep.subr.mxu0 0.0
        %564 = vmatpush1.msra.mxu0 0.0
        %565 = vmatprep.subr.mxu0 0.0
        %566 = vmatpush1.msra.mxu0 0.0
        %567 = vmatprep.subr.mxu0 0.0
        %568 = vmatpush1.msra.mxu0 0.0
        %569 = vmatprep.subr.mxu0 0.0
        %570 = vmatpush1.msra.mxu0 0.0
        %571 = vmatprep.subr.mxu0 0.0
        %572 = vmatpush1.msra.mxu0 0.0
        %573 = vmatprep.subr.mxu0 0.0
        %574 = vmatpush1.msra.mxu0 0.0
        %575 = vmatprep.subr.mxu0 0.0
        %576 = vmatpush1.msra.mxu0 0.0
        %577 = vmatprep.subr.mxu0 0.0
        %578 = vmatpush1.msra.mxu0 0.0
        %579 = vmatprep.subr.mxu0 0.0
        %580 = vmatpush1.msra.mxu0 0.0
        %581 = vmatprep.subr.mxu0 0.0
        %582 = vmatpush1.msra.mxu0 0.0
        %583 = vmatprep.subr.mxu0 0.0
        %584 = vmatpush1.msra.mxu0 0.0
        %585 = vmatprep.subr.mxu0 0.0
        %586 = vmatpush1.msra.mxu0 0.0
        %587 = vmatprep.subr.mxu0 0.0
        %588 = vmatpush1.msra.mxu0 0.0
        %589 = vmatprep.mubr.f32.mxu0 0.0
        %590 = vmatmul.mubr.f32.gmra.mrb[0].mxu0 %v519
        %v591 = vpop.f32.mrb[0].mxu0
        %v592 = vadd.f32 0.0, %v591
        %v593 = vpop.f32.mrb[0].mxu0
        %594 = vdwg.mxu0
        %v595 = vrsqrt.pop %v592
        %v596 = vmul.f32 %v592, %v595
        %vm597 = vcmp.eq.f32.partialorder %v592, inf
        %v598 = vsel %vm597, %v592, %v596
        %vm599 = vcmp.eq.f32.partialorder %v592, 0.0
        %v600 = vand.u32 %v592, 2147483648
        %v601 = vsel %vm599, %v600, %v598
        %v602 = vpack.c.bf16 %v435, %v435
        %v603 = vld [vmem:[%s6] sm:$0xff]
        %v604 = vld [vmem:[%s6 + $0x8] sm:$0xff]
        %v605 = vld [vmem:[%s6 + $0x10] sm:$0xff]
        %v606 = vld [vmem:[%s6 + $0x18] sm:$0xff]
        %v607 = vld [vmem:[%s6 + $0x20] sm:$0xff]
        %v608 = vld [vmem:[%s6 + $0x28] sm:$0xff]
        %v609 = vld [vmem:[%s6 + $0x30] sm:$0xff]
        %v610 = vld [vmem:[%s6 + $0x38] sm:$0xff]
        %v611 = vld [vmem:[%s6 + $0x40] sm:$0xff]
        %v612 = vld [vmem:[%s6 + $0x48] sm:$0xff]
        %v613 = vld [vmem:[%s6 + $0x50] sm:$0xff]
        %v614 = vld [vmem:[%s6 + $0x58] sm:$0xff]
        %v615 = vpack.c.bf16 %v601, %v601
        %v616 = vld [vmem:[%s7] sm:$0xff]
        %v617 = vld [vmem:[%s7 + $0x8] sm:$0xff]
        %v620 = vunpack.c.l.b16 %v616
        %v621 = vunpack.c.h.b16 %v616
        %v622 = vunpack.c.l.b16 %v617
        %v623 = vunpack.c.h.b16 %v617
        %v624 = vpack.c.b16 %v622, %v620
        %v625 = vpack.c.b16 %v623, %v621
        %vm626 = vcmask 121856
        %v628 = vsel %vm626, %v615, 0
        %vm630 = vcmask 1046528
        %vm631 = vcmask 1047552
        %v632 = vsel %vm630, 4294967295, 65535
        %v633 = vsel %vm631, %v632, 0
        %v635 = vand.u32 %v624, %v633
        %v638 = vand.u32 %v625, %v633
        %640 = vmatprep.subr.bf16.mxu0 %v638
        %641 = vmatpush1.bf16.msra.mxu0 %v635
        %642 = vmatprep.subr.bf16.mxu0 0
        %643 = vmatpush1.bf16.msra.mxu0 0
        %644 = vmatprep.subr.bf16.mxu0 0
        %645 = vmatpush1.bf16.msra.mxu0 0
        %646 = vmatprep.subr.bf16.mxu0 0
        %647 = vmatpush1.bf16.msra.mxu0 0
        %648 = vmatprep.subr.bf16.mxu0 0
        %649 = vmatpush1.bf16.msra.mxu0 0
        %650 = vmatprep.subr.bf16.mxu0 0
        %651 = vmatpush1.bf16.msra.mxu0 0
        %652 = vmatprep.subr.bf16.mxu0 0
        %653 = vmatpush1.bf16.msra.mxu0 0
        %654 = vmatprep.subr.bf16.mxu0 0
        %655 = vmatpush1.bf16.msra.mxu0 0
        %656 = vmatprep.subr.bf16.mxu0 0
        %657 = vmatpush1.bf16.msra.mxu0 0
        %658 = vmatprep.subr.bf16.mxu0 0
        %659 = vmatpush1.bf16.msra.mxu0 0
        %660 = vmatprep.subr.bf16.mxu0 0
        %661 = vmatpush1.bf16.msra.mxu0 0
        %662 = vmatprep.subr.bf16.mxu0 0
        %663 = vmatpush1.bf16.msra.mxu0 0
        %664 = vmatprep.subr.bf16.mxu0 0
        %665 = vmatpush1.bf16.msra.mxu0 0
        %666 = vmatprep.subr.bf16.mxu0 0
        %667 = vmatpush1.bf16.msra.mxu0 0
        %668 = vmatprep.subr.bf16.mxu0 0
        %669 = vmatpush1.bf16.msra.mxu0 0
        %670 = vmatprep.subr.bf16.mxu0 0
        %671 = vmatpush1.bf16.msra.mxu0 0
        %672 = vmatprep.mubr.bf16.mxu0 0
        %673 = vmatmul.mubr.bf16.gmra.mrb[0].mxu0 %v628
        %v674 = vpop.f32.mrb[0].mxu0
        %v675 = vadd.f32 0.0, %v674
        %v676 = vpop.f32.mrb[0].mxu0
        %v677 = vadd.f32 0.0, %v676
        %v678 = vpop.f32.mrb[0].mxu0
        %v679 = vpop.f32.mrb[0].mxu0
        %680 = vdwg.mxu0
        %v693 = vunpack.c.l.b16 %v603
        %v694 = vunpack.c.h.b16 %v603
        %v695 = vunpack.c.l.b16 %v604
        %v696 = vunpack.c.h.b16 %v604
        %v697 = vunpack.c.l.b16 %v605
        %v698 = vunpack.c.h.b16 %v605
        %v699 = vunpack.c.l.b16 %v606
        %v700 = vunpack.c.h.b16 %v606
        %v701 = vunpack.c.l.b16 %v607
        %v702 = vunpack.c.h.b16 %v607
        %v703 = vunpack.c.l.b16 %v608
        %v704 = vunpack.c.h.b16 %v608
        %v705 = vunpack.c.l.b16 %v609
        %v706 = vunpack.c.h.b16 %v609
        %v707 = vunpack.c.l.b16 %v610
        %v708 = vunpack.c.h.b16 %v610
        %v709 = vunpack.c.l.b16 %v611
        %v710 = vunpack.c.h.b16 %v611
        %v711 = vunpack.c.l.b16 %v612
        %v712 = vunpack.c.h.b16 %v612
        %v713 = vunpack.c.l.b16 %v613
        %v714 = vunpack.c.h.b16 %v613
        %v715 = vunpack.c.l.b16 %v614
        %v716 = vunpack.c.h.b16 %v614
        %v717 = vpack.c.b16 %v695, %v693
        %v718 = vpack.c.b16 %v696, %v694
        %v719 = vpack.c.b16 %v699, %v697
        %v720 = vpack.c.b16 %v700, %v698
        %v721 = vpack.c.b16 %v703, %v701
        %v722 = vpack.c.b16 %v704, %v702
        %v723 = vpack.c.b16 %v707, %v705
        %v724 = vpack.c.b16 %v708, %v706
        %v725 = vpack.c.b16 %v711, %v709
        %v726 = vpack.c.b16 %v712, %v710
        %v727 = vpack.c.b16 %v715, %v713
        %v728 = vpack.c.b16 %v716, %v714
        %vm741 = vcmask 785408
        %v743 = vsel %vm741, %v602, 0
        %745 = vmatprep.subr.bf16.mxu0 %v718
        %746 = vmatpush1.bf16.msra.mxu0 %v717
        %747 = vmatprep.subr.bf16.mxu0 %v720
        %748 = vmatpush1.bf16.msra.mxu0 %v719
        %749 = vmatprep.subr.bf16.mxu0 %v722
        %750 = vmatpush1.bf16.msra.mxu0 %v721
        %751 = vmatprep.subr.bf16.mxu0 %v724
        %752 = vmatpush1.bf16.msra.mxu0 %v723
        %753 = vmatprep.subr.bf16.mxu0 %v726
        %754 = vmatpush1.bf16.msra.mxu0 %v725
        %755 = vmatprep.subr.bf16.mxu0 %v728
        %756 = vmatpush1.bf16.msra.mxu0 %v727
        %757 = vmatprep.subr.bf16.mxu0 0
        %758 = vmatpush1.bf16.msra.mxu0 0
        %759 = vmatprep.subr.bf16.mxu0 0
        %760 = vmatpush1.bf16.msra.mxu0 0
        %761 = vmatprep.subr.bf16.mxu0 0
        %762 = vmatpush1.bf16.msra.mxu0 0
        %763 = vmatprep.subr.bf16.mxu0 0
        %764 = vmatpush1.bf16.msra.mxu0 0
        %765 = vmatprep.subr.bf16.mxu0 0
        %766 = vmatpush1.bf16.msra.mxu0 0
        %767 = vmatprep.subr.bf16.mxu0 0
        %768 = vmatpush1.bf16.msra.mxu0 0
        %769 = vmatprep.subr.bf16.mxu0 0
        %770 = vmatpush1.bf16.msra.mxu0 0
        %771 = vmatprep.subr.bf16.mxu0 0
        %772 = vmatpush1.bf16.msra.mxu0 0
        %773 = vmatprep.subr.bf16.mxu0 0
        %774 = vmatpush1.bf16.msra.mxu0 0
        %775 = vmatprep.subr.bf16.mxu0 0
        %776 = vmatpush1.bf16.msra.mxu0 0
        %777 = vmatprep.mubr.bf16.mxu0 0
        %778 = vmatmul.mubr.bf16.gmra.mrb[0].mxu0 %v743
        %v779 = vpop.f32.mrb[0].mxu0
        %v780 = vadd.f32 %v675, %v779
        %v781 = vpop.f32.mrb[0].mxu0
        %v782 = vadd.f32 %v677, %v781
        %v783 = vpop.f32.mrb[0].mxu0
        %v784 = vpop.f32.mrb[0].mxu0
        %785 = vdwg.mxu0
        %v786 = vld [vmem:[%s8] ss:$8 sm:$0x3]
        %v788 = vlaneseq
        %v789 = vshrl.u32 %v788, 7
        %v790 = vsub.s32 0, %v789
        %v791 = vrot.slane %v786, %v790
        %v792 = vlaneseq
        %v793 = vshrl.u32 %v792, 7
        %v794 = vsub.s32 1, %v793
        %v795 = vrot.slane %v786, %v794
        %v798 = vadd.f32 %v780, %v791
        %v799 = vadd.f32 %v782, %v795
        %s800 = scalar_lea.vmem %s8, 1
        %v801 = vld [vmem:[%s800] ss:$8 sm:$0x3]
        %s802 = scalar_lea.vmem %s8, 2
        %v803 = vld [vmem:[%s802] ss:$8 sm:$0x3]
        %vm804 = vcmask 1043456
        %v805 = vsel %vm804, %v798, 0.0
        %v806 = vrot.slane %v805, 4
        %v807 = vadd.f32 %v805, %v806
        %v808 = vrot.slane %v807, 2
        %v809 = vadd.f32 %v807, %v808
        %v810 = vrot.slane %v809, 1
        %v811 = vadd.f32 %v809, %v810
        %v812 = vsel %vm804, %v799, 0.0
        %v813 = vrot.slane %v812, 4
        %v814 = vadd.f32 %v812, %v813
        %v815 = vrot.slane %v814, 2
        %v816 = vadd.f32 %v814, %v815
        %v817 = vrot.slane %v816, 1
        %v818 = vadd.f32 %v816, %v817
        %v819 = vrcp.pop 4.0
        %v820 = vmul.f32 %v811, %v819
        %v821 = vmul.f32 %v818, %v819
        %v822 = vsub.f32 %v798, %v820
        %v823 = vsub.f32 %v799, %v821
        %v824 = vmul.f32 %v822, %v822
        %v825 = vmul.f32 %v823, %v823
        %v826 = vsel %vm804, %v824, 0.0
        %v827 = vrot.slane %v826, 4
        %v828 = vadd.f32 %v826, %v827
        %v829 = vrot.slane %v828, 2
        %v830 = vadd.f32 %v828, %v829
        %v831 = vrot.slane %v830, 1
        %v832 = vadd.f32 %v830, %v831
        %v833 = vsel %vm804, %v825, 0.0
        %v834 = vrot.slane %v833, 4
        %v835 = vadd.f32 %v833, %v834
        %v836 = vrot.slane %v835, 2
        %v837 = vadd.f32 %v835, %v836
        %v838 = vrot.slane %v837, 1
        %v839 = vadd.f32 %v837, %v838
        %v840 = vmul.f32 %v832, %v819
        %v841 = vmul.f32 %v839, %v819
        %v842 = vadd.f32 %v840, 1e-05
        %v843 = vadd.f32 %v841, 1e-05
        %v844 = vrsqrt.pop %v842
        %v845 = vrsqrt.pop %v843
        %v846 = vmul.f32 %v822, %v844
        %v847 = vmul.f32 %v823, %v845
        %v849 = vlaneseq
        %v850 = vshrl.u32 %v849, 7
        %v851 = vsub.s32 0, %v850
        %v852 = vrot.slane %v801, %v851
        %v853 = vlaneseq
        %v854 = vshrl.u32 %v853, 7
        %v855 = vsub.s32 1, %v854
        %v856 = vrot.slane %v801, %v855
        %v859 = vmul.f32 %v846, %v852
        %v860 = vmul.f32 %v847, %v856
        %v862 = vlaneseq
        %v863 = vshrl.u32 %v862, 7
        %v864 = vsub.s32 0, %v863
        %v865 = vrot.slane %v803, %v864
        %v866 = vlaneseq
        %v867 = vshrl.u32 %v866, 7
        %v868 = vsub.s32 1, %v867
        %v869 = vrot.slane %v803, %v868
        %v872 = vadd.f32 %v859, %v865
        %v873 = vadd.f32 %v860, %v869
        %vm874 = vcmp.gt.f32.partialorder %v872, 0.0
        %vm875 = vcmp.gt.f32.partialorder %v873, 0.0
        %v876 = vmul.f32 %v872, 0.01
        %v877 = vmul.f32 %v873, 0.01
        %v878 = vsel %vm874, %v872, %v876
        %v879 = vsel %vm875, %v873, %v877
        %v880 = vpack.c.bf16 %v878, %v878
        %v881 = vpack.c.bf16 %v879, %v879
        %v882 = vld [vmem:[%s9] sm:$0xff]
        %v883 = vld [vmem:[%s9 + $0x8] sm:$0xff]
        %v884 = vld [vmem:[%s9 + $0x10] sm:$0xff]
        %v885 = vld [vmem:[%s9 + $0x18] sm:$0xff]
        %v886 = vld [vmem:[%s9 + $0x20] sm:$0xff]
        %v887 = vld [vmem:[%s9 + $0x28] sm:$0xff]
        %v888 = vld [vmem:[%s9 + $0x30] sm:$0xff]
        %v889 = vld [vmem:[%s9 + $0x38] sm:$0xff]
        %v890 = vld [vmem:[%s9 + $0x40] sm:$0xff]
        %v891 = vld [vmem:[%s9 + $0x48] sm:$0xff]
        %v892 = vld [vmem:[%s9 + $0x50] sm:$0xff]
        %v893 = vld [vmem:[%s9 + $0x58] sm:$0xff]
        %v894 = vld [vmem:[%s9 + $0x60] sm:$0xff]
        %v895 = vld [vmem:[%s9 + $0x68] sm:$0xff]
        %v896 = vld [vmem:[%s9 + $0x70] sm:$0xff]
        %v897 = vld [vmem:[%s9 + $0x78] sm:$0xff]
        %v898 = vld [vmem:[%s9 + $0x80] sm:$0xff]
        %v899 = vld [vmem:[%s9 + $0x88] sm:$0xff]
        %v900 = vld [vmem:[%s9 + $0x90] sm:$0xff]
        %v901 = vld [vmem:[%s9 + $0x98] sm:$0xff]
        %v902 = vld [vmem:[%s9 + $0xa0] sm:$0xff]
        %v903 = vld [vmem:[%s9 + $0xa8] sm:$0xff]
        %v904 = vld [vmem:[%s9 + $0xb0] sm:$0xff]
        %v905 = vld [vmem:[%s9 + $0xb8] sm:$0xff]
        %v906 = vld [vmem:[%s9 + $0xc0] sm:$0xff]
        %v907 = vld [vmem:[%s9 + $0xc8] sm:$0xff]
        %v908 = vld [vmem:[%s9 + $0xd0] sm:$0xff]
        %v909 = vld [vmem:[%s9 + $0xd8] sm:$0xff]
        %v910 = vld [vmem:[%s9 + $0xe0] sm:$0xff]
        %v911 = vld [vmem:[%s9 + $0xe8] sm:$0xff]
        %v912 = vld [vmem:[%s9 + $0xf0] sm:$0xff]
        %v913 = vld [vmem:[%s9 + $0xf8] sm:$0xff]
        %s914 = scalar_lea.vmem %s8, 3
        %v915 = vld [vmem:[%s914] ss:$8 sm:$0x3]
        %v917 = vlaneseq
        %v918 = vshrl.u32 %v917, 7
        %v919 = vsub.s32 0, %v918
        %v920 = vrot.slane %v915, %v919
        %v921 = vlaneseq
        %v922 = vshrl.u32 %v921, 7
        %v923 = vsub.s32 1, %v922
        %v924 = vrot.slane %v915, %v923
        %v959 = vunpack.c.l.b16 %v882
        %v960 = vunpack.c.h.b16 %v882
        %v961 = vunpack.c.l.b16 %v883
        %v962 = vunpack.c.h.b16 %v883
        %v963 = vunpack.c.l.b16 %v884
        %v964 = vunpack.c.h.b16 %v884
        %v965 = vunpack.c.l.b16 %v885
        %v966 = vunpack.c.h.b16 %v885
        %v967 = vunpack.c.l.b16 %v886
        %v968 = vunpack.c.h.b16 %v886
        %v969 = vunpack.c.l.b16 %v887
        %v970 = vunpack.c.h.b16 %v887
        %v971 = vunpack.c.l.b16 %v888
        %v972 = vunpack.c.h.b16 %v888
        %v973 = vunpack.c.l.b16 %v889
        %v974 = vunpack.c.h.b16 %v889
        %v975 = vunpack.c.l.b16 %v890
        %v976 = vunpack.c.h.b16 %v890
        %v977 = vunpack.c.l.b16 %v891
        %v978 = vunpack.c.h.b16 %v891
        %v979 = vunpack.c.l.b16 %v892
        %v980 = vunpack.c.h.b16 %v892
        %v981 = vunpack.c.l.b16 %v893
        %v982 = vunpack.c.h.b16 %v893
        %v983 = vunpack.c.l.b16 %v894
        %v984 = vunpack.c.h.b16 %v894
        %v985 = vunpack.c.l.b16 %v895
        %v986 = vunpack.c.h.b16 %v895
        %v987 = vunpack.c.l.b16 %v896
        %v988 = vunpack.c.h.b16 %v896
        %v989 = vunpack.c.l.b16 %v897
        %v990 = vunpack.c.h.b16 %v897
        %v991 = vunpack.c.l.b16 %v898
        %v992 = vunpack.c.h.b16 %v898
        %v993 = vunpack.c.l.b16 %v899
        %v994 = vunpack.c.h.b16 %v899
        %v995 = vunpack.c.l.b16 %v900
        %v996 = vunpack.c.h.b16 %v900
        %v997 = vunpack.c.l.b16 %v901
        %v998 = vunpack.c.h.b16 %v901
        %v999 = vunpack.c.l.b16 %v902
        %v1000 = vunpack.c.h.b16 %v902
        %v1001 = vunpack.c.l.b16 %v903
        %v1002 = vunpack.c.h.b16 %v903
        %v1003 = vunpack.c.l.b16 %v904
        %v1004 = vunpack.c.h.b16 %v904
        %v1005 = vunpack.c.l.b16 %v905
        %v1006 = vunpack.c.h.b16 %v905
        %v1007 = vunpack.c.l.b16 %v906
        %v1008 = vunpack.c.h.b16 %v906
        %v1009 = vunpack.c.l.b16 %v907
        %v1010 = vunpack.c.h.b16 %v907
        %v1011 = vunpack.c.l.b16 %v908
        %v1012 = vunpack.c.h.b16 %v908
        %v1013 = vunpack.c.l.b16 %v909
        %v1014 = vunpack.c.h.b16 %v909
        %v1015 = vunpack.c.l.b16 %v910
        %v1016 = vunpack.c.h.b16 %v910
        %v1017 = vunpack.c.l.b16 %v911
        %v1018 = vunpack.c.h.b16 %v911
        %v1019 = vunpack.c.l.b16 %v912
        %v1020 = vunpack.c.h.b16 %v912
        %v1021 = vunpack.c.l.b16 %v913
        %v1022 = vunpack.c.h.b16 %v913
        %v1023 = vpack.c.b16 %v961, %v959
        %v1024 = vpack.c.b16 %v962, %v960
        %v1025 = vpack.c.b16 %v965, %v963
        %v1026 = vpack.c.b16 %v966, %v964
        %v1027 = vpack.c.b16 %v969, %v967
        %v1028 = vpack.c.b16 %v970, %v968
        %v1029 = vpack.c.b16 %v973, %v971
        %v1030 = vpack.c.b16 %v974, %v972
        %v1031 = vpack.c.b16 %v977, %v975
        %v1032 = vpack.c.b16 %v978, %v976
        %v1033 = vpack.c.b16 %v981, %v979
        %v1034 = vpack.c.b16 %v982, %v980
        %v1035 = vpack.c.b16 %v985, %v983
        %v1036 = vpack.c.b16 %v986, %v984
        %v1037 = vpack.c.b16 %v989, %v987
        %v1038 = vpack.c.b16 %v990, %v988
        %v1039 = vpack.c.b16 %v993, %v991
        %v1040 = vpack.c.b16 %v994, %v992
        %v1041 = vpack.c.b16 %v997, %v995
        %v1042 = vpack.c.b16 %v998, %v996
        %v1043 = vpack.c.b16 %v1001, %v999
        %v1044 = vpack.c.b16 %v1002, %v1000
        %v1045 = vpack.c.b16 %v1005, %v1003
        %v1046 = vpack.c.b16 %v1006, %v1004
        %v1047 = vpack.c.b16 %v1009, %v1007
        %v1048 = vpack.c.b16 %v1010, %v1008
        %v1049 = vpack.c.b16 %v1013, %v1011
        %v1050 = vpack.c.b16 %v1014, %v1012
        %v1051 = vpack.c.b16 %v1017, %v1015
        %v1052 = vpack.c.b16 %v1018, %v1016
        %v1053 = vpack.c.b16 %v1021, %v1019
        %v1054 = vpack.c.b16 %v1022, %v1020
        %1087 = vmatprep.subr.bf16.mxu0 %v1024
        %1088 = vmatpush1.bf16.msra.mxu0 %v1023
        %1089 = vmatprep.subr.bf16.mxu0 %v1026
        %1090 = vmatpush1.bf16.msra.mxu0 %v1025
        %1091 = vmatprep.subr.bf16.mxu0 %v1028
        %1092 = vmatpush1.bf16.msra.mxu0 %v1027
        %1093 = vmatprep.subr.bf16.mxu0 %v1030
        %1094 = vmatpush1.bf16.msra.mxu0 %v1029
        %1095 = vmatprep.subr.bf16.mxu0 %v1032
        %1096 = vmatpush1.bf16.msra.mxu0 %v1031
        %1097 = vmatprep.subr.bf16.mxu0 %v1034
        %1098 = vmatpush1.bf16.msra.mxu0 %v1033
        %1099 = vmatprep.subr.bf16.mxu0 %v1036
        %1100 = vmatpush1.bf16.msra.mxu0 %v1035
        %1101 = vmatprep.subr.bf16.mxu0 %v1038
        %1102 = vmatpush1.bf16.msra.mxu0 %v1037
        %1103 = vmatprep.subr.bf16.mxu0 %v1040
        %1104 = vmatpush1.bf16.msra.mxu0 %v1039
        %1105 = vmatprep.subr.bf16.mxu0 %v1042
        %1106 = vmatpush1.bf16.msra.mxu0 %v1041
        %1107 = vmatprep.subr.bf16.mxu0 %v1044
        %1108 = vmatpush1.bf16.msra.mxu0 %v1043
        %1109 = vmatprep.subr.bf16.mxu0 %v1046
        %1110 = vmatpush1.bf16.msra.mxu0 %v1045
        %1111 = vmatprep.subr.bf16.mxu0 %v1048
        %1112 = vmatpush1.bf16.msra.mxu0 %v1047
        %1113 = vmatprep.subr.bf16.mxu0 %v1050
        %1114 = vmatpush1.bf16.msra.mxu0 %v1049
        %1115 = vmatprep.subr.bf16.mxu0 %v1052
        %1116 = vmatpush1.bf16.msra.mxu0 %v1051
        %1117 = vmatprep.subr.bf16.mxu0 %v1054
        %1118 = vmatpush1.bf16.msra.mxu0 %v1053
        %1119 = vmatprep.mubr.bf16.mxu0 %v881
        %1120 = vmatmul.mubr.bf16.gmra.mrb[0].mxu0 %v880
        %v1121 = vpop.f32.mrb[0].mxu0
        %v1122 = vadd.f32 %v920, %v1121
        %v1123 = vpop.f32.mrb[0].mxu0
        %v1124 = vadd.f32 %v924, %v1123
        %v1125 = vpop.f32.mrb[0].mxu0
        %v1126 = vpop.f32.mrb[0].mxu0
        %1127 = vdwg.mxu0
        %s1128 = scalar_lea.vmem %s8, 4
        %v1129 = vld [vmem:[%s1128] ss:$8 sm:$0x3]
        %s1130 = scalar_lea.vmem %s8, 5
        %v1131 = vld [vmem:[%s1130] ss:$8 sm:$0x3]
        %v1132 = vsel %vm804, %v1122, 0.0
        %v1133 = vrot.slane %v1132, 4
        %v1134 = vadd.f32 %v1132, %v1133
        %v1135 = vrot.slane %v1134, 2
        %v1136 = vadd.f32 %v1134, %v1135
        %v1137 = vrot.slane %v1136, 1
        %v1138 = vadd.f32 %v1136, %v1137
        %v1139 = vsel %vm804, %v1124, 0.0
        %v1140 = vrot.slane %v1139, 4
        %v1141 = vadd.f32 %v1139, %v1140
        %v1142 = vrot.slane %v1141, 2
        %v1143 = vadd.f32 %v1141, %v1142
        %v1144 = vrot.slane %v1143, 1
        %v1145 = vadd.f32 %v1143, %v1144
        %v1146 = vmul.f32 %v1138, %v819
        %v1147 = vmul.f32 %v1145, %v819
        %v1148 = vsub.f32 %v1122, %v1146
        %v1149 = vsub.f32 %v1124, %v1147
        %v1150 = vmul.f32 %v1148, %v1148
        %v1151 = vmul.f32 %v1149, %v1149
        %v1152 = vsel %vm804, %v1150, 0.0
        %v1153 = vrot.slane %v1152, 4
        %v1154 = vadd.f32 %v1152, %v1153
        %v1155 = vrot.slane %v1154, 2
        %v1156 = vadd.f32 %v1154, %v1155
        %v1157 = vrot.slane %v1156, 1
        %v1158 = vadd.f32 %v1156, %v1157
        %v1159 = vsel %vm804, %v1151, 0.0
        %v1160 = vrot.slane %v1159, 4
        %v1161 = vadd.f32 %v1159, %v1160
        %v1162 = vrot.slane %v1161, 2
        %v1163 = vadd.f32 %v1161, %v1162
        %v1164 = vrot.slane %v1163, 1
        %v1165 = vadd.f32 %v1163, %v1164
        %v1166 = vmul.f32 %v1158, %v819
        %v1167 = vmul.f32 %v1165, %v819
        %v1168 = vadd.f32 %v1166, 1e-05
        %v1169 = vadd.f32 %v1167, 1e-05
        %v1170 = vrsqrt.pop %v1168
        %v1171 = vrsqrt.pop %v1169
        %v1172 = vmul.f32 %v1148, %v1170
        %v1173 = vmul.f32 %v1149, %v1171
        %v1175 = vlaneseq
        %v1176 = vshrl.u32 %v1175, 7
        %v1177 = vsub.s32 0, %v1176
        %v1178 = vrot.slane %v1129, %v1177
        %v1179 = vlaneseq
        %v1180 = vshrl.u32 %v1179, 7
        %v1181 = vsub.s32 1, %v1180
        %v1182 = vrot.slane %v1129, %v1181
        %v1185 = vmul.f32 %v1172, %v1178
        %v1186 = vmul.f32 %v1173, %v1182
        %v1188 = vlaneseq
        %v1189 = vshrl.u32 %v1188, 7
        %v1190 = vsub.s32 0, %v1189
        %v1191 = vrot.slane %v1131, %v1190
        %v1192 = vlaneseq
        %v1193 = vshrl.u32 %v1192, 7
        %v1194 = vsub.s32 1, %v1193
        %v1195 = vrot.slane %v1131, %v1194
        %v1198 = vadd.f32 %v1185, %v1191
        %v1199 = vadd.f32 %v1186, %v1195
        %vm1200 = vcmp.gt.f32.partialorder %v1198, 0.0
        %vm1201 = vcmp.gt.f32.partialorder %v1199, 0.0
        %v1202 = vmul.f32 %v1198, 0.01
        %v1203 = vmul.f32 %v1199, 0.01
        %v1204 = vsel %vm1200, %v1198, %v1202
        %v1205 = vsel %vm1201, %v1199, %v1203
        %v1206 = vpack.c.bf16 %v1204, %v1204
        %v1207 = vpack.c.bf16 %v1205, %v1205
        %s1208 = scalar_lea.vmem %s9, 256
        %v1209 = vld [vmem:[%s1208] sm:$0xff]
        %v1210 = vld [vmem:[%s1208 + $0x8] sm:$0xff]
        %v1211 = vld [vmem:[%s1208 + $0x10] sm:$0xff]
        %v1212 = vld [vmem:[%s1208 + $0x18] sm:$0xff]
        %v1213 = vld [vmem:[%s1208 + $0x20] sm:$0xff]
        %v1214 = vld [vmem:[%s1208 + $0x28] sm:$0xff]
        %v1215 = vld [vmem:[%s1208 + $0x30] sm:$0xff]
        %v1216 = vld [vmem:[%s1208 + $0x38] sm:$0xff]
        %v1217 = vld [vmem:[%s1208 + $0x40] sm:$0xff]
        %v1218 = vld [vmem:[%s1208 + $0x48] sm:$0xff]
        %v1219 = vld [vmem:[%s1208 + $0x50] sm:$0xff]
        %v1220 = vld [vmem:[%s1208 + $0x58] sm:$0xff]
        %v1221 = vld [vmem:[%s1208 + $0x60] sm:$0xff]
        %v1222 = vld [vmem:[%s1208 + $0x68] sm:$0xff]
        %v1223 = vld [vmem:[%s1208 + $0x70] sm:$0xff]
        %v1224 = vld [vmem:[%s1208 + $0x78] sm:$0xff]
        %v1225 = vld [vmem:[%s1208 + $0x80] sm:$0xff]
        %v1226 = vld [vmem:[%s1208 + $0x88] sm:$0xff]
        %v1227 = vld [vmem:[%s1208 + $0x90] sm:$0xff]
        %v1228 = vld [vmem:[%s1208 + $0x98] sm:$0xff]
        %v1229 = vld [vmem:[%s1208 + $0xa0] sm:$0xff]
        %v1230 = vld [vmem:[%s1208 + $0xa8] sm:$0xff]
        %v1231 = vld [vmem:[%s1208 + $0xb0] sm:$0xff]
        %v1232 = vld [vmem:[%s1208 + $0xb8] sm:$0xff]
        %v1233 = vld [vmem:[%s1208 + $0xc0] sm:$0xff]
        %v1234 = vld [vmem:[%s1208 + $0xc8] sm:$0xff]
        %v1235 = vld [vmem:[%s1208 + $0xd0] sm:$0xff]
        %v1236 = vld [vmem:[%s1208 + $0xd8] sm:$0xff]
        %v1237 = vld [vmem:[%s1208 + $0xe0] sm:$0xff]
        %v1238 = vld [vmem:[%s1208 + $0xe8] sm:$0xff]
        %v1239 = vld [vmem:[%s1208 + $0xf0] sm:$0xff]
        %v1240 = vld [vmem:[%s1208 + $0xf8] sm:$0xff]
        %s1241 = scalar_lea.vmem %s8, 6
        %v1242 = vld [vmem:[%s1241] ss:$8 sm:$0x3]
        %v1244 = vlaneseq
        %v1245 = vshrl.u32 %v1244, 7
        %v1246 = vsub.s32 0, %v1245
        %v1247 = vrot.slane %v1242, %v1246
        %v1248 = vlaneseq
        %v1249 = vshrl.u32 %v1248, 7
        %v1250 = vsub.s32 1, %v1249
        %v1251 = vrot.slane %v1242, %v1250
        %v1286 = vunpack.c.l.b16 %v1209
        %v1287 = vunpack.c.h.b16 %v1209
        %v1288 = vunpack.c.l.b16 %v1210
        %v1289 = vunpack.c.h.b16 %v1210
        %v1290 = vunpack.c.l.b16 %v1211
        %v1291 = vunpack.c.h.b16 %v1211
        %v1292 = vunpack.c.l.b16 %v1212
        %v1293 = vunpack.c.h.b16 %v1212
        %v1294 = vunpack.c.l.b16 %v1213
        %v1295 = vunpack.c.h.b16 %v1213
        %v1296 = vunpack.c.l.b16 %v1214
        %v1297 = vunpack.c.h.b16 %v1214
        %v1298 = vunpack.c.l.b16 %v1215
        %v1299 = vunpack.c.h.b16 %v1215
        %v1300 = vunpack.c.l.b16 %v1216
        %v1301 = vunpack.c.h.b16 %v1216
        %v1302 = vunpack.c.l.b16 %v1217
        %v1303 = vunpack.c.h.b16 %v1217
        %v1304 = vunpack.c.l.b16 %v1218
        %v1305 = vunpack.c.h.b16 %v1218
        %v1306 = vunpack.c.l.b16 %v1219
        %v1307 = vunpack.c.h.b16 %v1219
        %v1308 = vunpack.c.l.b16 %v1220
        %v1309 = vunpack.c.h.b16 %v1220
        %v1310 = vunpack.c.l.b16 %v1221
        %v1311 = vunpack.c.h.b16 %v1221
        %v1312 = vunpack.c.l.b16 %v1222
        %v1313 = vunpack.c.h.b16 %v1222
        %v1314 = vunpack.c.l.b16 %v1223
        %v1315 = vunpack.c.h.b16 %v1223
        %v1316 = vunpack.c.l.b16 %v1224
        %v1317 = vunpack.c.h.b16 %v1224
        %v1318 = vunpack.c.l.b16 %v1225
        %v1319 = vunpack.c.h.b16 %v1225
        %v1320 = vunpack.c.l.b16 %v1226
        %v1321 = vunpack.c.h.b16 %v1226
        %v1322 = vunpack.c.l.b16 %v1227
        %v1323 = vunpack.c.h.b16 %v1227
        %v1324 = vunpack.c.l.b16 %v1228
        %v1325 = vunpack.c.h.b16 %v1228
        %v1326 = vunpack.c.l.b16 %v1229
        %v1327 = vunpack.c.h.b16 %v1229
        %v1328 = vunpack.c.l.b16 %v1230
        %v1329 = vunpack.c.h.b16 %v1230
        %v1330 = vunpack.c.l.b16 %v1231
        %v1331 = vunpack.c.h.b16 %v1231
        %v1332 = vunpack.c.l.b16 %v1232
        %v1333 = vunpack.c.h.b16 %v1232
        %v1334 = vunpack.c.l.b16 %v1233
        %v1335 = vunpack.c.h.b16 %v1233
        %v1336 = vunpack.c.l.b16 %v1234
        %v1337 = vunpack.c.h.b16 %v1234
        %v1338 = vunpack.c.l.b16 %v1235
        %v1339 = vunpack.c.h.b16 %v1235
        %v1340 = vunpack.c.l.b16 %v1236
        %v1341 = vunpack.c.h.b16 %v1236
        %v1342 = vunpack.c.l.b16 %v1237
        %v1343 = vunpack.c.h.b16 %v1237
        %v1344 = vunpack.c.l.b16 %v1238
        %v1345 = vunpack.c.h.b16 %v1238
        %v1346 = vunpack.c.l.b16 %v1239
        %v1347 = vunpack.c.h.b16 %v1239
        %v1348 = vunpack.c.l.b16 %v1240
        %v1349 = vunpack.c.h.b16 %v1240
        %v1350 = vpack.c.b16 %v1288, %v1286
        %v1351 = vpack.c.b16 %v1289, %v1287
        %v1352 = vpack.c.b16 %v1292, %v1290
        %v1353 = vpack.c.b16 %v1293, %v1291
        %v1354 = vpack.c.b16 %v1296, %v1294
        %v1355 = vpack.c.b16 %v1297, %v1295
        %v1356 = vpack.c.b16 %v1300, %v1298
        %v1357 = vpack.c.b16 %v1301, %v1299
        %v1358 = vpack.c.b16 %v1304, %v1302
        %v1359 = vpack.c.b16 %v1305, %v1303
        %v1360 = vpack.c.b16 %v1308, %v1306
        %v1361 = vpack.c.b16 %v1309, %v1307
        %v1362 = vpack.c.b16 %v1312, %v1310
        %v1363 = vpack.c.b16 %v1313, %v1311
        %v1364 = vpack.c.b16 %v1316, %v1314
        %v1365 = vpack.c.b16 %v1317, %v1315
        %v1366 = vpack.c.b16 %v1320, %v1318
        %v1367 = vpack.c.b16 %v1321, %v1319
        %v1368 = vpack.c.b16 %v1324, %v1322
        %v1369 = vpack.c.b16 %v1325, %v1323
        %v1370 = vpack.c.b16 %v1328, %v1326
        %v1371 = vpack.c.b16 %v1329, %v1327
        %v1372 = vpack.c.b16 %v1332, %v1330
        %v1373 = vpack.c.b16 %v1333, %v1331
        %v1374 = vpack.c.b16 %v1336, %v1334
        %v1375 = vpack.c.b16 %v1337, %v1335
        %v1376 = vpack.c.b16 %v1340, %v1338
        %v1377 = vpack.c.b16 %v1341, %v1339
        %v1378 = vpack.c.b16 %v1344, %v1342
        %v1379 = vpack.c.b16 %v1345, %v1343
        %v1380 = vpack.c.b16 %v1348, %v1346
        %v1381 = vpack.c.b16 %v1349, %v1347
        %1414 = vmatprep.subr.bf16.mxu0 %v1351
        %1415 = vmatpush1.bf16.msra.mxu0 %v1350
        %1416 = vmatprep.subr.bf16.mxu0 %v1353
        %1417 = vmatpush1.bf16.msra.mxu0 %v1352
        %1418 = vmatprep.subr.bf16.mxu0 %v1355
        %1419 = vmatpush1.bf16.msra.mxu0 %v1354
        %1420 = vmatprep.subr.bf16.mxu0 %v1357
        %1421 = vmatpush1.bf16.msra.mxu0 %v1356
        %1422 = vmatprep.subr.bf16.mxu0 %v1359
        %1423 = vmatpush1.bf16.msra.mxu0 %v1358
        %1424 = vmatprep.subr.bf16.mxu0 %v1361
        %1425 = vmatpush1.bf16.msra.mxu0 %v1360
        %1426 = vmatprep.subr.bf16.mxu0 %v1363
        %1427 = vmatpush1.bf16.msra.mxu0 %v1362
        %1428 = vmatprep.subr.bf16.mxu0 %v1365
        %1429 = vmatpush1.bf16.msra.mxu0 %v1364
        %1430 = vmatprep.subr.bf16.mxu0 %v1367
        %1431 = vmatpush1.bf16.msra.mxu0 %v1366
        %1432 = vmatprep.subr.bf16.mxu0 %v1369
        %1433 = vmatpush1.bf16.msra.mxu0 %v1368
        %1434 = vmatprep.subr.bf16.mxu0 %v1371
        %1435 = vmatpush1.bf16.msra.mxu0 %v1370
        %1436 = vmatprep.subr.bf16.mxu0 %v1373
        %1437 = vmatpush1.bf16.msra.mxu0 %v1372
        %1438 = vmatprep.subr.bf16.mxu0 %v1375
        %1439 = vmatpush1.bf16.msra.mxu0 %v1374
        %1440 = vmatprep.subr.bf16.mxu0 %v1377
        %1441 = vmatpush1.bf16.msra.mxu0 %v1376
        %1442 = vmatprep.subr.bf16.mxu0 %v1379
        %1443 = vmatpush1.bf16.msra.mxu0 %v1378
        %1444 = vmatprep.subr.bf16.mxu0 %v1381
        %1445 = vmatpush1.bf16.msra.mxu0 %v1380
        %1446 = vmatprep.mubr.bf16.mxu0 %v1207
        %1447 = vmatmul.mubr.bf16.gmra.mrb[0].mxu0 %v1206
        %v1448 = vpop.f32.mrb[0].mxu0
        %v1449 = vadd.f32 %v1247, %v1448
        %v1450 = vpop.f32.mrb[0].mxu0
        %v1451 = vadd.f32 %v1251, %v1450
        %v1452 = vpop.f32.mrb[0].mxu0
        %v1453 = vpop.f32.mrb[0].mxu0
        %1454 = vdwg.mxu0
        %s1455 = scalar_lea.vmem %s8, 7
        %v1456 = vld [vmem:[%s1455] ss:$8 sm:$0x3]
        %s1457 = scalar_lea.vmem %s8, 16
        %v1458 = vld [vmem:[%s1457] ss:$8 sm:$0x3]
        %v1459 = vsel %vm804, %v1449, 0.0
        %v1460 = vrot.slane %v1459, 4
        %v1461 = vadd.f32 %v1459, %v1460
        %v1462 = vrot.slane %v1461, 2
        %v1463 = vadd.f32 %v1461, %v1462
        %v1464 = vrot.slane %v1463, 1
        %v1465 = vadd.f32 %v1463, %v1464
        %v1466 = vsel %vm804, %v1451, 0.0
        %v1467 = vrot.slane %v1466, 4
        %v1468 = vadd.f32 %v1466, %v1467
        %v1469 = vrot.slane %v1468, 2
        %v1470 = vadd.f32 %v1468, %v1469
        %v1471 = vrot.slane %v1470, 1
        %v1472 = vadd.f32 %v1470, %v1471
        %v1473 = vmul.f32 %v1465, %v819
        %v1474 = vmul.f32 %v1472, %v819
        %v1475 = vsub.f32 %v1449, %v1473
        %v1476 = vsub.f32 %v1451, %v1474
        %v1477 = vmul.f32 %v1475, %v1475
        %v1478 = vmul.f32 %v1476, %v1476
        %v1479 = vsel %vm804, %v1477, 0.0
        %v1480 = vrot.slane %v1479, 4
        %v1481 = vadd.f32 %v1479, %v1480
        %v1482 = vrot.slane %v1481, 2
        %v1483 = vadd.f32 %v1481, %v1482
        %v1484 = vrot.slane %v1483, 1
        %v1485 = vadd.f32 %v1483, %v1484
        %v1486 = vsel %vm804, %v1478, 0.0
        %v1487 = vrot.slane %v1486, 4
        %v1488 = vadd.f32 %v1486, %v1487
        %v1489 = vrot.slane %v1488, 2
        %v1490 = vadd.f32 %v1488, %v1489
        %v1491 = vrot.slane %v1490, 1
        %v1492 = vadd.f32 %v1490, %v1491
        %v1493 = vmul.f32 %v1485, %v819
        %v1494 = vmul.f32 %v1492, %v819
        %v1495 = vadd.f32 %v1493, 1e-05
        %v1496 = vadd.f32 %v1494, 1e-05
        %v1497 = vrsqrt.pop %v1495
        %v1498 = vrsqrt.pop %v1496
        %v1499 = vmul.f32 %v1475, %v1497
        %v1500 = vmul.f32 %v1476, %v1498
        %v1502 = vlaneseq
        %v1503 = vshrl.u32 %v1502, 7
        %v1504 = vsub.s32 0, %v1503
        %v1505 = vrot.slane %v1456, %v1504
        %v1506 = vlaneseq
        %v1507 = vshrl.u32 %v1506, 7
        %v1508 = vsub.s32 1, %v1507
        %v1509 = vrot.slane %v1456, %v1508
        %v1512 = vmul.f32 %v1499, %v1505
        %v1513 = vmul.f32 %v1500, %v1509
        %v1515 = vlaneseq
        %v1516 = vshrl.u32 %v1515, 7
        %v1517 = vsub.s32 0, %v1516
        %v1518 = vrot.slane %v1458, %v1517
        %v1519 = vlaneseq
        %v1520 = vshrl.u32 %v1519, 7
        %v1521 = vsub.s32 1, %v1520
        %v1522 = vrot.slane %v1458, %v1521
        %v1525 = vadd.f32 %v1512, %v1518
        %v1526 = vadd.f32 %v1513, %v1522
        %vm1527 = vcmp.gt.f32.partialorder %v1525, 0.0
        %vm1528 = vcmp.gt.f32.partialorder %v1526, 0.0
        %v1529 = vmul.f32 %v1525, 0.01
        %v1530 = vmul.f32 %v1526, 0.01
        %v1531 = vsel %vm1527, %v1525, %v1529
        %v1532 = vsel %vm1528, %v1526, %v1530
        %v1533 = vpack.c.bf16 %v1531, %v1531
        %v1534 = vpack.c.bf16 %v1532, %v1532
        %s1535 = scalar_lea.vmem %s9, 512
        %v1536 = vld [vmem:[%s1535] sm:$0xff]
        %v1537 = vld [vmem:[%s1535 + $0x8] sm:$0xff]
        %v1538 = vld [vmem:[%s1535 + $0x10] sm:$0xff]
        %v1539 = vld [vmem:[%s1535 + $0x18] sm:$0xff]
        %v1540 = vld [vmem:[%s1535 + $0x20] sm:$0xff]
        %v1541 = vld [vmem:[%s1535 + $0x28] sm:$0xff]
        %v1542 = vld [vmem:[%s1535 + $0x30] sm:$0xff]
        %v1543 = vld [vmem:[%s1535 + $0x38] sm:$0xff]
        %v1544 = vld [vmem:[%s1535 + $0x40] sm:$0xff]
        %v1545 = vld [vmem:[%s1535 + $0x48] sm:$0xff]
        %v1546 = vld [vmem:[%s1535 + $0x50] sm:$0xff]
        %v1547 = vld [vmem:[%s1535 + $0x58] sm:$0xff]
        %v1548 = vld [vmem:[%s1535 + $0x60] sm:$0xff]
        %v1549 = vld [vmem:[%s1535 + $0x68] sm:$0xff]
        %v1550 = vld [vmem:[%s1535 + $0x70] sm:$0xff]
        %v1551 = vld [vmem:[%s1535 + $0x78] sm:$0xff]
        %v1552 = vld [vmem:[%s1535 + $0x80] sm:$0xff]
        %v1553 = vld [vmem:[%s1535 + $0x88] sm:$0xff]
        %v1554 = vld [vmem:[%s1535 + $0x90] sm:$0xff]
        %v1555 = vld [vmem:[%s1535 + $0x98] sm:$0xff]
        %v1556 = vld [vmem:[%s1535 + $0xa0] sm:$0xff]
        %v1557 = vld [vmem:[%s1535 + $0xa8] sm:$0xff]
        %v1558 = vld [vmem:[%s1535 + $0xb0] sm:$0xff]
        %v1559 = vld [vmem:[%s1535 + $0xb8] sm:$0xff]
        %v1560 = vld [vmem:[%s1535 + $0xc0] sm:$0xff]
        %v1561 = vld [vmem:[%s1535 + $0xc8] sm:$0xff]
        %v1562 = vld [vmem:[%s1535 + $0xd0] sm:$0xff]
        %v1563 = vld [vmem:[%s1535 + $0xd8] sm:$0xff]
        %v1564 = vld [vmem:[%s1535 + $0xe0] sm:$0xff]
        %v1565 = vld [vmem:[%s1535 + $0xe8] sm:$0xff]
        %v1566 = vld [vmem:[%s1535 + $0xf0] sm:$0xff]
        %v1567 = vld [vmem:[%s1535 + $0xf8] sm:$0xff]
        %s1568 = scalar_lea.vmem %s8, 17
        %v1569 = vld [vmem:[%s1568] ss:$8 sm:$0x3]
        %v1571 = vlaneseq
        %v1572 = vshrl.u32 %v1571, 7
        %v1573 = vsub.s32 0, %v1572
        %v1574 = vrot.slane %v1569, %v1573
        %v1575 = vlaneseq
        %v1576 = vshrl.u32 %v1575, 7
        %v1577 = vsub.s32 1, %v1576
        %v1578 = vrot.slane %v1569, %v1577
        %v1613 = vunpack.c.l.b16 %v1536
        %v1614 = vunpack.c.h.b16 %v1536
        %v1615 = vunpack.c.l.b16 %v1537
        %v1616 = vunpack.c.h.b16 %v1537
        %v1617 = vunpack.c.l.b16 %v1538
        %v1618 = vunpack.c.h.b16 %v1538
        %v1619 = vunpack.c.l.b16 %v1539
        %v1620 = vunpack.c.h.b16 %v1539
        %v1621 = vunpack.c.l.b16 %v1540
        %v1622 = vunpack.c.h.b16 %v1540
        %v1623 = vunpack.c.l.b16 %v1541
        %v1624 = vunpack.c.h.b16 %v1541
        %v1625 = vunpack.c.l.b16 %v1542
        %v1626 = vunpack.c.h.b16 %v1542
        %v1627 = vunpack.c.l.b16 %v1543
        %v1628 = vunpack.c.h.b16 %v1543
        %v1629 = vunpack.c.l.b16 %v1544
        %v1630 = vunpack.c.h.b16 %v1544
        %v1631 = vunpack.c.l.b16 %v1545
        %v1632 = vunpack.c.h.b16 %v1545
        %v1633 = vunpack.c.l.b16 %v1546
        %v1634 = vunpack.c.h.b16 %v1546
        %v1635 = vunpack.c.l.b16 %v1547
        %v1636 = vunpack.c.h.b16 %v1547
        %v1637 = vunpack.c.l.b16 %v1548
        %v1638 = vunpack.c.h.b16 %v1548
        %v1639 = vunpack.c.l.b16 %v1549
        %v1640 = vunpack.c.h.b16 %v1549
        %v1641 = vunpack.c.l.b16 %v1550
        %v1642 = vunpack.c.h.b16 %v1550
        %v1643 = vunpack.c.l.b16 %v1551
        %v1644 = vunpack.c.h.b16 %v1551
        %v1645 = vunpack.c.l.b16 %v1552
        %v1646 = vunpack.c.h.b16 %v1552
        %v1647 = vunpack.c.l.b16 %v1553
        %v1648 = vunpack.c.h.b16 %v1553
        %v1649 = vunpack.c.l.b16 %v1554
        %v1650 = vunpack.c.h.b16 %v1554
        %v1651 = vunpack.c.l.b16 %v1555
        %v1652 = vunpack.c.h.b16 %v1555
        %v1653 = vunpack.c.l.b16 %v1556
        %v1654 = vunpack.c.h.b16 %v1556
        %v1655 = vunpack.c.l.b16 %v1557
        %v1656 = vunpack.c.h.b16 %v1557
        %v1657 = vunpack.c.l.b16 %v1558
        %v1658 = vunpack.c.h.b16 %v1558
        %v1659 = vunpack.c.l.b16 %v1559
        %v1660 = vunpack.c.h.b16 %v1559
        %v1661 = vunpack.c.l.b16 %v1560
        %v1662 = vunpack.c.h.b16 %v1560
        %v1663 = vunpack.c.l.b16 %v1561
        %v1664 = vunpack.c.h.b16 %v1561
        %v1665 = vunpack.c.l.b16 %v1562
        %v1666 = vunpack.c.h.b16 %v1562
        %v1667 = vunpack.c.l.b16 %v1563
        %v1668 = vunpack.c.h.b16 %v1563
        %v1669 = vunpack.c.l.b16 %v1564
        %v1670 = vunpack.c.h.b16 %v1564
        %v1671 = vunpack.c.l.b16 %v1565
        %v1672 = vunpack.c.h.b16 %v1565
        %v1673 = vunpack.c.l.b16 %v1566
        %v1674 = vunpack.c.h.b16 %v1566
        %v1675 = vunpack.c.l.b16 %v1567
        %v1676 = vunpack.c.h.b16 %v1567
        %v1677 = vpack.c.b16 %v1615, %v1613
        %v1678 = vpack.c.b16 %v1616, %v1614
        %v1679 = vpack.c.b16 %v1619, %v1617
        %v1680 = vpack.c.b16 %v1620, %v1618
        %v1681 = vpack.c.b16 %v1623, %v1621
        %v1682 = vpack.c.b16 %v1624, %v1622
        %v1683 = vpack.c.b16 %v1627, %v1625
        %v1684 = vpack.c.b16 %v1628, %v1626
        %v1685 = vpack.c.b16 %v1631, %v1629
        %v1686 = vpack.c.b16 %v1632, %v1630
        %v1687 = vpack.c.b16 %v1635, %v1633
        %v1688 = vpack.c.b16 %v1636, %v1634
        %v1689 = vpack.c.b16 %v1639, %v1637
        %v1690 = vpack.c.b16 %v1640, %v1638
        %v1691 = vpack.c.b16 %v1643, %v1641
        %v1692 = vpack.c.b16 %v1644, %v1642
        %v1693 = vpack.c.b16 %v1647, %v1645
        %v1694 = vpack.c.b16 %v1648, %v1646
        %v1695 = vpack.c.b16 %v1651, %v1649
        %v1696 = vpack.c.b16 %v1652, %v1650
        %v1697 = vpack.c.b16 %v1655, %v1653
        %v1698 = vpack.c.b16 %v1656, %v1654
        %v1699 = vpack.c.b16 %v1659, %v1657
        %v1700 = vpack.c.b16 %v1660, %v1658
        %v1701 = vpack.c.b16 %v1663, %v1661
        %v1702 = vpack.c.b16 %v1664, %v1662
        %v1703 = vpack.c.b16 %v1667, %v1665
        %v1704 = vpack.c.b16 %v1668, %v1666
        %v1705 = vpack.c.b16 %v1671, %v1669
        %v1706 = vpack.c.b16 %v1672, %v1670
        %v1707 = vpack.c.b16 %v1675, %v1673
        %v1708 = vpack.c.b16 %v1676, %v1674
        %1741 = vmatprep.subr.bf16.mxu0 %v1678
        %1742 = vmatpush1.bf16.msra.mxu0 %v1677
        %1743 = vmatprep.subr.bf16.mxu0 %v1680
        %1744 = vmatpush1.bf16.msra.mxu0 %v1679
        %1745 = vmatprep.subr.bf16.mxu0 %v1682
        %1746 = vmatpush1.bf16.msra.mxu0 %v1681
        %1747 = vmatprep.subr.bf16.mxu0 %v1684
        %1748 = vmatpush1.bf16.msra.mxu0 %v1683
        %1749 = vmatprep.subr.bf16.mxu0 %v1686
        %1750 = vmatpush1.bf16.msra.mxu0 %v1685
        %1751 = vmatprep.subr.bf16.mxu0 %v1688
        %1752 = vmatpush1.bf16.msra.mxu0 %v1687
        %1753 = vmatprep.subr.bf16.mxu0 %v1690
        %1754 = vmatpush1.bf16.msra.mxu0 %v1689
        %1755 = vmatprep.subr.bf16.mxu0 %v1692
        %1756 = vmatpush1.bf16.msra.mxu0 %v1691
        %1757 = vmatprep.subr.bf16.mxu0 %v1694
        %1758 = vmatpush1.bf16.msra.mxu0 %v1693
        %1759 = vmatprep.subr.bf16.mxu0 %v1696
        %1760 = vmatpush1.bf16.msra.mxu0 %v1695
        %1761 = vmatprep.subr.bf16.mxu0 %v1698
        %1762 = vmatpush1.bf16.msra.mxu0 %v1697
        %1763 = vmatprep.subr.bf16.mxu0 %v1700
        %1764 = vmatpush1.bf16.msra.mxu0 %v1699
        %1765 = vmatprep.subr.bf16.mxu0 %v1702
        %1766 = vmatpush1.bf16.msra.mxu0 %v1701
        %1767 = vmatprep.subr.bf16.mxu0 %v1704
        %1768 = vmatpush1.bf16.msra.mxu0 %v1703
        %1769 = vmatprep.subr.bf16.mxu0 %v1706
        %1770 = vmatpush1.bf16.msra.mxu0 %v1705
        %1771 = vmatprep.subr.bf16.mxu0 %v1708
        %1772 = vmatpush1.bf16.msra.mxu0 %v1707
        %1773 = vmatprep.mubr.bf16.mxu0 %v1534
        %1774 = vmatmul.mubr.bf16.gmra.mrb[0].mxu0 %v1533
        %v1775 = vpop.f32.mrb[0].mxu0
        %v1776 = vadd.f32 %v1574, %v1775
        %v1777 = vpop.f32.mrb[0].mxu0
        %v1778 = vadd.f32 %v1578, %v1777
        %v1779 = vpop.f32.mrb[0].mxu0
        %v1780 = vpop.f32.mrb[0].mxu0
        %1781 = vdwg.mxu0
        %s1782 = scalar_lea.vmem %s8, 18
        %v1783 = vld [vmem:[%s1782] ss:$8 sm:$0x3]
        %s1784 = scalar_lea.vmem %s8, 19
        %v1785 = vld [vmem:[%s1784] ss:$8 sm:$0x3]
        %v1786 = vsel %vm804, %v1776, 0.0
        %v1787 = vrot.slane %v1786, 4
        %v1788 = vadd.f32 %v1786, %v1787
        %v1789 = vrot.slane %v1788, 2
        %v1790 = vadd.f32 %v1788, %v1789
        %v1791 = vrot.slane %v1790, 1
        %v1792 = vadd.f32 %v1790, %v1791
        %v1793 = vsel %vm804, %v1778, 0.0
        %v1794 = vrot.slane %v1793, 4
        %v1795 = vadd.f32 %v1793, %v1794
        %v1796 = vrot.slane %v1795, 2
        %v1797 = vadd.f32 %v1795, %v1796
        %v1798 = vrot.slane %v1797, 1
        %v1799 = vadd.f32 %v1797, %v1798
        %v1800 = vmul.f32 %v1792, %v819
        %v1801 = vmul.f32 %v1799, %v819
        %v1802 = vsub.f32 %v1776, %v1800
        %v1803 = vsub.f32 %v1778, %v1801
        %v1804 = vmul.f32 %v1802, %v1802
        %v1805 = vmul.f32 %v1803, %v1803
        %v1806 = vsel %vm804, %v1804, 0.0
        %v1807 = vrot.slane %v1806, 4
        %v1808 = vadd.f32 %v1806, %v1807
        %v1809 = vrot.slane %v1808, 2
        %v1810 = vadd.f32 %v1808, %v1809
        %v1811 = vrot.slane %v1810, 1
        %v1812 = vadd.f32 %v1810, %v1811
        %v1813 = vsel %vm804, %v1805, 0.0
        %v1814 = vrot.slane %v1813, 4
        %v1815 = vadd.f32 %v1813, %v1814
        %v1816 = vrot.slane %v1815, 2
        %v1817 = vadd.f32 %v1815, %v1816
        %v1818 = vrot.slane %v1817, 1
        %v1819 = vadd.f32 %v1817, %v1818
        %v1820 = vmul.f32 %v1812, %v819
        %v1821 = vmul.f32 %v1819, %v819
        %v1822 = vadd.f32 %v1820, 1e-05
        %v1823 = vadd.f32 %v1821, 1e-05
        %v1824 = vrsqrt.pop %v1822
        %v1825 = vrsqrt.pop %v1823
        %v1826 = vmul.f32 %v1802, %v1824
        %v1827 = vmul.f32 %v1803, %v1825
        %v1829 = vlaneseq
        %v1830 = vshrl.u32 %v1829, 7
        %v1831 = vsub.s32 0, %v1830
        %v1832 = vrot.slane %v1783, %v1831
        %v1833 = vlaneseq
        %v1834 = vshrl.u32 %v1833, 7
        %v1835 = vsub.s32 1, %v1834
        %v1836 = vrot.slane %v1783, %v1835
        %v1839 = vmul.f32 %v1826, %v1832
        %v1840 = vmul.f32 %v1827, %v1836
        %v1842 = vlaneseq
        %v1843 = vshrl.u32 %v1842, 7
        %v1844 = vsub.s32 0, %v1843
        %v1845 = vrot.slane %v1785, %v1844
        %v1846 = vlaneseq
        %v1847 = vshrl.u32 %v1846, 7
        %v1848 = vsub.s32 1, %v1847
        %v1849 = vrot.slane %v1785, %v1848
        %v1852 = vadd.f32 %v1839, %v1845
        %v1853 = vadd.f32 %v1840, %v1849
        %vm1854 = vcmp.gt.f32.partialorder %v1852, 0.0
        %vm1855 = vcmp.gt.f32.partialorder %v1853, 0.0
        %v1856 = vmul.f32 %v1852, 0.01
        %v1857 = vmul.f32 %v1853, 0.01
        %v1858 = vsel %vm1854, %v1852, %v1856
        %v1859 = vsel %vm1855, %v1853, %v1857
        %v1860 = vpack.c.bf16 %v1858, %v1858
        %v1861 = vpack.c.bf16 %v1859, %v1859
        %s1862 = scalar_lea.vmem %s9, 768
        %v1863 = vld [vmem:[%s1862] sm:$0xff]
        %v1864 = vld [vmem:[%s1862 + $0x8] sm:$0xff]
        %v1865 = vld [vmem:[%s1862 + $0x10] sm:$0xff]
        %v1866 = vld [vmem:[%s1862 + $0x18] sm:$0xff]
        %v1867 = vld [vmem:[%s1862 + $0x20] sm:$0xff]
        %v1868 = vld [vmem:[%s1862 + $0x28] sm:$0xff]
        %v1869 = vld [vmem:[%s1862 + $0x30] sm:$0xff]
        %v1870 = vld [vmem:[%s1862 + $0x38] sm:$0xff]
        %v1871 = vld [vmem:[%s1862 + $0x40] sm:$0xff]
        %v1872 = vld [vmem:[%s1862 + $0x48] sm:$0xff]
        %v1873 = vld [vmem:[%s1862 + $0x50] sm:$0xff]
        %v1874 = vld [vmem:[%s1862 + $0x58] sm:$0xff]
        %v1875 = vld [vmem:[%s1862 + $0x60] sm:$0xff]
        %v1876 = vld [vmem:[%s1862 + $0x68] sm:$0xff]
        %v1877 = vld [vmem:[%s1862 + $0x70] sm:$0xff]
        %v1878 = vld [vmem:[%s1862 + $0x78] sm:$0xff]
        %v1879 = vld [vmem:[%s1862 + $0x80] sm:$0xff]
        %v1880 = vld [vmem:[%s1862 + $0x88] sm:$0xff]
        %v1881 = vld [vmem:[%s1862 + $0x90] sm:$0xff]
        %v1882 = vld [vmem:[%s1862 + $0x98] sm:$0xff]
        %v1883 = vld [vmem:[%s1862 + $0xa0] sm:$0xff]
        %v1884 = vld [vmem:[%s1862 + $0xa8] sm:$0xff]
        %v1885 = vld [vmem:[%s1862 + $0xb0] sm:$0xff]
        %v1886 = vld [vmem:[%s1862 + $0xb8] sm:$0xff]
        %v1887 = vld [vmem:[%s1862 + $0xc0] sm:$0xff]
        %v1888 = vld [vmem:[%s1862 + $0xc8] sm:$0xff]
        %v1889 = vld [vmem:[%s1862 + $0xd0] sm:$0xff]
        %v1890 = vld [vmem:[%s1862 + $0xd8] sm:$0xff]
        %v1891 = vld [vmem:[%s1862 + $0xe0] sm:$0xff]
        %v1892 = vld [vmem:[%s1862 + $0xe8] sm:$0xff]
        %v1893 = vld [vmem:[%s1862 + $0xf0] sm:$0xff]
        %v1894 = vld [vmem:[%s1862 + $0xf8] sm:$0xff]
        %s1895 = scalar_lea.vmem %s8, 20
        %v1896 = vld [vmem:[%s1895] ss:$8 sm:$0x3]
        %v1898 = vlaneseq
        %v1899 = vshrl.u32 %v1898, 7
        %v1900 = vsub.s32 0, %v1899
        %v1901 = vrot.slane %v1896, %v1900
        %v1902 = vlaneseq
        %v1903 = vshrl.u32 %v1902, 7
        %v1904 = vsub.s32 1, %v1903
        %v1905 = vrot.slane %v1896, %v1904
        %v1940 = vunpack.c.l.b16 %v1863
        %v1941 = vunpack.c.h.b16 %v1863
        %v1942 = vunpack.c.l.b16 %v1864
        %v1943 = vunpack.c.h.b16 %v1864
        %v1944 = vunpack.c.l.b16 %v1865
        %v1945 = vunpack.c.h.b16 %v1865
        %v1946 = vunpack.c.l.b16 %v1866
        %v1947 = vunpack.c.h.b16 %v1866
        %v1948 = vunpack.c.l.b16 %v1867
        %v1949 = vunpack.c.h.b16 %v1867
        %v1950 = vunpack.c.l.b16 %v1868
        %v1951 = vunpack.c.h.b16 %v1868
        %v1952 = vunpack.c.l.b16 %v1869
        %v1953 = vunpack.c.h.b16 %v1869
        %v1954 = vunpack.c.l.b16 %v1870
        %v1955 = vunpack.c.h.b16 %v1870
        %v1956 = vunpack.c.l.b16 %v1871
        %v1957 = vunpack.c.h.b16 %v1871
        %v1958 = vunpack.c.l.b16 %v1872
        %v1959 = vunpack.c.h.b16 %v1872
        %v1960 = vunpack.c.l.b16 %v1873
        %v1961 = vunpack.c.h.b16 %v1873
        %v1962 = vunpack.c.l.b16 %v1874
        %v1963 = vunpack.c.h.b16 %v1874
        %v1964 = vunpack.c.l.b16 %v1875
        %v1965 = vunpack.c.h.b16 %v1875
        %v1966 = vunpack.c.l.b16 %v1876
        %v1967 = vunpack.c.h.b16 %v1876
        %v1968 = vunpack.c.l.b16 %v1877
        %v1969 = vunpack.c.h.b16 %v1877
        %v1970 = vunpack.c.l.b16 %v1878
        %v1971 = vunpack.c.h.b16 %v1878
        %v1972 = vunpack.c.l.b16 %v1879
        %v1973 = vunpack.c.h.b16 %v1879
        %v1974 = vunpack.c.l.b16 %v1880
        %v1975 = vunpack.c.h.b16 %v1880
        %v1976 = vunpack.c.l.b16 %v1881
        %v1977 = vunpack.c.h.b16 %v1881
        %v1978 = vunpack.c.l.b16 %v1882
        %v1979 = vunpack.c.h.b16 %v1882
        %v1980 = vunpack.c.l.b16 %v1883
        %v1981 = vunpack.c.h.b16 %v1883
        %v1982 = vunpack.c.l.b16 %v1884
        %v1983 = vunpack.c.h.b16 %v1884
        %v1984 = vunpack.c.l.b16 %v1885
        %v1985 = vunpack.c.h.b16 %v1885
        %v1986 = vunpack.c.l.b16 %v1886
        %v1987 = vunpack.c.h.b16 %v1886
        %v1988 = vunpack.c.l.b16 %v1887
        %v1989 = vunpack.c.h.b16 %v1887
        %v1990 = vunpack.c.l.b16 %v1888
        %v1991 = vunpack.c.h.b16 %v1888
        %v1992 = vunpack.c.l.b16 %v1889
        %v1993 = vunpack.c.h.b16 %v1889
        %v1994 = vunpack.c.l.b16 %v1890
        %v1995 = vunpack.c.h.b16 %v1890
        %v1996 = vunpack.c.l.b16 %v1891
        %v1997 = vunpack.c.h.b16 %v1891
        %v1998 = vunpack.c.l.b16 %v1892
        %v1999 = vunpack.c.h.b16 %v1892
        %v2000 = vunpack.c.l.b16 %v1893
        %v2001 = vunpack.c.h.b16 %v1893
        %v2002 = vunpack.c.l.b16 %v1894
        %v2003 = vunpack.c.h.b16 %v1894
        %v2004 = vpack.c.b16 %v1942, %v1940
        %v2005 = vpack.c.b16 %v1943, %v1941
        %v2006 = vpack.c.b16 %v1946, %v1944
        %v2007 = vpack.c.b16 %v1947, %v1945
        %v2008 = vpack.c.b16 %v1950, %v1948
        %v2009 = vpack.c.b16 %v1951, %v1949
        %v2010 = vpack.c.b16 %v1954, %v1952
        %v2011 = vpack.c.b16 %v1955, %v1953
        %v2012 = vpack.c.b16 %v1958, %v1956
        %v2013 = vpack.c.b16 %v1959, %v1957
        %v2014 = vpack.c.b16 %v1962, %v1960
        %v2015 = vpack.c.b16 %v1963, %v1961
        %v2016 = vpack.c.b16 %v1966, %v1964
        %v2017 = vpack.c.b16 %v1967, %v1965
        %v2018 = vpack.c.b16 %v1970, %v1968
        %v2019 = vpack.c.b16 %v1971, %v1969
        %v2020 = vpack.c.b16 %v1974, %v1972
        %v2021 = vpack.c.b16 %v1975, %v1973
        %v2022 = vpack.c.b16 %v1978, %v1976
        %v2023 = vpack.c.b16 %v1979, %v1977
        %v2024 = vpack.c.b16 %v1982, %v1980
        %v2025 = vpack.c.b16 %v1983, %v1981
        %v2026 = vpack.c.b16 %v1986, %v1984
        %v2027 = vpack.c.b16 %v1987, %v1985
        %v2028 = vpack.c.b16 %v1990, %v1988
        %v2029 = vpack.c.b16 %v1991, %v1989
        %v2030 = vpack.c.b16 %v1994, %v1992
        %v2031 = vpack.c.b16 %v1995, %v1993
        %v2032 = vpack.c.b16 %v1998, %v1996
        %v2033 = vpack.c.b16 %v1999, %v1997
        %v2034 = vpack.c.b16 %v2002, %v2000
        %v2035 = vpack.c.b16 %v2003, %v2001
        %2068 = vmatprep.subr.bf16.mxu0 %v2005
        %2069 = vmatpush1.bf16.msra.mxu0 %v2004
        %2070 = vmatprep.subr.bf16.mxu0 %v2007
        %2071 = vmatpush1.bf16.msra.mxu0 %v2006
        %2072 = vmatprep.subr.bf16.mxu0 %v2009
        %2073 = vmatpush1.bf16.msra.mxu0 %v2008
        %2074 = vmatprep.subr.bf16.mxu0 %v2011
        %2075 = vmatpush1.bf16.msra.mxu0 %v2010
        %2076 = vmatprep.subr.bf16.mxu0 %v2013
        %2077 = vmatpush1.bf16.msra.mxu0 %v2012
        %2078 = vmatprep.subr.bf16.mxu0 %v2015
        %2079 = vmatpush1.bf16.msra.mxu0 %v2014
        %2080 = vmatprep.subr.bf16.mxu0 %v2017
        %2081 = vmatpush1.bf16.msra.mxu0 %v2016
        %2082 = vmatprep.subr.bf16.mxu0 %v2019
        %2083 = vmatpush1.bf16.msra.mxu0 %v2018
        %2084 = vmatprep.subr.bf16.mxu0 %v2021
        %2085 = vmatpush1.bf16.msra.mxu0 %v2020
        %2086 = vmatprep.subr.bf16.mxu0 %v2023
        %2087 = vmatpush1.bf16.msra.mxu0 %v2022
        %2088 = vmatprep.subr.bf16.mxu0 %v2025
        %2089 = vmatpush1.bf16.msra.mxu0 %v2024
        %2090 = vmatprep.subr.bf16.mxu0 %v2027
        %2091 = vmatpush1.bf16.msra.mxu0 %v2026
        %2092 = vmatprep.subr.bf16.mxu0 %v2029
        %2093 = vmatpush1.bf16.msra.mxu0 %v2028
        %2094 = vmatprep.subr.bf16.mxu0 %v2031
        %2095 = vmatpush1.bf16.msra.mxu0 %v2030
        %2096 = vmatprep.subr.bf16.mxu0 %v2033
        %2097 = vmatpush1.bf16.msra.mxu0 %v2032
        %2098 = vmatprep.subr.bf16.mxu0 %v2035
        %2099 = vmatpush1.bf16.msra.mxu0 %v2034
        %2100 = vmatprep.mubr.bf16.mxu0 %v1861
        %2101 = vmatmul.mubr.bf16.gmra.mrb[0].mxu0 %v1860
        %v2102 = vpop.f32.mrb[0].mxu0
        %v2103 = vadd.f32 %v1901, %v2102
        %v2104 = vpop.f32.mrb[0].mxu0
        %v2105 = vadd.f32 %v1905, %v2104
        %v2106 = vpop.f32.mrb[0].mxu0
        %v2107 = vpop.f32.mrb[0].mxu0
        %2108 = vdwg.mxu0
        %s2109 = scalar_lea.vmem %s8, 21
        %v2110 = vld [vmem:[%s2109] ss:$8 sm:$0x3]
        %s2111 = scalar_lea.vmem %s8, 22
        %v2112 = vld [vmem:[%s2111] ss:$8 sm:$0x3]
        %v2113 = vsel %vm804, %v2103, 0.0
        %v2114 = vrot.slane %v2113, 4
        %v2115 = vadd.f32 %v2113, %v2114
        %v2116 = vrot.slane %v2115, 2
        %v2117 = vadd.f32 %v2115, %v2116
        %v2118 = vrot.slane %v2117, 1
        %v2119 = vadd.f32 %v2117, %v2118
        %v2120 = vsel %vm804, %v2105, 0.0
        %v2121 = vrot.slane %v2120, 4
        %v2122 = vadd.f32 %v2120, %v2121
        %v2123 = vrot.slane %v2122, 2
        %v2124 = vadd.f32 %v2122, %v2123
        %v2125 = vrot.slane %v2124, 1
        %v2126 = vadd.f32 %v2124, %v2125
        %v2127 = vmul.f32 %v2119, %v819
        %v2128 = vmul.f32 %v2126, %v819
        %v2129 = vsub.f32 %v2103, %v2127
        %v2130 = vsub.f32 %v2105, %v2128
        %v2131 = vmul.f32 %v2129, %v2129
        %v2132 = vmul.f32 %v2130, %v2130
        %v2133 = vsel %vm804, %v2131, 0.0
        %v2134 = vrot.slane %v2133, 4
        %v2135 = vadd.f32 %v2133, %v2134
        %v2136 = vrot.slane %v2135, 2
        %v2137 = vadd.f32 %v2135, %v2136
        %v2138 = vrot.slane %v2137, 1
        %v2139 = vadd.f32 %v2137, %v2138
        %v2140 = vsel %vm804, %v2132, 0.0
        %v2141 = vrot.slane %v2140, 4
        %v2142 = vadd.f32 %v2140, %v2141
        %v2143 = vrot.slane %v2142, 2
        %v2144 = vadd.f32 %v2142, %v2143
        %v2145 = vrot.slane %v2144, 1
        %v2146 = vadd.f32 %v2144, %v2145
        %v2147 = vmul.f32 %v2139, %v819
        %v2148 = vmul.f32 %v2146, %v819
        %v2149 = vadd.f32 %v2147, 1e-05
        %v2150 = vadd.f32 %v2148, 1e-05
        %v2151 = vrsqrt.pop %v2149
        %v2152 = vrsqrt.pop %v2150
        %v2153 = vmul.f32 %v2129, %v2151
        %v2154 = vmul.f32 %v2130, %v2152
        %v2156 = vlaneseq
        %v2157 = vshrl.u32 %v2156, 7
        %v2158 = vsub.s32 0, %v2157
        %v2159 = vrot.slane %v2110, %v2158
        %v2160 = vlaneseq
        %v2161 = vshrl.u32 %v2160, 7
        %v2162 = vsub.s32 1, %v2161
        %v2163 = vrot.slane %v2110, %v2162
        %v2166 = vmul.f32 %v2153, %v2159
        %v2167 = vmul.f32 %v2154, %v2163
        %v2169 = vlaneseq
        %v2170 = vshrl.u32 %v2169, 7
        %v2171 = vsub.s32 0, %v2170
        %v2172 = vrot.slane %v2112, %v2171
        %v2173 = vlaneseq
        %v2174 = vshrl.u32 %v2173, 7
        %v2175 = vsub.s32 1, %v2174
        %v2176 = vrot.slane %v2112, %v2175
        %v2179 = vadd.f32 %v2166, %v2172
        %v2180 = vadd.f32 %v2167, %v2176
        %vm2181 = vcmp.gt.f32.partialorder %v2179, 0.0
        %vm2182 = vcmp.gt.f32.partialorder %v2180, 0.0
        %v2183 = vmul.f32 %v2179, 0.01
        %v2184 = vmul.f32 %v2180, 0.01
        %v2185 = vsel %vm2181, %v2179, %v2183
        %v2186 = vsel %vm2182, %v2180, %v2184
        %v2187 = vpack.c.bf16 %v2185, %v2185
        %v2188 = vpack.c.bf16 %v2186, %v2186
        %v2189 = vld [vmem:[%s10] sm:$0xf]
        %v2190 = vld [vmem:[%s10 + $0x4] sm:$0xf]
        %v2191 = vld [vmem:[%s10 + $0x8] sm:$0xf]
        %v2192 = vld [vmem:[%s10 + $0xc] sm:$0xf]
        %v2193 = vld [vmem:[%s10 + $0x10] sm:$0xf]
        %v2194 = vld [vmem:[%s10 + $0x14] sm:$0xf]
        %v2195 = vld [vmem:[%s10 + $0x18] sm:$0xf]
        %v2196 = vld [vmem:[%s10 + $0x1c] sm:$0xf]
        %v2197 = vld [vmem:[%s10 + $0x20] sm:$0xf]
        %v2198 = vld [vmem:[%s10 + $0x24] sm:$0xf]
        %v2199 = vld [vmem:[%s10 + $0x28] sm:$0xf]
        %v2200 = vld [vmem:[%s10 + $0x2c] sm:$0xf]
        %v2201 = vld [vmem:[%s10 + $0x30] sm:$0xf]
        %v2202 = vld [vmem:[%s10 + $0x34] sm:$0xf]
        %v2203 = vld [vmem:[%s10 + $0x38] sm:$0xf]
        %v2204 = vld [vmem:[%s10 + $0x3c] sm:$0xf]
        %v2205 = vld [vmem:[%s10 + $0x40] sm:$0xf]
        %v2206 = vld [vmem:[%s10 + $0x44] sm:$0xf]
        %v2207 = vld [vmem:[%s10 + $0x48] sm:$0xf]
        %v2208 = vld [vmem:[%s10 + $0x4c] sm:$0xf]
        %v2209 = vld [vmem:[%s10 + $0x50] sm:$0xf]
        %v2210 = vld [vmem:[%s10 + $0x54] sm:$0xf]
        %v2211 = vld [vmem:[%s10 + $0x58] sm:$0xf]
        %v2212 = vld [vmem:[%s10 + $0x5c] sm:$0xf]
        %v2213 = vld [vmem:[%s10 + $0x60] sm:$0xf]
        %v2214 = vld [vmem:[%s10 + $0x64] sm:$0xf]
        %v2215 = vld [vmem:[%s10 + $0x68] sm:$0xf]
        %v2216 = vld [vmem:[%s10 + $0x6c] sm:$0xf]
        %v2217 = vld [vmem:[%s10 + $0x70] sm:$0xf]
        %v2218 = vld [vmem:[%s10 + $0x74] sm:$0xf]
        %v2219 = vld [vmem:[%s10 + $0x78] sm:$0xf]
        %v2220 = vld [vmem:[%s10 + $0x7c] sm:$0xf]
        %v2221 = vld [vmem:[%s11] sm:$0x1]
        %v2223 = vlaneseq
        %v2224 = vshrl.u32 %v2223, 7
        %v2225 = vsub.s32 0, %v2224
        %v2226 = vrot.slane %v2221, %v2225
        %v2260 = vunpack.c.l.b16 %v2189
        %v2261 = vunpack.c.l.b16 %v2190
        %v2262 = vunpack.c.l.b16 %v2191
        %v2263 = vunpack.c.l.b16 %v2192
        %v2264 = vunpack.c.l.b16 %v2193
        %v2265 = vunpack.c.l.b16 %v2194
        %v2266 = vunpack.c.l.b16 %v2195
        %v2267 = vunpack.c.l.b16 %v2196
        %v2268 = vunpack.c.l.b16 %v2197
        %v2269 = vunpack.c.l.b16 %v2198
        %v2270 = vunpack.c.l.b16 %v2199
        %v2271 = vunpack.c.l.b16 %v2200
        %v2272 = vunpack.c.l.b16 %v2201
        %v2273 = vunpack.c.l.b16 %v2202
        %v2274 = vunpack.c.l.b16 %v2203
        %v2275 = vunpack.c.l.b16 %v2204
        %v2276 = vunpack.c.l.b16 %v2205
        %v2277 = vunpack.c.l.b16 %v2206
        %v2278 = vunpack.c.l.b16 %v2207
        %v2279 = vunpack.c.l.b16 %v2208
        %v2280 = vunpack.c.l.b16 %v2209
        %v2281 = vunpack.c.l.b16 %v2210
        %v2282 = vunpack.c.l.b16 %v2211
        %v2283 = vunpack.c.l.b16 %v2212
        %v2284 = vunpack.c.l.b16 %v2213
        %v2285 = vunpack.c.l.b16 %v2214
        %v2286 = vunpack.c.l.b16 %v2215
        %v2287 = vunpack.c.l.b16 %v2216
        %v2288 = vunpack.c.l.b16 %v2217
        %v2289 = vunpack.c.l.b16 %v2218
        %v2290 = vunpack.c.l.b16 %v2219
        %v2291 = vunpack.c.l.b16 %v2220
        %v2292 = vpack.c.b16 %v2261, %v2260
        %v2293 = vpack.c.b16 %v2263, %v2262
        %v2294 = vpack.c.b16 %v2265, %v2264
        %v2295 = vpack.c.b16 %v2267, %v2266
        %v2296 = vpack.c.b16 %v2269, %v2268
        %v2297 = vpack.c.b16 %v2271, %v2270
        %v2298 = vpack.c.b16 %v2273, %v2272
        %v2299 = vpack.c.b16 %v2275, %v2274
        %v2300 = vpack.c.b16 %v2277, %v2276
        %v2301 = vpack.c.b16 %v2279, %v2278
        %v2302 = vpack.c.b16 %v2281, %v2280
        %v2303 = vpack.c.b16 %v2283, %v2282
        %v2304 = vpack.c.b16 %v2285, %v2284
        %v2305 = vpack.c.b16 %v2287, %v2286
        %v2306 = vpack.c.b16 %v2289, %v2288
        %v2307 = vpack.c.b16 %v2291, %v2290
        %2324 = vmatprep.subr.bf16.mxu0 0
        %2325 = vmatpush1.bf16.msra.mxu0 %v2292
        %2326 = vmatprep.subr.bf16.mxu0 0
        %2327 = vmatpush1.bf16.msra.mxu0 %v2293
        %2328 = vmatprep.subr.bf16.mxu0 0
        %2329 = vmatpush1.bf16.msra.mxu0 %v2294
        %2330 = vmatprep.subr.bf16.mxu0 0
        %2331 = vmatpush1.bf16.msra.mxu0 %v2295
        %2332 = vmatprep.subr.bf16.mxu0 0
        %2333 = vmatpush1.bf16.msra.mxu0 %v2296
        %2334 = vmatprep.subr.bf16.mxu0 0
        %2335 = vmatpush1.bf16.msra.mxu0 %v2297
        %2336 = vmatprep.subr.bf16.mxu0 0
        %2337 = vmatpush1.bf16.msra.mxu0 %v2298
        %2338 = vmatprep.subr.bf16.mxu0 0
        %2339 = vmatpush1.bf16.msra.mxu0 %v2299
        %2340 = vmatprep.subr.bf16.mxu0 0
        %2341 = vmatpush1.bf16.msra.mxu0 %v2300
        %2342 = vmatprep.subr.bf16.mxu0 0
        %2343 = vmatpush1.bf16.msra.mxu0 %v2301
        %2344 = vmatprep.subr.bf16.mxu0 0
        %2345 = vmatpush1.bf16.msra.mxu0 %v2302
        %2346 = vmatprep.subr.bf16.mxu0 0
        %2347 = vmatpush1.bf16.msra.mxu0 %v2303
        %2348 = vmatprep.subr.bf16.mxu0 0
        %2349 = vmatpush1.bf16.msra.mxu0 %v2304
        %2350 = vmatprep.subr.bf16.mxu0 0
        %2351 = vmatpush1.bf16.msra.mxu0 %v2305
        %2352 = vmatprep.subr.bf16.mxu0 0
        %2353 = vmatpush1.bf16.msra.mxu0 %v2306
        %2354 = vmatprep.subr.bf16.mxu0 0
        %2355 = vmatpush1.bf16.msra.mxu0 %v2307
        %2356 = vmatprep.mubr.bf16.mxu0 %v2188
        %2357 = vmatmul.mubr.bf16.gmra.mrb[0].mxu0 %v2187
        %v2358 = vpop.f32.mrb[0].mxu0
        %v2359 = vadd.f32 %v2226, %v2358
        %v2360 = vpop.f32.mrb[0].mxu0
        %v2361 = vpop.f32.mrb[0].mxu0
        %v2362 = vpop.f32.mrb[0].mxu0
        %2363 = vdwg.mxu0
        %v2364 = vtanh.pop %v2359
        %v2365 = vmul.f32 %v2364, 0.2
        %vm2366 = vcmask 68608
        %2367 = vst.msk [vmem:[%s13] sm:$0xf] %vm2366, %v2365
        %v2368 = vld [vmem:[%s4] sm:$0xff]
        %v2369 = vld [vmem:[%s4 + $0x8] sm:$0x1]
        %vm2370 = vcmask 72704
        %v2372 = vsel %vm2370, %v2365, 0
        %vm2374 = vcmask 1040384
        %v2376 = vsel %vm2374, %v2369, 0
        %2378 = vmatprep.subr.mxu0 0.0
        %2379 = vmatpush1.msra.mxu0 %v2368
        %2380 = vmatprep.subr.mxu0 0.0
        %2381 = vmatpush1.msra.mxu0 %v2376
        %2382 = vmatprep.subr.mxu0 0.0
        %2383 = vmatpush1.msra.mxu0 0.0
        %2384 = vmatprep.subr.mxu0 0.0
        %2385 = vmatpush1.msra.mxu0 0.0
        %2386 = vmatprep.subr.mxu0 0.0
        %2387 = vmatpush1.msra.mxu0 0.0
        %2388 = vmatprep.subr.mxu0 0.0
        %2389 = vmatpush1.msra.mxu0 0.0
        %2390 = vmatprep.subr.mxu0 0.0
        %2391 = vmatpush1.msra.mxu0 0.0
        %2392 = vmatprep.subr.mxu0 0.0
        %2393 = vmatpush1.msra.mxu0 0.0
        %2394 = vmatprep.subr.mxu0 0.0
        %2395 = vmatpush1.msra.mxu0 0.0
        %2396 = vmatprep.subr.mxu0 0.0
        %2397 = vmatpush1.msra.mxu0 0.0
        %2398 = vmatprep.subr.mxu0 0.0
        %2399 = vmatpush1.msra.mxu0 0.0
        %2400 = vmatprep.subr.mxu0 0.0
        %2401 = vmatpush1.msra.mxu0 0.0
        %2402 = vmatprep.subr.mxu0 0.0
        %2403 = vmatpush1.msra.mxu0 0.0
        %2404 = vmatprep.subr.mxu0 0.0
        %2405 = vmatpush1.msra.mxu0 0.0
        %2406 = vmatprep.subr.mxu0 0.0
        %2407 = vmatpush1.msra.mxu0 0.0
        %2408 = vmatprep.subr.mxu0 0.0
        %2409 = vmatpush1.msra.mxu0 0.0
        %2410 = vmatprep.subr.mxu0 0.0
        %2411 = vmatpush1.msra.mxu0 0.0
        %2412 = vmatprep.subr.mxu0 0.0
        %2413 = vmatpush1.msra.mxu0 0.0
        %2414 = vmatprep.subr.mxu0 0.0
        %2415 = vmatpush1.msra.mxu0 0.0
        %2416 = vmatprep.subr.mxu0 0.0
        %2417 = vmatpush1.msra.mxu0 0.0
        %2418 = vmatprep.subr.mxu0 0.0
        %2419 = vmatpush1.msra.mxu0 0.0
        %2420 = vmatprep.subr.mxu0 0.0
        %2421 = vmatpush1.msra.mxu0 0.0
        %2422 = vmatprep.subr.mxu0 0.0
        %2423 = vmatpush1.msra.mxu0 0.0
        %2424 = vmatprep.subr.mxu0 0.0
        %2425 = vmatpush1.msra.mxu0 0.0
        %2426 = vmatprep.subr.mxu0 0.0
        %2427 = vmatpush1.msra.mxu0 0.0
        %2428 = vmatprep.subr.mxu0 0.0
        %2429 = vmatpush1.msra.mxu0 0.0
        %2430 = vmatprep.subr.mxu0 0.0
        %2431 = vmatpush1.msra.mxu0 0.0
        %2432 = vmatprep.subr.mxu0 0.0
        %2433 = vmatpush1.msra.mxu0 0.0
        %2434 = vmatprep.subr.mxu0 0.0
        %2435 = vmatpush1.msra.mxu0 0.0
        %2436 = vmatprep.subr.mxu0 0.0
        %2437 = vmatpush1.msra.mxu0 0.0
        %2438 = vmatprep.subr.mxu0 0.0
        %2439 = vmatpush1.msra.mxu0 0.0
        %2440 = vmatprep.subr.mxu0 0.0
        %2441 = vmatpush1.msra.mxu0 0.0
        %2442 = vmatprep.mubr.f32.mxu0 0.0
        %2443 = vmatmul.mubr.f32.gmra.mrb[0].mxu0 %v2372
        %v2444 = vpop.f32.mrb[0].mxu0
        %v2445 = vadd.f32 0.0, %v2444
        %v2446 = vpop.f32.mrb[0].mxu0
        %2447 = vdwg.mxu0
        %vm2448 = vcmask 363520
        %2449 = vst.msk [vmem:[#allocation2] sm:$0xf] %vm2448, %v2445
      $region72: #{bl_generator_forward.1} parent=67 // pred_fallthru
        _
      %v2450 = vld [vmem:[%s423] sm:$0xff]
      %v2451 = vld [vmem:[%s423 + $0x8] sm:$0x1]
      %vm2452 = vcmask 392192
      %v2454 = vsel %vm2452, %v2450, 0
      %v2457 = vsel %vm2452, %v2451, 0
      %2459 = vmatprep.subr.mxu0 0.0
      %2460 = vmatpush1.msra.mxu0 %v425
      %2461 = vmatprep.subr.mxu0 0.0
      %2462 = vmatpush1.msra.mxu0 %v426
      %2463 = vmatprep.subr.mxu0 0.0
      %2464 = vmatpush1.msra.mxu0 %v427
      %2465 = vmatprep.subr.mxu0 0.0
      %2466 = vmatpush1.msra.mxu0 %v428
      %2467 = vmatprep.subr.mxu0 0.0
      %2468 = vmatpush1.msra.mxu0 %v429
      %2469 = vmatprep.subr.mxu0 0.0
      %2470 = vmatpush1.msra.mxu0 %v430
      %2471 = vmatprep.subr.mxu0 0.0
      %2472 = vmatpush1.msra.mxu0 0.0
      %2473 = vmatprep.subr.mxu0 0.0
      %2474 = vmatpush1.msra.mxu0 0.0
      %2475 = vmatprep.subr.mxu0 0.0
      %2476 = vmatpush1.msra.mxu0 0.0
      %2477 = vmatprep.subr.mxu0 0.0
      %2478 = vmatpush1.msra.mxu0 0.0
      %2479 = vmatprep.subr.mxu0 0.0
      %2480 = vmatpush1.msra.mxu0 0.0
      %2481 = vmatprep.subr.mxu0 0.0
      %2482 = vmatpush1.msra.mxu0 0.0
      %2483 = vmatprep.subr.mxu0 0.0
      %2484 = vmatpush1.msra.mxu0 0.0
      %2485 = vmatprep.subr.mxu0 0.0
      %2486 = vmatpush1.msra.mxu0 0.0
      %2487 = vmatprep.subr.mxu0 0.0
      %2488 = vmatpush1.msra.mxu0 0.0
      %2489 = vmatprep.subr.mxu0 0.0
      %2490 = vmatpush1.msra.mxu0 0.0
      %2491 = vmatprep.subr.mxu0 0.0
      %2492 = vmatpush1.msra.mxu0 0.0
      %2493 = vmatprep.subr.mxu0 0.0
      %2494 = vmatpush1.msra.mxu0 0.0
      %2495 = vmatprep.subr.mxu0 0.0
      %2496 = vmatpush1.msra.mxu0 0.0
      %2497 = vmatprep.subr.mxu0 0.0
      %2498 = vmatpush1.msra.mxu0 0.0
      %2499 = vmatprep.subr.mxu0 0.0
      %2500 = vmatpush1.msra.mxu0 0.0
      %2501 = vmatprep.subr.mxu0 0.0
      %2502 = vmatpush1.msra.mxu0 0.0
      %2503 = vmatprep.subr.mxu0 0.0
      %2504 = vmatpush1.msra.mxu0 0.0
      %2505 = vmatprep.subr.mxu0 0.0
      %2506 = vmatpush1.msra.mxu0 0.0
      %2507 = vmatprep.subr.mxu0 0.0
      %2508 = vmatpush1.msra.mxu0 0.0
      %2509 = vmatprep.subr.mxu0 0.0
      %2510 = vmatpush1.msra.mxu0 0.0
      %2511 = vmatprep.subr.mxu0 0.0
      %2512 = vmatpush1.msra.mxu0 0.0
      %2513 = vmatprep.subr.mxu0 0.0
      %2514 = vmatpush1.msra.mxu0 0.0
      %2515 = vmatprep.subr.mxu0 0.0
      %2516 = vmatpush1.msra.mxu0 0.0
      %2517 = vmatprep.subr.mxu0 0.0
      %2518 = vmatpush1.msra.mxu0 0.0
      %2519 = vmatprep.subr.mxu0 0.0
      %2520 = vmatpush1.msra.mxu0 0.0
      %2521 = vmatprep.subr.mxu0 0.0
      %2522 = vmatpush1.msra.mxu0 0.0
      %2523 = vmatprep.mubr.f32.mxu0 0.0
      %2524 = vmatmul.mubr.f32.gmra.mrb[0].mxu0 %v2454
      %v2525 = vpop.f32.mrb[0].mxu0
      %v2526 = vadd.f32 0.0, %v2525
      %v2527 = vpop.f32.mrb[0].mxu0
      %2528 = vmatprep.mubr.f32.mxu0 0.0
      %2529 = vmatmul.mubr.f32.gmra.mrb[0].mxu0 %v2457
      %v2530 = vpop.f32.mrb[0].mxu0
      %v2531 = vadd.f32 0.0, %v2530
      %v2532 = vpop.f32.mrb[0].mxu0
      %2533 = vdwg.mxu0
      %s2534 = scalar_lea.vmem [#allocation2], %s25
      %v2535 = vld [vmem:[%s2534] sm:$0x1]
      %v2536 = vadd.f32 %v2535, 1.0
      %v2537 = vlaneseq
      %v2538 = vshrl.u32 %v2537, 7
      %v2539 = vsub.s32 0, %v2538
      %v2540 = vrot.slane %v2536, %v2539
      %v2541 = vmul.f32 %v2526, %v2540
      %v2542 = vmul.f32 %v2531, %v2540
      %v2543 = vld [vmem:[%s5] sm:$0xff]
      %v2544 = vld [vmem:[%s5 + $0x8] sm:$0xff]
      %v2545 = vld [vmem:[%s5 + $0x10] sm:$0xff]
      %v2546 = vld [vmem:[%s5 + $0x18] sm:$0xff]
      %v2547 = vld [vmem:[%s5 + $0x20] sm:$0xff]
      %v2548 = vld [vmem:[%s5 + $0x28] sm:$0x1f]
      %vm2549 = vcmask 367616
      %v2551 = vsel %vm2549, %v2541, 0
      %v2554 = vsel %vm2549, %v2542, 0
      %vm2556 = vcmask 1044480
      %v2558 = vsel %vm2556, %v2548, 0
      %2560 = vmatprep.subr.mxu0 0.0
      %2561 = vmatpush1.msra.mxu0 %v2543
      %2562 = vmatprep.subr.mxu0 0.0
      %2563 = vmatpush1.msra.mxu0 %v2544
      %2564 = vmatprep.subr.mxu0 0.0
      %2565 = vmatpush1.msra.mxu0 %v2545
      %2566 = vmatprep.subr.mxu0 0.0
      %2567 = vmatpush1.msra.mxu0 %v2546
      %2568 = vmatprep.subr.mxu0 0.0
      %2569 = vmatpush1.msra.mxu0 %v2547
      %2570 = vmatprep.subr.mxu0 0.0
      %2571 = vmatpush1.msra.mxu0 %v2558
      %2572 = vmatprep.subr.mxu0 0.0
      %2573 = vmatpush1.msra.mxu0 0.0
      %2574 = vmatprep.subr.mxu0 0.0
      %2575 = vmatpush1.msra.mxu0 0.0
      %2576 = vmatprep.subr.mxu0 0.0
      %2577 = vmatpush1.msra.mxu0 0.0
      %2578 = vmatprep.subr.mxu0 0.0
      %2579 = vmatpush1.msra.mxu0 0.0
      %2580 = vmatprep.subr.mxu0 0.0
      %2581 = vmatpush1.msra.mxu0 0.0
      %2582 = vmatprep.subr.mxu0 0.0
      %2583 = vmatpush1.msra.mxu0 0.0
      %2584 = vmatprep.subr.mxu0 0.0
      %2585 = vmatpush1.msra.mxu0 0.0
      %2586 = vmatprep.subr.mxu0 0.0
      %2587 = vmatpush1.msra.mxu0 0.0
      %2588 = vmatprep.subr.mxu0 0.0
      %2589 = vmatpush1.msra.mxu0 0.0
      %2590 = vmatprep.subr.mxu0 0.0
      %2591 = vmatpush1.msra.mxu0 0.0
      %2592 = vmatprep.subr.mxu0 0.0
      %2593 = vmatpush1.msra.mxu0 0.0
      %2594 = vmatprep.subr.mxu0 0.0
      %2595 = vmatpush1.msra.mxu0 0.0
      %2596 = vmatprep.subr.mxu0 0.0
      %2597 = vmatpush1.msra.mxu0 0.0
      %2598 = vmatprep.subr.mxu0 0.0
      %2599 = vmatpush1.msra.mxu0 0.0
      %2600 = vmatprep.subr.mxu0 0.0
      %2601 = vmatpush1.msra.mxu0 0.0
      %2602 = vmatprep.subr.mxu0 0.0
      %2603 = vmatpush1.msra.mxu0 0.0
      %2604 = vmatprep.subr.mxu0 0.0
      %2605 = vmatpush1.msra.mxu0 0.0
      %2606 = vmatprep.subr.mxu0 0.0
      %2607 = vmatpush1.msra.mxu0 0.0
      %2608 = vmatprep.subr.mxu0 0.0
      %2609 = vmatpush1.msra.mxu0 0.0
      %2610 = vmatprep.subr.mxu0 0.0
      %2611 = vmatpush1.msra.mxu0 0.0
      %2612 = vmatprep.subr.mxu0 0.0
      %2613 = vmatpush1.msra.mxu0 0.0
      %2614 = vmatprep.subr.mxu0 0.0
      %2615 = vmatpush1.msra.mxu0 0.0
      %2616 = vmatprep.subr.mxu0 0.0
      %2617 = vmatpush1.msra.mxu0 0.0
      %2618 = vmatprep.subr.mxu0 0.0
      %2619 = vmatpush1.msra.mxu0 0.0
      %2620 = vmatprep.subr.mxu0 0.0
      %2621 = vmatpush1.msra.mxu0 0.0
      %2622 = vmatprep.subr.mxu0 0.0
      %2623 = vmatpush1.msra.mxu0 0.0
      %2624 = vmatprep.mubr.f32.mxu0 0.0
      %2625 = vmatmul.mubr.f32.gmra.mrb[0].mxu0 %v2551
      %v2626 = vpop.f32.mrb[0].mxu0
      %v2627 = vadd.f32 0.0, %v2626
      %v2628 = vpop.f32.mrb[0].mxu0
      %2629 = vmatprep.mubr.f32.mxu0 0.0
      %2630 = vmatmul.mubr.f32.gmra.mrb[0].mxu0 %v2554
      %v2631 = vpop.f32.mrb[0].mxu0
      %v2632 = vadd.f32 0.0, %v2631
      %v2633 = vpop.f32.mrb[0].mxu0
      %2634 = vdwg.mxu0
      %s2635 = smul.u32 %s25, 16
      %s2636 = scalar_lea.vmem %s12, %s2635
      %2637 = vst.msk [vmem:[%s2636] sm:$0xff] %vm2452, %v2627
      %vm2638 = vcmask 385024
      %2639 = vst.msk [vmem:[%s2636 + $0x8] sm:$0x1] %vm2638, %v2632
      // Predicated region
      $region73: #{bl_generator_forward.1} parent=67 // pred_check
        %p2640 = pneg %p295
      $region74: #{bl_generator_forward.1} parent=67 // pred_check_branch
        %2642 = sbr.rel (%p2640) target = $region76
      $region75: #{bl_generator_forward.1} parent=67 // pred_region
        _
      $region76: #{bl_generator_forward.1} parent=67 // pred_fallthru
        _
      // Predicated region
      $region77: #{bl_generator_forward.1} parent=67 // pred_check
        %p2643 = pneg %p316
      $region78: #{bl_generator_forward.1} parent=67 // pred_check_branch
        %2645 = sbr.rel (%p2643) target = $region80
      $region79: #{bl_generator_forward.1} parent=67 // pred_region
        _
      $region80: #{bl_generator_forward.1} parent=67 // pred_fallthru
        _
      // Predicated region
      $region81: #{bl_generator_forward.1} parent=67 // pred_check
        %p2646 = pneg %p295
      $region82: #{bl_generator_forward.1} parent=67 // pred_check_branch
        %2648 = sbr.rel (%p2646) target = $region84
      $region83: #{bl_generator_forward.1} parent=67 // pred_region
        _
      $region84: #{bl_generator_forward.1} parent=67 // pred_fallthru
        _
      // Predicated region
      $region85: #{bl_generator_forward.1} parent=67 // pred_check
        %p2649 = pneg %p316
      $region86: #{bl_generator_forward.1} parent=67 // pred_check_branch
        %2651 = sbr.rel (%p2649) target = $region88
      $region87: #{bl_generator_forward.1} parent=67 // pred_region
        _
      $region88: #{bl_generator_forward.1} parent=67 // pred_fallthru
        _
    $region68: #{bl_generator_forward.1} parent=5 // pred_fallthru
      _
    %p2652 = scmp.le.s32.totalorder 2, %s20
    // Predicated region
    $region89: #{bl_generator_forward.1} parent=5 // pred_check
      %p2653 = pneg %p2652
    $region90: #{bl_generator_forward.1} parent=5 // pred_check_branch
      %2655 = sbr.rel (%p2653) target = $region92
    $region91: #{bl_generator_forward.1} parent=5 // pred_region
      %s2656 = ssub.s32 %s20, 2
    $region92: #{bl_generator_forward.1} parent=5 // pred_fallthru
      _
  $region6: #{bl_generator_forward.1} parent=0 // loop_footer
    %s24 = sadd.s32 1, %s20
  $region7: #{bl_generator_forward.1} parent=0 // loop_footer_branch
    %19 = sbr.rel target = $region3
  $region8: #{bl_generator_forward.1} parent=0 // loop_exit
    _

</llo_original>
